<compile_context>
chip_gen: v5e
topology: v5e:2x2
jax: 0.10.0
libtpu: 0.0.40
codegen_flags: <defaults>
</compile_context>

<pallas_src>
import functools

import jax
import jax.numpy as jnp
import numpy as np
from jax.experimental import pallas as pl
from jax.experimental.pallas import tpu as pltpu


# ----------------------------- Pallas kernel -----------------------------
def _prefix_model_kernel(x_ref, wm_ref, bm_ref, a_ref, c_ref, wvo_ref,
                         w1_ref, b1_ref, w2_ref, b2_ref, out_ref, o_acc,
                         *, num_nets, num_heads, batch, seq, prefix_len, hidden):
    f32 = jnp.float32
    bf16 = jnp.bfloat16
    N, B, S, L, H = num_nets, batch, seq, prefix_len, hidden

    # Fused visual_mapping for all nets: (B*S, P) @ (P, N*H) -> (B*S, N*H) = (16, 128).
    mem = jnp.dot(x_ref[...].astype(bf16), wm_ref[...],
                  preferred_element_type=f32) + bm_ref[...]

    for n in range(N):                                    # static unroll over nets
        a_n = a_ref[n]                                    # (heads*L, H) bf16, leading-dim
        c_n = c_ref[n]                                    # (heads*L, 1) f32
        wvo_n = wvo_ref[n]                                # (H, heads*H) bf16
        for b in range(B):                                # static unroll over batch
            mem_nb = mem[b * S:(b + 1) * S, n * H:(n + 1) * H].astype(bf16)  # (S, H)

            # Attention logits for ALL heads at once (heads stacked along sublanes):
            # logits[h*L+l, s] = (q_h[l]*scale) . k_h[s]   via A_h = q_h*scale @ Wk_h^T.
            logits = jax.lax.dot_general(
                a_n, mem_nb, (((1,), (1,)), ((), ())),
                preferred_element_type=f32) + c_n                           # (heads*L, S)
            m = jnp.max(logits, axis=-1, keepdims=True)
            e = jnp.exp(logits - m)
            p = e * pl.reciprocal(jnp.sum(e, axis=-1, keepdims=True), approx=True)

            # Fused value + output projection: vo[:, h*H:(h+1)*H] = mem_nb @ (Wv_h @ Wo_h).
            vo = jnp.dot(mem_nb, wvo_n, preferred_element_type=f32)         # (S, heads*H)

            o_nb = jnp.zeros((L, H), f32)
            for h in range(num_heads):                    # static unroll over heads
                p_h = p[h * L:(h + 1) * L, :].astype(bf16)     # sublane slice (aligned)
                vo_h = vo[:, h * H:(h + 1) * H].astype(bf16)   # 32-lane slice
                o_nb = o_nb + jnp.dot(p_h, vo_h, preferred_element_type=f32)
            # (bv @ Wo + bo) is folded into b1 at pack time, so no bias add here.
            o_acc[b * L:(b + 1) * L, n * H:(n + 1) * H] = o_nb

    # Fused MLP over all nets via block-diagonal weights:
    # one (16,128)@(128,512) and one (16,512)@(512,128) matmul, then a single
    # lane-dense (16,128) store to HBM.
    attn = o_acc[...]
    h1 = jnp.tanh(jnp.dot(attn.astype(bf16), w1_ref[...],
                          preferred_element_type=f32) + b1_ref[...])
    out = jnp.dot(h1.astype(bf16), w2_ref[...],
                  preferred_element_type=f32) + b2_ref[...]
    out_ref[...] = out.astype(out_ref.dtype)


# ----------------------------- wrapper ------------------------------------
def _full_spec(shape):
    zeros = (0,) * len(shape)
    return pl.BlockSpec(shape, lambda i, _z=zeros: _z)


def _nbytes(a):
    return int(np.prod(a.shape)) * jnp.dtype(a.dtype).itemsize


def visual_prefix_nets_forward(x, packed, num_heads):
    """Run all N independent VisualPrefixNet forwards in a single pallas_call.

    x:       (B, S, P) float32
    packed:  dict of fused parameter slabs (see pack_params)
    returns: (N, B, L, H) float32
    """
    B, S, P = x.shape
    N = int(packed["num_nets"])
    L = int(packed["prefix_len"])
    H = int(packed["hidden"])
    heads = num_heads
    x2 = x.reshape(B * S, P)                              # layout plumbing in the wrapper

    kernel = functools.partial(_prefix_model_kernel, num_nets=N, num_heads=heads,
                               batch=B, seq=S, prefix_len=L, hidden=H)

    flops = (2 * B * S * P * N * H                        # fused visual_mapping
             + N * B * (2 * heads * L * H * S             # logits
                        + 2 * S * H * heads * H           # fused value/output proj
                        + heads * 2 * L * S * H)          # per-head prob @ vo
             + 2 * B * L * (N * H) * (N * 4 * H)          # mlp1 (block-diag)
             + 2 * B * L * (N * 4 * H) * (N * H))         # mlp2 (block-diag)
    transcendentals = N * B * heads * L * S + B * L * N * 4 * H
    tensors = [x2] + [packed[k] for k in
                      ("wm", "bm", "A", "c", "wvo", "w1", "b1", "w2", "b2")]
    cost = pl.CostEstimate(flops=int(flops),
                           transcendentals=int(transcendentals),
                           bytes_accessed=int(sum(_nbytes(t) for t in tensors)
                                              + B * L * N * H * 4))

    out2d = pl.pallas_call(
        kernel,
        out_shape=jax.ShapeDtypeStruct((B * L, N * H), jnp.float32),
        grid=(1,),
        in_specs=[
            _full_spec((B * S, P)),              # x                        f32
            _full_spec((P, N * H)),              # visual_mapping weights   bf16
            _full_spec((1, N * H)),              # visual_mapping biases    f32
            _full_spec((N, heads * L, H)),       # A   (folded q/Wk)        bf16
            _full_spec((N, heads * L, 1)),       # c   (folded q.bk)        f32
            _full_spec((N, H, heads * H)),       # Wvo (folded Wv@Wo)       bf16
            _full_spec((N * H, N * 4 * H)),      # mlp1 block-diag          bf16
            _full_spec((1, N * 4 * H)),          # mlp1 bias (folded)       f32
            _full_spec((N * 4 * H, N * H)),      # mlp2 block-diag          bf16
            _full_spec((1, N * H)),              # mlp2 bias                f32
        ],
        out_specs=_full_spec((B * L, N * H)),
        scratch_shapes=[pltpu.VMEM((B * L, N * H), jnp.float32)],
        compiler_params=pltpu.CompilerParams(dimension_semantics=("arbitrary",)),
        cost_estimate=cost,
    )(x2, packed["wm"], packed["bm"], packed["A"], packed["c"], packed["wvo"],
      packed["w1"], packed["b1"], packed["w2"], packed["b2"])

    return out2d.reshape(B, L, N, H).transpose(2, 0, 1, 3)


def visual_prefix_model_forward(x, packed, num_layers, num_heads):
    """VisualPrefixModel.forward: tuple of (key, value) per encoder layer."""
    out = visual_prefix_nets_forward(x, packed, num_heads)   # (2*num_layers, B, L, H)
    return tuple((out[2 * i], out[2 * i + 1]) for i in range(num_layers))


# ----------------------------- param init ---------------------------------
def _xavier(key, shape):
    fan_in, fan_out = shape[-2], shape[-1]
    bound = float(np.sqrt(6.0 / (fan_in + fan_out)))
    return jax.random.uniform(key, shape, jnp.float32, -bound, bound)


def _linear(key, fan_in, fan_out):
    kw, kb = jax.random.split(key)
    w = _xavier(kw, (fan_in, fan_out))
    bb = 1.0 / float(np.sqrt(fan_in))
    b = jax.random.uniform(kb, (1, fan_out), jnp.float32, -bb, bb)
    return w, b


def make_net_params(key, prefix_len, prefix_size, hidden):
    ks = jax.random.split(key, 8)
    p = {}
    p["emb"] = _xavier(ks[0], (prefix_len, hidden))
    p["wm"], p["bm"] = _linear(ks[1], prefix_size, hidden)
    p["wq"], p["bq"] = _linear(ks[2], hidden, hidden)
    p["wk"], p["bk"] = _linear(ks[3], hidden, hidden)
    p["wv"], p["bv"] = _linear(ks[4], hidden, hidden)
    p["wo"], p["bo"] = _linear(ks[5], hidden, hidden)
    p["w1"], p["b1"] = _linear(ks[6], hidden, 4 * hidden)
    p["w2"], p["b2"] = _linear(ks[7], 4 * hidden, hidden)
    return p


def pack_params(param_list, num_heads):
    """One-time parameter folding into the fused slabs the kernel expects.

    All folds are exact algebra on parameters only (outputs identical to the module):
      A_h   = (q_h * head_dim**-0.5) @ Wk_h^T     with q = emb @ Wq + bq
      c_h   = (q_h * scale) @ bk_h^T              (per-row additive logit term)
      Wvo_h = Wv_h @ Wo_h
      b1'   = b1 + (bv @ Wo + bo) @ W1            (so no bias add on the attn output)
    """
    N = len(param_list)
    L, H = param_list[0]["emb"].shape
    hd = H // num_heads
    scale = float(hd) ** -0.5
    bf16 = jnp.bfloat16
    f32 = jnp.float32

    wm_cols, bm_cols, a_list, c_list, wvo_list = [], [], [], [], []
    w1_list, b1_cols, w2_list, b2_cols = [], [], [], []
    for p in param_list:
        q = (p["emb"] @ p["wq"] + p["bq"]) * scale                  # (L, H)
        a_rows, c_rows, wvo_cols = [], [], []
        for h in range(num_heads):
            sl = slice(h * hd, (h + 1) * hd)
            a_rows.append(q[:, sl] @ p["wk"][:, sl].T)              # (L, H)
            c_rows.append(q[:, sl] @ p["bk"][0, sl][:, None])       # (L, 1)
            wvo_cols.append(p["wv"][:, sl] @ p["wo"][sl, :])        # (H, H)
        a_list.append(jnp.concatenate(a_rows, axis=0))              # (heads*L, H)
        c_list.append(jnp.concatenate(c_rows, axis=0))              # (heads*L, 1)
        wvo_list.append(jnp.concatenate(wvo_cols, axis=1))          # (H, heads*H)
        bvb = p["bv"] @ p["wo"] + p["bo"]                           # (1, H)
        b1_cols.append(p["b1"] + bvb @ p["w1"])                     # (1, 4H)
        wm_cols.append(p["wm"])
        bm_cols.append(p["bm"])
        w1_list.append(p["w1"])
        w2_list.append(p["w2"])
        b2_cols.append(p["b2"])

    def blkdiag(mats):
        a, b = mats[0].shape
        out = jnp.zeros((N * a, N * b), f32)
        for i, m in enumerate(mats):
            out = out.at[i * a:(i + 1) * a, i * b:(i + 1) * b].set(m)
        return out

    packed = {
        "wm": jnp.concatenate(wm_cols, axis=1).astype(bf16),        # (P, N*H)
        "bm": jnp.concatenate(bm_cols, axis=1).astype(f32),         # (1, N*H)
        "A": jnp.stack(a_list).astype(bf16),                        # (N, heads*L, H)
        "c": jnp.stack(c_list).astype(f32),                         # (N, heads*L, 1)
        "wvo": jnp.stack(wvo_list).astype(bf16),                    # (N, H, heads*H)
        "w1": blkdiag(w1_list).astype(bf16),                        # (N*H, N*4H)
        "b1": jnp.concatenate(b1_cols, axis=1).astype(f32),         # (1, N*4H)
        "w2": blkdiag(w2_list).astype(bf16),                        # (N*4H, N*H)
        "b2": jnp.concatenate(b2_cols, axis=1).astype(f32),         # (1, N*H)
        "num_nets": N, "prefix_len": L, "hidden": H,
    }
    return packed


# -------------------- pure-JAX reference (module semantics, f32) ----------
def ref_net(x, p, num_heads):
    mem = jnp.einsum("bsp,ph->bsh", x, p["wm"]) + p["bm"]
    q = p["emb"] @ p["wq"] + p["bq"]                       # (L, H)
    k = jnp.einsum("bsh,hd->bsd", mem, p["wk"]) + p["bk"]
    v = jnp.einsum("bsh,hd->bsd", mem, p["wv"]) + p["bv"]
    B, S, H = mem.shape
    L = q.shape[0]
    hd = H // num_heads
    qh = q.reshape(L, num_heads, hd).transpose(1, 0, 2) * (hd ** -0.5)
    kh = k.reshape(B, S, num_heads, hd).transpose(0, 2, 1, 3)
    vh = v.reshape(B, S, num_heads, hd).transpose(0, 2, 1, 3)
    logits = jnp.einsum("nld,bnsd->bnls", qh, kh)
    w = jax.nn.softmax(logits, axis=-1)
    ctx = jnp.einsum("bnls,bnsd->bnld", w, vh).transpose(0, 2, 1, 3).reshape(B, L, H)
    o = ctx @ p["wo"] + p["bo"]
    h1 = jnp.tanh(o @ p["w1"] + p["b1"])
    return h1 @ p["w2"] + p["b2"]


# ----------------------------- main ---------------------------------------
if __name__ == "__main__":
    num_encoder_layers = 2
    visual_prefix_length = 8     # L
    visual_prefix_size = 16      # P
    hidden_size = 32             # H
    num_heads = 4
    batch = 2                    # B
    num_visual_tokens = 8        # S

    key = jax.random.PRNGKey(0)
    kx, kparams = jax.random.split(key)
    x = jax.random.normal(kx, (batch, num_visual_tokens, visual_prefix_size), jnp.float32)

    # 2 * num_layers nets: [key_0, value_0, key_1, value_1, ...]
    net_keys = jax.random.split(kparams, 2 * num_encoder_layers)
    nets = [make_net_params(k, visual_prefix_length, visual_prefix_size, hidden_size)
            for k in net_keys]
    packed = pack_params(nets, num_heads)

    past = visual_prefix_model_forward(x, packed, num_encoder_layers, num_heads)
    past = jax.block_until_ready(past)

    # Verify against the pure-JAX f32 reference (kernel uses bf16 weights/activations
    # on the MXU -> 5e-2 tolerance).
    max_err = 0.0
    ok = True
    for i in range(num_encoder_layers):
        for j, net_idx in enumerate((2 * i, 2 * i + 1)):
            ref = np.asarray(ref_net(x, nets[net_idx], num_heads))
            got = np.asarray(past[i][j])
            max_err = max(max_err, float(np.max(np.abs(got - ref))))
            ok = ok and np.allclose(got, ref, rtol=5e-2, atol=5e-2)
    if not ok:
        raise SystemExit(f"mismatch vs reference (max abs err {max_err:.3e})")

    print("KERNEL_OK")
</pallas_src>

<mosaic_0001>
module attributes {stable_mosaic.version = 11 : i64} {
  func.func @_prefix_model_kernel(%arg0: i32, %arg1: memref<16x16xf32, #tpu.memory_space<vmem>>, %arg2: memref<16x128xbf16, #tpu.memory_space<vmem>>, %arg3: memref<1x128xf32, #tpu.memory_space<vmem>>, %arg4: memref<4x32x32xbf16, #tpu.memory_space<vmem>>, %arg5: memref<4x32x1xf32, #tpu.memory_space<vmem>>, %arg6: memref<4x32x128xbf16, #tpu.memory_space<vmem>>, %arg7: memref<128x512xbf16, #tpu.memory_space<vmem>>, %arg8: memref<1x512xf32, #tpu.memory_space<vmem>>, %arg9: memref<512x128xbf16, #tpu.memory_space<vmem>>, %arg10: memref<1x128xf32, #tpu.memory_space<vmem>>, %arg11: memref<16x128xf32, #tpu.memory_space<vmem>>, %arg12: memref<16x128xf32, #tpu.memory_space<vmem>>) attributes {dimension_semantics = [#tpu.dimension_semantics<arbitrary>], iteration_bounds = array<i64: 1>, scalar_prefetch = 0 : i64, scratch_operands = 1 : i64, tpu.core_type = #tpu.core_type<tc>, window_params = [{pipeline_mode = #tpu.pipeline_mode<synchronous>, transform_indices = @transform_0, window_bounds = array<i64: 16, 16>}, {pipeline_mode = #tpu.pipeline_mode<synchronous>, transform_indices = @transform_1, window_bounds = array<i64: 16, 128>}, {pipeline_mode = #tpu.pipeline_mode<synchronous>, transform_indices = @transform_2, window_bounds = array<i64: 1, 128>}, {pipeline_mode = #tpu.pipeline_mode<synchronous>, transform_indices = @transform_3, window_bounds = array<i64: 4, 32, 32>}, {pipeline_mode = #tpu.pipeline_mode<synchronous>, transform_indices = @transform_4, window_bounds = array<i64: 4, 32, 1>}, {pipeline_mode = #tpu.pipeline_mode<synchronous>, transform_indices = @transform_5, window_bounds = array<i64: 4, 32, 128>}, {pipeline_mode = #tpu.pipeline_mode<synchronous>, transform_indices = @transform_6, window_bounds = array<i64: 128, 512>}, {pipeline_mode = #tpu.pipeline_mode<synchronous>, transform_indices = @transform_7, window_bounds = array<i64: 1, 512>}, {pipeline_mode = #tpu.pipeline_mode<synchronous>, transform_indices = @transform_8, window_bounds = array<i64: 512, 128>}, {pipeline_mode = #tpu.pipeline_mode<synchronous>, transform_indices = @transform_9, window_bounds = array<i64: 1, 128>}, {pipeline_mode = #tpu.pipeline_mode<synchronous>, transform_indices = @transform_10, window_bounds = array<i64: 16, 128>}]} {
    %c0 = arith.constant 0 : index
    %c0_0 = arith.constant 0 : index
    %0 = vector.load %arg1[%c0, %c0_0] : memref<16x16xf32, #tpu.memory_space<vmem>>, vector<16x16xf32>
    %1 = arith.truncf %0 : vector<16x16xf32> to vector<16x16xbf16>
    %c0_1 = arith.constant 0 : index
    %c0_2 = arith.constant 0 : index
    %2 = vector.load %arg2[%c0_1, %c0_2] : memref<16x128xbf16, #tpu.memory_space<vmem>>, vector<16x128xbf16>
    %cst = arith.constant dense<0.000000e+00> : vector<16x128xf32>
    %3 = tpu.matmul %1, %2, %cst {dimension_numbers = #tpu.dot_dimension_numbers<[1], [0], [0], [1], [0, 0, 1, 1], [], []>} : vector<16x16xbf16>, vector<16x128xbf16>, vector<16x128xf32> -> vector<16x128xf32>
    %c0_3 = arith.constant 0 : index
    %c0_4 = arith.constant 0 : index
    %4 = vector.load %arg3[%c0_3, %c0_4] : memref<1x128xf32, #tpu.memory_space<vmem>>, vector<1x128xf32>
    %5 = vector.broadcast %4 : vector<1x128xf32> to vector<16x128xf32>
    %6 = arith.addf %3, %5 : vector<16x128xf32>
    %c0_5 = arith.constant 0 : index
    %c0_6 = arith.constant 0 : index
    %c0_7 = arith.constant 0 : index
    %7 = vector.load %arg4[%c0_5, %c0_6, %c0_7] : memref<4x32x32xbf16, #tpu.memory_space<vmem>>, vector<1x32x32xbf16>
    %8 = vector.shape_cast %7 : vector<1x32x32xbf16> to vector<32x32xbf16>
    %c0_8 = arith.constant 0 : index
    %c0_9 = arith.constant 0 : index
    %c0_10 = arith.constant 0 : index
    %9 = vector.load %arg5[%c0_8, %c0_9, %c0_10] : memref<4x32x1xf32, #tpu.memory_space<vmem>>, vector<1x32x1xf32>
    %10 = vector.shape_cast %9 : vector<1x32x1xf32> to vector<32x1xf32>
    %c0_11 = arith.constant 0 : index
    %c0_12 = arith.constant 0 : index
    %c0_13 = arith.constant 0 : index
    %11 = vector.load %arg6[%c0_11, %c0_12, %c0_13] : memref<4x32x128xbf16, #tpu.memory_space<vmem>>, vector<1x32x128xbf16>
    %12 = vector.shape_cast %11 : vector<1x32x128xbf16> to vector<32x128xbf16>
    %13 = vector.extract_strided_slice %6 {offsets = [0, 0], sizes = [8, 32], strides = [1, 1]} : vector<16x128xf32> to vector<8x32xf32>
    %14 = arith.truncf %13 : vector<8x32xf32> to vector<8x32xbf16>
    %cst_14 = arith.constant dense<0.000000e+00> : vector<32x8xf32>
    %15 = tpu.matmul %8, %14, %cst_14 {dimension_numbers = #tpu.dot_dimension_numbers<[1], [1], [0], [0], [0, 0, 1, 0], [], []>} : vector<32x32xbf16>, vector<8x32xbf16>, vector<32x8xf32> -> vector<32x8xf32>
    %16 = vector.broadcast %10 : vector<32x1xf32> to vector<32x8xf32>
    %17 = arith.addf %15, %16 : vector<32x8xf32>
    %cst_15 = arith.constant dense<0xFF800000> : vector<32xf32>
    %18 = vector.multi_reduction <maximumf>, %17, %cst_15 [1] : vector<32x8xf32> to vector<32xf32>
    %19 = vector.shape_cast %18 : vector<32xf32> to vector<32x1xf32>
    %20 = vector.broadcast %19 : vector<32x1xf32> to vector<32x8xf32>
    %21 = arith.subf %17, %20 : vector<32x8xf32>
    %22 = math.exp %21 : vector<32x8xf32>
    %cst_16 = arith.constant dense<0.000000e+00> : vector<32xf32>
    %23 = vector.multi_reduction <add>, %22, %cst_16 [1] : vector<32x8xf32> to vector<32xf32>
    %24 = vector.shape_cast %23 : vector<32xf32> to vector<32x1xf32>
    %25 = tpu.reciprocal %24 {approx = true} : vector<32x1xf32> -> vector<32x1xf32>
    %26 = vector.broadcast %25 : vector<32x1xf32> to vector<32x8xf32>
    %27 = arith.mulf %22, %26 : vector<32x8xf32>
    %cst_17 = arith.constant dense<0.000000e+00> : vector<8x128xf32>
    %28 = tpu.matmul %14, %12, %cst_17 {dimension_numbers = #tpu.dot_dimension_numbers<[1], [0], [0], [1], [0, 0, 1, 1], [], []>} : vector<8x32xbf16>, vector<32x128xbf16>, vector<8x128xf32> -> vector<8x128xf32>
    %cst_18 = arith.constant 0.000000e+00 : f32
    %29 = vector.broadcast %cst_18 : f32 to vector<8x32xf32>
    %30 = vector.extract_strided_slice %27 {offsets = [0, 0], sizes = [8, 8], strides = [1, 1]} : vector<32x8xf32> to vector<8x8xf32>
    %31 = arith.truncf %30 : vector<8x8xf32> to vector<8x8xbf16>
    %32 = vector.extract_strided_slice %28 {offsets = [0, 0], sizes = [8, 32], strides = [1, 1]} : vector<8x128xf32> to vector<8x32xf32>
    %33 = arith.truncf %32 : vector<8x32xf32> to vector<8x32xbf16>
    %cst_19 = arith.constant dense<0.000000e+00> : vector<8x32xf32>
    %34 = tpu.matmul %31, %33, %cst_19 {dimension_numbers = #tpu.dot_dimension_numbers<[1], [0], [0], [1], [0, 0, 1, 1], [], []>} : vector<8x8xbf16>, vector<8x32xbf16>, vector<8x32xf32> -> vector<8x32xf32>
    %35 = arith.addf %29, %34 : vector<8x32xf32>
    %36 = vector.extract_strided_slice %27 {offsets = [8, 0], sizes = [8, 8], strides = [1, 1]} : vector<32x8xf32> to vector<8x8xf32>
    %37 = arith.truncf %36 : vector<8x8xf32> to vector<8x8xbf16>
    %38 = vector.extract_strided_slice %28 {offsets = [0, 32], sizes = [8, 32], strides = [1, 1]} : vector<8x128xf32> to vector<8x32xf32>
    %39 = arith.truncf %38 : vector<8x32xf32> to vector<8x32xbf16>
    %cst_20 = arith.constant dense<0.000000e+00> : vector<8x32xf32>
    %40 = tpu.matmul %37, %39, %cst_20 {dimension_numbers = #tpu.dot_dimension_numbers<[1], [0], [0], [1], [0, 0, 1, 1], [], []>} : vector<8x8xbf16>, vector<8x32xbf16>, vector<8x32xf32> -> vector<8x32xf32>
    %41 = arith.addf %35, %40 : vector<8x32xf32>
    %42 = vector.extract_strided_slice %27 {offsets = [16, 0], sizes = [8, 8], strides = [1, 1]} : vector<32x8xf32> to vector<8x8xf32>
    %43 = arith.truncf %42 : vector<8x8xf32> to vector<8x8xbf16>
    %44 = vector.extract_strided_slice %28 {offsets = [0, 64], sizes = [8, 32], strides = [1, 1]} : vector<8x128xf32> to vector<8x32xf32>
    %45 = arith.truncf %44 : vector<8x32xf32> to vector<8x32xbf16>
    %cst_21 = arith.constant dense<0.000000e+00> : vector<8x32xf32>
    %46 = tpu.matmul %43, %45, %cst_21 {dimension_numbers = #tpu.dot_dimension_numbers<[1], [0], [0], [1], [0, 0, 1, 1], [], []>} : vector<8x8xbf16>, vector<8x32xbf16>, vector<8x32xf32> -> vector<8x32xf32>
    %47 = arith.addf %41, %46 : vector<8x32xf32>
    %48 = vector.extract_strided_slice %27 {offsets = [24, 0], sizes = [8, 8], strides = [1, 1]} : vector<32x8xf32> to vector<8x8xf32>
    %49 = arith.truncf %48 : vector<8x8xf32> to vector<8x8xbf16>
    %50 = vector.extract_strided_slice %28 {offsets = [0, 96], sizes = [8, 32], strides = [1, 1]} : vector<8x128xf32> to vector<8x32xf32>
    %51 = arith.truncf %50 : vector<8x32xf32> to vector<8x32xbf16>
    %cst_22 = arith.constant dense<0.000000e+00> : vector<8x32xf32>
    %52 = tpu.matmul %49, %51, %cst_22 {dimension_numbers = #tpu.dot_dimension_numbers<[1], [0], [0], [1], [0, 0, 1, 1], [], []>} : vector<8x8xbf16>, vector<8x32xbf16>, vector<8x32xf32> -> vector<8x32xf32>
    %53 = arith.addf %47, %52 : vector<8x32xf32>
    %c0_23 = arith.constant 0 : index
    %c0_24 = arith.constant 0 : index
    %54 = vector.load %arg12[%c0_23, %c0_24] : memref<16x128xf32, #tpu.memory_space<vmem>>, vector<8x32xf32>
    tpu.vector_store %arg12[%c0_23, %c0_24], %53 {strides = array<i32>} : memref<16x128xf32, #tpu.memory_space<vmem>>, vector<8x32xf32>,
    %55 = vector.extract_strided_slice %6 {offsets = [8, 0], sizes = [8, 32], strides = [1, 1]} : vector<16x128xf32> to vector<8x32xf32>
    %56 = arith.truncf %55 : vector<8x32xf32> to vector<8x32xbf16>
    %cst_25 = arith.constant dense<0.000000e+00> : vector<32x8xf32>
    %57 = tpu.matmul %8, %56, %cst_25 {dimension_numbers = #tpu.dot_dimension_numbers<[1], [1], [0], [0], [0, 0, 1, 0], [], []>} : vector<32x32xbf16>, vector<8x32xbf16>, vector<32x8xf32> -> vector<32x8xf32>
    %58 = vector.broadcast %10 : vector<32x1xf32> to vector<32x8xf32>
    %59 = arith.addf %57, %58 : vector<32x8xf32>
    %cst_26 = arith.constant dense<0xFF800000> : vector<32xf32>
    %60 = vector.multi_reduction <maximumf>, %59, %cst_26 [1] : vector<32x8xf32> to vector<32xf32>
    %61 = vector.shape_cast %60 : vector<32xf32> to vector<32x1xf32>
    %62 = vector.broadcast %61 : vector<32x1xf32> to vector<32x8xf32>
    %63 = arith.subf %59, %62 : vector<32x8xf32>
    %64 = math.exp %63 : vector<32x8xf32>
    %cst_27 = arith.constant dense<0.000000e+00> : vector<32xf32>
    %65 = vector.multi_reduction <add>, %64, %cst_27 [1] : vector<32x8xf32> to vector<32xf32>
    %66 = vector.shape_cast %65 : vector<32xf32> to vector<32x1xf32>
    %67 = tpu.reciprocal %66 {approx = true} : vector<32x1xf32> -> vector<32x1xf32>
    %68 = vector.broadcast %67 : vector<32x1xf32> to vector<32x8xf32>
    %69 = arith.mulf %64, %68 : vector<32x8xf32>
    %cst_28 = arith.constant dense<0.000000e+00> : vector<8x128xf32>
    %70 = tpu.matmul %56, %12, %cst_28 {dimension_numbers = #tpu.dot_dimension_numbers<[1], [0], [0], [1], [0, 0, 1, 1], [], []>} : vector<8x32xbf16>, vector<32x128xbf16>, vector<8x128xf32> -> vector<8x128xf32>
    %cst_29 = arith.constant 0.000000e+00 : f32
    %71 = vector.broadcast %cst_29 : f32 to vector<8x32xf32>
    %72 = vector.extract_strided_slice %69 {offsets = [0, 0], sizes = [8, 8], strides = [1, 1]} : vector<32x8xf32> to vector<8x8xf32>
    %73 = arith.truncf %72 : vector<8x8xf32> to vector<8x8xbf16>
    %74 = vector.extract_strided_slice %70 {offsets = [0, 0], sizes = [8, 32], strides = [1, 1]} : vector<8x128xf32> to vector<8x32xf32>
    %75 = arith.truncf %74 : vector<8x32xf32> to vector<8x32xbf16>
    %cst_30 = arith.constant dense<0.000000e+00> : vector<8x32xf32>
    %76 = tpu.matmul %73, %75, %cst_30 {dimension_numbers = #tpu.dot_dimension_numbers<[1], [0], [0], [1], [0, 0, 1, 1], [], []>} : vector<8x8xbf16>, vector<8x32xbf16>, vector<8x32xf32> -> vector<8x32xf32>
    %77 = arith.addf %71, %76 : vector<8x32xf32>
    %78 = vector.extract_strided_slice %69 {offsets = [8, 0], sizes = [8, 8], strides = [1, 1]} : vector<32x8xf32> to vector<8x8xf32>
    %79 = arith.truncf %78 : vector<8x8xf32> to vector<8x8xbf16>
    %80 = vector.extract_strided_slice %70 {offsets = [0, 32], sizes = [8, 32], strides = [1, 1]} : vector<8x128xf32> to vector<8x32xf32>
    %81 = arith.truncf %80 : vector<8x32xf32> to vector<8x32xbf16>
    %cst_31 = arith.constant dense<0.000000e+00> : vector<8x32xf32>
    %82 = tpu.matmul %79, %81, %cst_31 {dimension_numbers = #tpu.dot_dimension_numbers<[1], [0], [0], [1], [0, 0, 1, 1], [], []>} : vector<8x8xbf16>, vector<8x32xbf16>, vector<8x32xf32> -> vector<8x32xf32>
    %83 = arith.addf %77, %82 : vector<8x32xf32>
    %84 = vector.extract_strided_slice %69 {offsets = [16, 0], sizes = [8, 8], strides = [1, 1]} : vector<32x8xf32> to vector<8x8xf32>
    %85 = arith.truncf %84 : vector<8x8xf32> to vector<8x8xbf16>
    %86 = vector.extract_strided_slice %70 {offsets = [0, 64], sizes = [8, 32], strides = [1, 1]} : vector<8x128xf32> to vector<8x32xf32>
    %87 = arith.truncf %86 : vector<8x32xf32> to vector<8x32xbf16>
    %cst_32 = arith.constant dense<0.000000e+00> : vector<8x32xf32>
    %88 = tpu.matmul %85, %87, %cst_32 {dimension_numbers = #tpu.dot_dimension_numbers<[1], [0], [0], [1], [0, 0, 1, 1], [], []>} : vector<8x8xbf16>, vector<8x32xbf16>, vector<8x32xf32> -> vector<8x32xf32>
    %89 = arith.addf %83, %88 : vector<8x32xf32>
    %90 = vector.extract_strided_slice %69 {offsets = [24, 0], sizes = [8, 8], strides = [1, 1]} : vector<32x8xf32> to vector<8x8xf32>
    %91 = arith.truncf %90 : vector<8x8xf32> to vector<8x8xbf16>
    %92 = vector.extract_strided_slice %70 {offsets = [0, 96], sizes = [8, 32], strides = [1, 1]} : vector<8x128xf32> to vector<8x32xf32>
    %93 = arith.truncf %92 : vector<8x32xf32> to vector<8x32xbf16>
    %cst_33 = arith.constant dense<0.000000e+00> : vector<8x32xf32>
    %94 = tpu.matmul %91, %93, %cst_33 {dimension_numbers = #tpu.dot_dimension_numbers<[1], [0], [0], [1], [0, 0, 1, 1], [], []>} : vector<8x8xbf16>, vector<8x32xbf16>, vector<8x32xf32> -> vector<8x32xf32>
    %95 = arith.addf %89, %94 : vector<8x32xf32>
    %c8 = arith.constant 8 : index
    %c0_34 = arith.constant 0 : index
    %96 = vector.load %arg12[%c8, %c0_34] : memref<16x128xf32, #tpu.memory_space<vmem>>, vector<8x32xf32>
    tpu.vector_store %arg12[%c8, %c0_34], %95 {strides = array<i32>} : memref<16x128xf32, #tpu.memory_space<vmem>>, vector<8x32xf32>,
    %c1 = arith.constant 1 : index
    %c0_35 = arith.constant 0 : index
    %c0_36 = arith.constant 0 : index
    %97 = vector.load %arg4[%c1, %c0_35, %c0_36] : memref<4x32x32xbf16, #tpu.memory_space<vmem>>, vector<1x32x32xbf16>
    %98 = vector.shape_cast %97 : vector<1x32x32xbf16> to vector<32x32xbf16>
    %c1_37 = arith.constant 1 : index
    %c0_38 = arith.constant 0 : index
    %c0_39 = arith.constant 0 : index
    %99 = vector.load %arg5[%c1_37, %c0_38, %c0_39] : memref<4x32x1xf32, #tpu.memory_space<vmem>>, vector<1x32x1xf32>
    %100 = vector.shape_cast %99 : vector<1x32x1xf32> to vector<32x1xf32>
    %c1_40 = arith.constant 1 : index
    %c0_41 = arith.constant 0 : index
    %c0_42 = arith.constant 0 : index
    %101 = vector.load %arg6[%c1_40, %c0_41, %c0_42] : memref<4x32x128xbf16, #tpu.memory_space<vmem>>, vector<1x32x128xbf16>
    %102 = vector.shape_cast %101 : vector<1x32x128xbf16> to vector<32x128xbf16>
    %103 = vector.extract_strided_slice %6 {offsets = [0, 32], sizes = [8, 32], strides = [1, 1]} : vector<16x128xf32> to vector<8x32xf32>
    %104 = arith.truncf %103 : vector<8x32xf32> to vector<8x32xbf16>
    %cst_43 = arith.constant dense<0.000000e+00> : vector<32x8xf32>
    %105 = tpu.matmul %98, %104, %cst_43 {dimension_numbers = #tpu.dot_dimension_numbers<[1], [1], [0], [0], [0, 0, 1, 0], [], []>} : vector<32x32xbf16>, vector<8x32xbf16>, vector<32x8xf32> -> vector<32x8xf32>
    %106 = vector.broadcast %100 : vector<32x1xf32> to vector<32x8xf32>
    %107 = arith.addf %105, %106 : vector<32x8xf32>
    %cst_44 = arith.constant dense<0xFF800000> : vector<32xf32>
    %108 = vector.multi_reduction <maximumf>, %107, %cst_44 [1] : vector<32x8xf32> to vector<32xf32>
    %109 = vector.shape_cast %108 : vector<32xf32> to vector<32x1xf32>
    %110 = vector.broadcast %109 : vector<32x1xf32> to vector<32x8xf32>
    %111 = arith.subf %107, %110 : vector<32x8xf32>
    %112 = math.exp %111 : vector<32x8xf32>
    %cst_45 = arith.constant dense<0.000000e+00> : vector<32xf32>
    %113 = vector.multi_reduction <add>, %112, %cst_45 [1] : vector<32x8xf32> to vector<32xf32>
    %114 = vector.shape_cast %113 : vector<32xf32> to vector<32x1xf32>
    %115 = tpu.reciprocal %114 {approx = true} : vector<32x1xf32> -> vector<32x1xf32>
    %116 = vector.broadcast %115 : vector<32x1xf32> to vector<32x8xf32>
    %117 = arith.mulf %112, %116 : vector<32x8xf32>
    %cst_46 = arith.constant dense<0.000000e+00> : vector<8x128xf32>
    %118 = tpu.matmul %104, %102, %cst_46 {dimension_numbers = #tpu.dot_dimension_numbers<[1], [0], [0], [1], [0, 0, 1, 1], [], []>} : vector<8x32xbf16>, vector<32x128xbf16>, vector<8x128xf32> -> vector<8x128xf32>
    %cst_47 = arith.constant 0.000000e+00 : f32
    %119 = vector.broadcast %cst_47 : f32 to vector<8x32xf32>
    %120 = vector.extract_strided_slice %117 {offsets = [0, 0], sizes = [8, 8], strides = [1, 1]} : vector<32x8xf32> to vector<8x8xf32>
    %121 = arith.truncf %120 : vector<8x8xf32> to vector<8x8xbf16>
    %122 = vector.extract_strided_slice %118 {offsets = [0, 0], sizes = [8, 32], strides = [1, 1]} : vector<8x128xf32> to vector<8x32xf32>
    %123 = arith.truncf %122 : vector<8x32xf32> to vector<8x32xbf16>
    %cst_48 = arith.constant dense<0.000000e+00> : vector<8x32xf32>
    %124 = tpu.matmul %121, %123, %cst_48 {dimension_numbers = #tpu.dot_dimension_numbers<[1], [0], [0], [1], [0, 0, 1, 1], [], []>} : vector<8x8xbf16>, vector<8x32xbf16>, vector<8x32xf32> -> vector<8x32xf32>
    %125 = arith.addf %119, %124 : vector<8x32xf32>
    %126 = vector.extract_strided_slice %117 {offsets = [8, 0], sizes = [8, 8], strides = [1, 1]} : vector<32x8xf32> to vector<8x8xf32>
    %127 = arith.truncf %126 : vector<8x8xf32> to vector<8x8xbf16>
    %128 = vector.extract_strided_slice %118 {offsets = [0, 32], sizes = [8, 32], strides = [1, 1]} : vector<8x128xf32> to vector<8x32xf32>
    %129 = arith.truncf %128 : vector<8x32xf32> to vector<8x32xbf16>
    %cst_49 = arith.constant dense<0.000000e+00> : vector<8x32xf32>
    %130 = tpu.matmul %127, %129, %cst_49 {dimension_numbers = #tpu.dot_dimension_numbers<[1], [0], [0], [1], [0, 0, 1, 1], [], []>} : vector<8x8xbf16>, vector<8x32xbf16>, vector<8x32xf32> -> vector<8x32xf32>
    %131 = arith.addf %125, %130 : vector<8x32xf32>
    %132 = vector.extract_strided_slice %117 {offsets = [16, 0], sizes = [8, 8], strides = [1, 1]} : vector<32x8xf32> to vector<8x8xf32>
    %133 = arith.truncf %132 : vector<8x8xf32> to vector<8x8xbf16>
    %134 = vector.extract_strided_slice %118 {offsets = [0, 64], sizes = [8, 32], strides = [1, 1]} : vector<8x128xf32> to vector<8x32xf32>
    %135 = arith.truncf %134 : vector<8x32xf32> to vector<8x32xbf16>
    %cst_50 = arith.constant dense<0.000000e+00> : vector<8x32xf32>
    %136 = tpu.matmul %133, %135, %cst_50 {dimension_numbers = #tpu.dot_dimension_numbers<[1], [0], [0], [1], [0, 0, 1, 1], [], []>} : vector<8x8xbf16>, vector<8x32xbf16>, vector<8x32xf32> -> vector<8x32xf32>
    %137 = arith.addf %131, %136 : vector<8x32xf32>
    %138 = vector.extract_strided_slice %117 {offsets = [24, 0], sizes = [8, 8], strides = [1, 1]} : vector<32x8xf32> to vector<8x8xf32>
    %139 = arith.truncf %138 : vector<8x8xf32> to vector<8x8xbf16>
    %140 = vector.extract_strided_slice %118 {offsets = [0, 96], sizes = [8, 32], strides = [1, 1]} : vector<8x128xf32> to vector<8x32xf32>
    %141 = arith.truncf %140 : vector<8x32xf32> to vector<8x32xbf16>
    %cst_51 = arith.constant dense<0.000000e+00> : vector<8x32xf32>
    %142 = tpu.matmul %139, %141, %cst_51 {dimension_numbers = #tpu.dot_dimension_numbers<[1], [0], [0], [1], [0, 0, 1, 1], [], []>} : vector<8x8xbf16>, vector<8x32xbf16>, vector<8x32xf32> -> vector<8x32xf32>
    %143 = arith.addf %137, %142 : vector<8x32xf32>
    %c0_52 = arith.constant 0 : index
    %c32 = arith.constant 32 : index
    %144 = vector.load %arg12[%c0_52, %c32] : memref<16x128xf32, #tpu.memory_space<vmem>>, vector<8x32xf32>
    tpu.vector_store %arg12[%c0_52, %c32], %143 {strides = array<i32>} : memref<16x128xf32, #tpu.memory_space<vmem>>, vector<8x32xf32>,
    %145 = vector.extract_strided_slice %6 {offsets = [8, 32], sizes = [8, 32], strides = [1, 1]} : vector<16x128xf32> to vector<8x32xf32>
    %146 = arith.truncf %145 : vector<8x32xf32> to vector<8x32xbf16>
    %cst_53 = arith.constant dense<0.000000e+00> : vector<32x8xf32>
    %147 = tpu.matmul %98, %146, %cst_53 {dimension_numbers = #tpu.dot_dimension_numbers<[1], [1], [0], [0], [0, 0, 1, 0], [], []>} : vector<32x32xbf16>, vector<8x32xbf16>, vector<32x8xf32> -> vector<32x8xf32>
    %148 = vector.broadcast %100 : vector<32x1xf32> to vector<32x8xf32>
    %149 = arith.addf %147, %148 : vector<32x8xf32>
    %cst_54 = arith.constant dense<0xFF800000> : vector<32xf32>
    %150 = vector.multi_reduction <maximumf>, %149, %cst_54 [1] : vector<32x8xf32> to vector<32xf32>
    %151 = vector.shape_cast %150 : vector<32xf32> to vector<32x1xf32>
    %152 = vector.broadcast %151 : vector<32x1xf32> to vector<32x8xf32>
    %153 = arith.subf %149, %152 : vector<32x8xf32>
    %154 = math.exp %153 : vector<32x8xf32>
    %cst_55 = arith.constant dense<0.000000e+00> : vector<32xf32>
    %155 = vector.multi_reduction <add>, %154, %cst_55 [1] : vector<32x8xf32> to vector<32xf32>
    %156 = vector.shape_cast %155 : vector<32xf32> to vector<32x1xf32>
    %157 = tpu.reciprocal %156 {approx = true} : vector<32x1xf32> -> vector<32x1xf32>
    %158 = vector.broadcast %157 : vector<32x1xf32> to vector<32x8xf32>
    %159 = arith.mulf %154, %158 : vector<32x8xf32>
    %cst_56 = arith.constant dense<0.000000e+00> : vector<8x128xf32>
    %160 = tpu.matmul %146, %102, %cst_56 {dimension_numbers = #tpu.dot_dimension_numbers<[1], [0], [0], [1], [0, 0, 1, 1], [], []>} : vector<8x32xbf16>, vector<32x128xbf16>, vector<8x128xf32> -> vector<8x128xf32>
    %cst_57 = arith.constant 0.000000e+00 : f32
    %161 = vector.broadcast %cst_57 : f32 to vector<8x32xf32>
    %162 = vector.extract_strided_slice %159 {offsets = [0, 0], sizes = [8, 8], strides = [1, 1]} : vector<32x8xf32> to vector<8x8xf32>
    %163 = arith.truncf %162 : vector<8x8xf32> to vector<8x8xbf16>
    %164 = vector.extract_strided_slice %160 {offsets = [0, 0], sizes = [8, 32], strides = [1, 1]} : vector<8x128xf32> to vector<8x32xf32>
    %165 = arith.truncf %164 : vector<8x32xf32> to vector<8x32xbf16>
    %cst_58 = arith.constant dense<0.000000e+00> : vector<8x32xf32>
    %166 = tpu.matmul %163, %165, %cst_58 {dimension_numbers = #tpu.dot_dimension_numbers<[1], [0], [0], [1], [0, 0, 1, 1], [], []>} : vector<8x8xbf16>, vector<8x32xbf16>, vector<8x32xf32> -> vector<8x32xf32>
    %167 = arith.addf %161, %166 : vector<8x32xf32>
    %168 = vector.extract_strided_slice %159 {offsets = [8, 0], sizes = [8, 8], strides = [1, 1]} : vector<32x8xf32> to vector<8x8xf32>
    %169 = arith.truncf %168 : vector<8x8xf32> to vector<8x8xbf16>
    %170 = vector.extract_strided_slice %160 {offsets = [0, 32], sizes = [8, 32], strides = [1, 1]} : vector<8x128xf32> to vector<8x32xf32>
    %171 = arith.truncf %170 : vector<8x32xf32> to vector<8x32xbf16>
    %cst_59 = arith.constant dense<0.000000e+00> : vector<8x32xf32>
    %172 = tpu.matmul %169, %171, %cst_59 {dimension_numbers = #tpu.dot_dimension_numbers<[1], [0], [0], [1], [0, 0, 1, 1], [], []>} : vector<8x8xbf16>, vector<8x32xbf16>, vector<8x32xf32> -> vector<8x32xf32>
    %173 = arith.addf %167, %172 : vector<8x32xf32>
    %174 = vector.extract_strided_slice %159 {offsets = [16, 0], sizes = [8, 8], strides = [1, 1]} : vector<32x8xf32> to vector<8x8xf32>
    %175 = arith.truncf %174 : vector<8x8xf32> to vector<8x8xbf16>
    %176 = vector.extract_strided_slice %160 {offsets = [0, 64], sizes = [8, 32], strides = [1, 1]} : vector<8x128xf32> to vector<8x32xf32>
    %177 = arith.truncf %176 : vector<8x32xf32> to vector<8x32xbf16>
    %cst_60 = arith.constant dense<0.000000e+00> : vector<8x32xf32>
    %178 = tpu.matmul %175, %177, %cst_60 {dimension_numbers = #tpu.dot_dimension_numbers<[1], [0], [0], [1], [0, 0, 1, 1], [], []>} : vector<8x8xbf16>, vector<8x32xbf16>, vector<8x32xf32> -> vector<8x32xf32>
    %179 = arith.addf %173, %178 : vector<8x32xf32>
    %180 = vector.extract_strided_slice %159 {offsets = [24, 0], sizes = [8, 8], strides = [1, 1]} : vector<32x8xf32> to vector<8x8xf32>
    %181 = arith.truncf %180 : vector<8x8xf32> to vector<8x8xbf16>
    %182 = vector.extract_strided_slice %160 {offsets = [0, 96], sizes = [8, 32], strides = [1, 1]} : vector<8x128xf32> to vector<8x32xf32>
    %183 = arith.truncf %182 : vector<8x32xf32> to vector<8x32xbf16>
    %cst_61 = arith.constant dense<0.000000e+00> : vector<8x32xf32>
    %184 = tpu.matmul %181, %183, %cst_61 {dimension_numbers = #tpu.dot_dimension_numbers<[1], [0], [0], [1], [0, 0, 1, 1], [], []>} : vector<8x8xbf16>, vector<8x32xbf16>, vector<8x32xf32> -> vector<8x32xf32>
    %185 = arith.addf %179, %184 : vector<8x32xf32>
    %c8_62 = arith.constant 8 : index
    %c32_63 = arith.constant 32 : index
    %186 = vector.load %arg12[%c8_62, %c32_63] : memref<16x128xf32, #tpu.memory_space<vmem>>, vector<8x32xf32>
    tpu.vector_store %arg12[%c8_62, %c32_63], %185 {strides = array<i32>} : memref<16x128xf32, #tpu.memory_space<vmem>>, vector<8x32xf32>,
    %c2 = arith.constant 2 : index
    %c0_64 = arith.constant 0 : index
    %c0_65 = arith.constant 0 : index
    %187 = vector.load %arg4[%c2, %c0_64, %c0_65] : memref<4x32x32xbf16, #tpu.memory_space<vmem>>, vector<1x32x32xbf16>
    %188 = vector.shape_cast %187 : vector<1x32x32xbf16> to vector<32x32xbf16>
    %c2_66 = arith.constant 2 : index
    %c0_67 = arith.constant 0 : index
    %c0_68 = arith.constant 0 : index
    %189 = vector.load %arg5[%c2_66, %c0_67, %c0_68] : memref<4x32x1xf32, #tpu.memory_space<vmem>>, vector<1x32x1xf32>
    %190 = vector.shape_cast %189 : vector<1x32x1xf32> to vector<32x1xf32>
    %c2_69 = arith.constant 2 : index
    %c0_70 = arith.constant 0 : index
    %c0_71 = arith.constant 0 : index
    %191 = vector.load %arg6[%c2_69, %c0_70, %c0_71] : memref<4x32x128xbf16, #tpu.memory_space<vmem>>, vector<1x32x128xbf16>
    %192 = vector.shape_cast %191 : vector<1x32x128xbf16> to vector<32x128xbf16>
    %193 = vector.extract_strided_slice %6 {offsets = [0, 64], sizes = [8, 32], strides = [1, 1]} : vector<16x128xf32> to vector<8x32xf32>
    %194 = arith.truncf %193 : vector<8x32xf32> to vector<8x32xbf16>
    %cst_72 = arith.constant dense<0.000000e+00> : vector<32x8xf32>
    %195 = tpu.matmul %188, %194, %cst_72 {dimension_numbers = #tpu.dot_dimension_numbers<[1], [1], [0], [0], [0, 0, 1, 0], [], []>} : vector<32x32xbf16>, vector<8x32xbf16>, vector<32x8xf32> -> vector<32x8xf32>
    %196 = vector.broadcast %190 : vector<32x1xf32> to vector<32x8xf32>
    %197 = arith.addf %195, %196 : vector<32x8xf32>
    %cst_73 = arith.constant dense<0xFF800000> : vector<32xf32>
    %198 = vector.multi_reduction <maximumf>, %197, %cst_73 [1] : vector<32x8xf32> to vector<32xf32>
    %199 = vector.shape_cast %198 : vector<32xf32> to vector<32x1xf32>
    %200 = vector.broadcast %199 : vector<32x1xf32> to vector<32x8xf32>
    %201 = arith.subf %197, %200 : vector<32x8xf32>
    %202 = math.exp %201 : vector<32x8xf32>
    %cst_74 = arith.constant dense<0.000000e+00> : vector<32xf32>
    %203 = vector.multi_reduction <add>, %202, %cst_74 [1] : vector<32x8xf32> to vector<32xf32>
    %204 = vector.shape_cast %203 : vector<32xf32> to vector<32x1xf32>
    %205 = tpu.reciprocal %204 {approx = true} : vector<32x1xf32> -> vector<32x1xf32>
    %206 = vector.broadcast %205 : vector<32x1xf32> to vector<32x8xf32>
    %207 = arith.mulf %202, %206 : vector<32x8xf32>
    %cst_75 = arith.constant dense<0.000000e+00> : vector<8x128xf32>
    %208 = tpu.matmul %194, %192, %cst_75 {dimension_numbers = #tpu.dot_dimension_numbers<[1], [0], [0], [1], [0, 0, 1, 1], [], []>} : vector<8x32xbf16>, vector<32x128xbf16>, vector<8x128xf32> -> vector<8x128xf32>
    %cst_76 = arith.constant 0.000000e+00 : f32
    %209 = vector.broadcast %cst_76 : f32 to vector<8x32xf32>
    %210 = vector.extract_strided_slice %207 {offsets = [0, 0], sizes = [8, 8], strides = [1, 1]} : vector<32x8xf32> to vector<8x8xf32>
    %211 = arith.truncf %210 : vector<8x8xf32> to vector<8x8xbf16>
    %212 = vector.extract_strided_slice %208 {offsets = [0, 0], sizes = [8, 32], strides = [1, 1]} : vector<8x128xf32> to vector<8x32xf32>
    %213 = arith.truncf %212 : vector<8x32xf32> to vector<8x32xbf16>
    %cst_77 = arith.constant dense<0.000000e+00> : vector<8x32xf32>
    %214 = tpu.matmul %211, %213, %cst_77 {dimension_numbers = #tpu.dot_dimension_numbers<[1], [0], [0], [1], [0, 0, 1, 1], [], []>} : vector<8x8xbf16>, vector<8x32xbf16>, vector<8x32xf32> -> vector<8x32xf32>
    %215 = arith.addf %209, %214 : vector<8x32xf32>
    %216 = vector.extract_strided_slice %207 {offsets = [8, 0], sizes = [8, 8], strides = [1, 1]} : vector<32x8xf32> to vector<8x8xf32>
    %217 = arith.truncf %216 : vector<8x8xf32> to vector<8x8xbf16>
    %218 = vector.extract_strided_slice %208 {offsets = [0, 32], sizes = [8, 32], strides = [1, 1]} : vector<8x128xf32> to vector<8x32xf32>
    %219 = arith.truncf %218 : vector<8x32xf32> to vector<8x32xbf16>
    %cst_78 = arith.constant dense<0.000000e+00> : vector<8x32xf32>
    %220 = tpu.matmul %217, %219, %cst_78 {dimension_numbers = #tpu.dot_dimension_numbers<[1], [0], [0], [1], [0, 0, 1, 1], [], []>} : vector<8x8xbf16>, vector<8x32xbf16>, vector<8x32xf32> -> vector<8x32xf32>
    %221 = arith.addf %215, %220 : vector<8x32xf32>
    %222 = vector.extract_strided_slice %207 {offsets = [16, 0], sizes = [8, 8], strides = [1, 1]} : vector<32x8xf32> to vector<8x8xf32>
    %223 = arith.truncf %222 : vector<8x8xf32> to vector<8x8xbf16>
    %224 = vector.extract_strided_slice %208 {offsets = [0, 64], sizes = [8, 32], strides = [1, 1]} : vector<8x128xf32> to vector<8x32xf32>
    %225 = arith.truncf %224 : vector<8x32xf32> to vector<8x32xbf16>
    %cst_79 = arith.constant dense<0.000000e+00> : vector<8x32xf32>
    %226 = tpu.matmul %223, %225, %cst_79 {dimension_numbers = #tpu.dot_dimension_numbers<[1], [0], [0], [1], [0, 0, 1, 1], [], []>} : vector<8x8xbf16>, vector<8x32xbf16>, vector<8x32xf32> -> vector<8x32xf32>
    %227 = arith.addf %221, %226 : vector<8x32xf32>
    %228 = vector.extract_strided_slice %207 {offsets = [24, 0], sizes = [8, 8], strides = [1, 1]} : vector<32x8xf32> to vector<8x8xf32>
    %229 = arith.truncf %228 : vector<8x8xf32> to vector<8x8xbf16>
    %230 = vector.extract_strided_slice %208 {offsets = [0, 96], sizes = [8, 32], strides = [1, 1]} : vector<8x128xf32> to vector<8x32xf32>
    %231 = arith.truncf %230 : vector<8x32xf32> to vector<8x32xbf16>
    %cst_80 = arith.constant dense<0.000000e+00> : vector<8x32xf32>
    %232 = tpu.matmul %229, %231, %cst_80 {dimension_numbers = #tpu.dot_dimension_numbers<[1], [0], [0], [1], [0, 0, 1, 1], [], []>} : vector<8x8xbf16>, vector<8x32xbf16>, vector<8x32xf32> -> vector<8x32xf32>
    %233 = arith.addf %227, %232 : vector<8x32xf32>
    %c0_81 = arith.constant 0 : index
    %c64 = arith.constant 64 : index
    %234 = vector.load %arg12[%c0_81, %c64] : memref<16x128xf32, #tpu.memory_space<vmem>>, vector<8x32xf32>
    tpu.vector_store %arg12[%c0_81, %c64], %233 {strides = array<i32>} : memref<16x128xf32, #tpu.memory_space<vmem>>, vector<8x32xf32>,
    %235 = vector.extract_strided_slice %6 {offsets = [8, 64], sizes = [8, 32], strides = [1, 1]} : vector<16x128xf32> to vector<8x32xf32>
    %236 = arith.truncf %235 : vector<8x32xf32> to vector<8x32xbf16>
    %cst_82 = arith.constant dense<0.000000e+00> : vector<32x8xf32>
    %237 = tpu.matmul %188, %236, %cst_82 {dimension_numbers = #tpu.dot_dimension_numbers<[1], [1], [0], [0], [0, 0, 1, 0], [], []>} : vector<32x32xbf16>, vector<8x32xbf16>, vector<32x8xf32> -> vector<32x8xf32>
    %238 = vector.broadcast %190 : vector<32x1xf32> to vector<32x8xf32>
    %239 = arith.addf %237, %238 : vector<32x8xf32>
    %cst_83 = arith.constant dense<0xFF800000> : vector<32xf32>
    %240 = vector.multi_reduction <maximumf>, %239, %cst_83 [1] : vector<32x8xf32> to vector<32xf32>
    %241 = vector.shape_cast %240 : vector<32xf32> to vector<32x1xf32>
    %242 = vector.broadcast %241 : vector<32x1xf32> to vector<32x8xf32>
    %243 = arith.subf %239, %242 : vector<32x8xf32>
    %244 = math.exp %243 : vector<32x8xf32>
    %cst_84 = arith.constant dense<0.000000e+00> : vector<32xf32>
    %245 = vector.multi_reduction <add>, %244, %cst_84 [1] : vector<32x8xf32> to vector<32xf32>
    %246 = vector.shape_cast %245 : vector<32xf32> to vector<32x1xf32>
    %247 = tpu.reciprocal %246 {approx = true} : vector<32x1xf32> -> vector<32x1xf32>
    %248 = vector.broadcast %247 : vector<32x1xf32> to vector<32x8xf32>
    %249 = arith.mulf %244, %248 : vector<32x8xf32>
    %cst_85 = arith.constant dense<0.000000e+00> : vector<8x128xf32>
    %250 = tpu.matmul %236, %192, %cst_85 {dimension_numbers = #tpu.dot_dimension_numbers<[1], [0], [0], [1], [0, 0, 1, 1], [], []>} : vector<8x32xbf16>, vector<32x128xbf16>, vector<8x128xf32> -> vector<8x128xf32>
    %cst_86 = arith.constant 0.000000e+00 : f32
    %251 = vector.broadcast %cst_86 : f32 to vector<8x32xf32>
    %252 = vector.extract_strided_slice %249 {offsets = [0, 0], sizes = [8, 8], strides = [1, 1]} : vector<32x8xf32> to vector<8x8xf32>
    %253 = arith.truncf %252 : vector<8x8xf32> to vector<8x8xbf16>
    %254 = vector.extract_strided_slice %250 {offsets = [0, 0], sizes = [8, 32], strides = [1, 1]} : vector<8x128xf32> to vector<8x32xf32>
    %255 = arith.truncf %254 : vector<8x32xf32> to vector<8x32xbf16>
    %cst_87 = arith.constant dense<0.000000e+00> : vector<8x32xf32>
    %256 = tpu.matmul %253, %255, %cst_87 {dimension_numbers = #tpu.dot_dimension_numbers<[1], [0], [0], [1], [0, 0, 1, 1], [], []>} : vector<8x8xbf16>, vector<8x32xbf16>, vector<8x32xf32> -> vector<8x32xf32>
    %257 = arith.addf %251, %256 : vector<8x32xf32>
    %258 = vector.extract_strided_slice %249 {offsets = [8, 0], sizes = [8, 8], strides = [1, 1]} : vector<32x8xf32> to vector<8x8xf32>
    %259 = arith.truncf %258 : vector<8x8xf32> to vector<8x8xbf16>
    %260 = vector.extract_strided_slice %250 {offsets = [0, 32], sizes = [8, 32], strides = [1, 1]} : vector<8x128xf32> to vector<8x32xf32>
    %261 = arith.truncf %260 : vector<8x32xf32> to vector<8x32xbf16>
    %cst_88 = arith.constant dense<0.000000e+00> : vector<8x32xf32>
    %262 = tpu.matmul %259, %261, %cst_88 {dimension_numbers = #tpu.dot_dimension_numbers<[1], [0], [0], [1], [0, 0, 1, 1], [], []>} : vector<8x8xbf16>, vector<8x32xbf16>, vector<8x32xf32> -> vector<8x32xf32>
    %263 = arith.addf %257, %262 : vector<8x32xf32>
    %264 = vector.extract_strided_slice %249 {offsets = [16, 0], sizes = [8, 8], strides = [1, 1]} : vector<32x8xf32> to vector<8x8xf32>
    %265 = arith.truncf %264 : vector<8x8xf32> to vector<8x8xbf16>
    %266 = vector.extract_strided_slice %250 {offsets = [0, 64], sizes = [8, 32], strides = [1, 1]} : vector<8x128xf32> to vector<8x32xf32>
    %267 = arith.truncf %266 : vector<8x32xf32> to vector<8x32xbf16>
    %cst_89 = arith.constant dense<0.000000e+00> : vector<8x32xf32>
    %268 = tpu.matmul %265, %267, %cst_89 {dimension_numbers = #tpu.dot_dimension_numbers<[1], [0], [0], [1], [0, 0, 1, 1], [], []>} : vector<8x8xbf16>, vector<8x32xbf16>, vector<8x32xf32> -> vector<8x32xf32>
    %269 = arith.addf %263, %268 : vector<8x32xf32>
    %270 = vector.extract_strided_slice %249 {offsets = [24, 0], sizes = [8, 8], strides = [1, 1]} : vector<32x8xf32> to vector<8x8xf32>
    %271 = arith.truncf %270 : vector<8x8xf32> to vector<8x8xbf16>
    %272 = vector.extract_strided_slice %250 {offsets = [0, 96], sizes = [8, 32], strides = [1, 1]} : vector<8x128xf32> to vector<8x32xf32>
    %273 = arith.truncf %272 : vector<8x32xf32> to vector<8x32xbf16>
    %cst_90 = arith.constant dense<0.000000e+00> : vector<8x32xf32>
    %274 = tpu.matmul %271, %273, %cst_90 {dimension_numbers = #tpu.dot_dimension_numbers<[1], [0], [0], [1], [0, 0, 1, 1], [], []>} : vector<8x8xbf16>, vector<8x32xbf16>, vector<8x32xf32> -> vector<8x32xf32>
    %275 = arith.addf %269, %274 : vector<8x32xf32>
    %c8_91 = arith.constant 8 : index
    %c64_92 = arith.constant 64 : index
    %276 = vector.load %arg12[%c8_91, %c64_92] : memref<16x128xf32, #tpu.memory_space<vmem>>, vector<8x32xf32>
    tpu.vector_store %arg12[%c8_91, %c64_92], %275 {strides = array<i32>} : memref<16x128xf32, #tpu.memory_space<vmem>>, vector<8x32xf32>,
    %c3 = arith.constant 3 : index
    %c0_93 = arith.constant 0 : index
    %c0_94 = arith.constant 0 : index
    %277 = vector.load %arg4[%c3, %c0_93, %c0_94] : memref<4x32x32xbf16, #tpu.memory_space<vmem>>, vector<1x32x32xbf16>
    %278 = vector.shape_cast %277 : vector<1x32x32xbf16> to vector<32x32xbf16>
    %c3_95 = arith.constant 3 : index
    %c0_96 = arith.constant 0 : index
    %c0_97 = arith.constant 0 : index
    %279 = vector.load %arg5[%c3_95, %c0_96, %c0_97] : memref<4x32x1xf32, #tpu.memory_space<vmem>>, vector<1x32x1xf32>
    %280 = vector.shape_cast %279 : vector<1x32x1xf32> to vector<32x1xf32>
    %c3_98 = arith.constant 3 : index
    %c0_99 = arith.constant 0 : index
    %c0_100 = arith.constant 0 : index
    %281 = vector.load %arg6[%c3_98, %c0_99, %c0_100] : memref<4x32x128xbf16, #tpu.memory_space<vmem>>, vector<1x32x128xbf16>
    %282 = vector.shape_cast %281 : vector<1x32x128xbf16> to vector<32x128xbf16>
    %283 = vector.extract_strided_slice %6 {offsets = [0, 96], sizes = [8, 32], strides = [1, 1]} : vector<16x128xf32> to vector<8x32xf32>
    %284 = arith.truncf %283 : vector<8x32xf32> to vector<8x32xbf16>
    %cst_101 = arith.constant dense<0.000000e+00> : vector<32x8xf32>
    %285 = tpu.matmul %278, %284, %cst_101 {dimension_numbers = #tpu.dot_dimension_numbers<[1], [1], [0], [0], [0, 0, 1, 0], [], []>} : vector<32x32xbf16>, vector<8x32xbf16>, vector<32x8xf32> -> vector<32x8xf32>
    %286 = vector.broadcast %280 : vector<32x1xf32> to vector<32x8xf32>
    %287 = arith.addf %285, %286 : vector<32x8xf32>
    %cst_102 = arith.constant dense<0xFF800000> : vector<32xf32>
    %288 = vector.multi_reduction <maximumf>, %287, %cst_102 [1] : vector<32x8xf32> to vector<32xf32>
    %289 = vector.shape_cast %288 : vector<32xf32> to vector<32x1xf32>
    %290 = vector.broadcast %289 : vector<32x1xf32> to vector<32x8xf32>
    %291 = arith.subf %287, %290 : vector<32x8xf32>
    %292 = math.exp %291 : vector<32x8xf32>
    %cst_103 = arith.constant dense<0.000000e+00> : vector<32xf32>
    %293 = vector.multi_reduction <add>, %292, %cst_103 [1] : vector<32x8xf32> to vector<32xf32>
    %294 = vector.shape_cast %293 : vector<32xf32> to vector<32x1xf32>
    %295 = tpu.reciprocal %294 {approx = true} : vector<32x1xf32> -> vector<32x1xf32>
    %296 = vector.broadcast %295 : vector<32x1xf32> to vector<32x8xf32>
    %297 = arith.mulf %292, %296 : vector<32x8xf32>
    %cst_104 = arith.constant dense<0.000000e+00> : vector<8x128xf32>
    %298 = tpu.matmul %284, %282, %cst_104 {dimension_numbers = #tpu.dot_dimension_numbers<[1], [0], [0], [1], [0, 0, 1, 1], [], []>} : vector<8x32xbf16>, vector<32x128xbf16>, vector<8x128xf32> -> vector<8x128xf32>
    %cst_105 = arith.constant 0.000000e+00 : f32
    %299 = vector.broadcast %cst_105 : f32 to vector<8x32xf32>
    %300 = vector.extract_strided_slice %297 {offsets = [0, 0], sizes = [8, 8], strides = [1, 1]} : vector<32x8xf32> to vector<8x8xf32>
    %301 = arith.truncf %300 : vector<8x8xf32> to vector<8x8xbf16>
    %302 = vector.extract_strided_slice %298 {offsets = [0, 0], sizes = [8, 32], strides = [1, 1]} : vector<8x128xf32> to vector<8x32xf32>
    %303 = arith.truncf %302 : vector<8x32xf32> to vector<8x32xbf16>
    %cst_106 = arith.constant dense<0.000000e+00> : vector<8x32xf32>
    %304 = tpu.matmul %301, %303, %cst_106 {dimension_numbers = #tpu.dot_dimension_numbers<[1], [0], [0], [1], [0, 0, 1, 1], [], []>} : vector<8x8xbf16>, vector<8x32xbf16>, vector<8x32xf32> -> vector<8x32xf32>
    %305 = arith.addf %299, %304 : vector<8x32xf32>
    %306 = vector.extract_strided_slice %297 {offsets = [8, 0], sizes = [8, 8], strides = [1, 1]} : vector<32x8xf32> to vector<8x8xf32>
    %307 = arith.truncf %306 : vector<8x8xf32> to vector<8x8xbf16>
    %308 = vector.extract_strided_slice %298 {offsets = [0, 32], sizes = [8, 32], strides = [1, 1]} : vector<8x128xf32> to vector<8x32xf32>
    %309 = arith.truncf %308 : vector<8x32xf32> to vector<8x32xbf16>
    %cst_107 = arith.constant dense<0.000000e+00> : vector<8x32xf32>
    %310 = tpu.matmul %307, %309, %cst_107 {dimension_numbers = #tpu.dot_dimension_numbers<[1], [0], [0], [1], [0, 0, 1, 1], [], []>} : vector<8x8xbf16>, vector<8x32xbf16>, vector<8x32xf32> -> vector<8x32xf32>
    %311 = arith.addf %305, %310 : vector<8x32xf32>
    %312 = vector.extract_strided_slice %297 {offsets = [16, 0], sizes = [8, 8], strides = [1, 1]} : vector<32x8xf32> to vector<8x8xf32>
    %313 = arith.truncf %312 : vector<8x8xf32> to vector<8x8xbf16>
    %314 = vector.extract_strided_slice %298 {offsets = [0, 64], sizes = [8, 32], strides = [1, 1]} : vector<8x128xf32> to vector<8x32xf32>
    %315 = arith.truncf %314 : vector<8x32xf32> to vector<8x32xbf16>
    %cst_108 = arith.constant dense<0.000000e+00> : vector<8x32xf32>
    %316 = tpu.matmul %313, %315, %cst_108 {dimension_numbers = #tpu.dot_dimension_numbers<[1], [0], [0], [1], [0, 0, 1, 1], [], []>} : vector<8x8xbf16>, vector<8x32xbf16>, vector<8x32xf32> -> vector<8x32xf32>
    %317 = arith.addf %311, %316 : vector<8x32xf32>
    %318 = vector.extract_strided_slice %297 {offsets = [24, 0], sizes = [8, 8], strides = [1, 1]} : vector<32x8xf32> to vector<8x8xf32>
    %319 = arith.truncf %318 : vector<8x8xf32> to vector<8x8xbf16>
    %320 = vector.extract_strided_slice %298 {offsets = [0, 96], sizes = [8, 32], strides = [1, 1]} : vector<8x128xf32> to vector<8x32xf32>
    %321 = arith.truncf %320 : vector<8x32xf32> to vector<8x32xbf16>
    %cst_109 = arith.constant dense<0.000000e+00> : vector<8x32xf32>
    %322 = tpu.matmul %319, %321, %cst_109 {dimension_numbers = #tpu.dot_dimension_numbers<[1], [0], [0], [1], [0, 0, 1, 1], [], []>} : vector<8x8xbf16>, vector<8x32xbf16>, vector<8x32xf32> -> vector<8x32xf32>
    %323 = arith.addf %317, %322 : vector<8x32xf32>
    %c0_110 = arith.constant 0 : index
    %c96 = arith.constant 96 : index
    %324 = vector.load %arg12[%c0_110, %c96] : memref<16x128xf32, #tpu.memory_space<vmem>>, vector<8x32xf32>
    tpu.vector_store %arg12[%c0_110, %c96], %323 {strides = array<i32>} : memref<16x128xf32, #tpu.memory_space<vmem>>, vector<8x32xf32>,
    %325 = vector.extract_strided_slice %6 {offsets = [8, 96], sizes = [8, 32], strides = [1, 1]} : vector<16x128xf32> to vector<8x32xf32>
    %326 = arith.truncf %325 : vector<8x32xf32> to vector<8x32xbf16>
    %cst_111 = arith.constant dense<0.000000e+00> : vector<32x8xf32>
    %327 = tpu.matmul %278, %326, %cst_111 {dimension_numbers = #tpu.dot_dimension_numbers<[1], [1], [0], [0], [0, 0, 1, 0], [], []>} : vector<32x32xbf16>, vector<8x32xbf16>, vector<32x8xf32> -> vector<32x8xf32>
    %328 = vector.broadcast %280 : vector<32x1xf32> to vector<32x8xf32>
    %329 = arith.addf %327, %328 : vector<32x8xf32>
    %cst_112 = arith.constant dense<0xFF800000> : vector<32xf32>
    %330 = vector.multi_reduction <maximumf>, %329, %cst_112 [1] : vector<32x8xf32> to vector<32xf32>
    %331 = vector.shape_cast %330 : vector<32xf32> to vector<32x1xf32>
    %332 = vector.broadcast %331 : vector<32x1xf32> to vector<32x8xf32>
    %333 = arith.subf %329, %332 : vector<32x8xf32>
    %334 = math.exp %333 : vector<32x8xf32>
    %cst_113 = arith.constant dense<0.000000e+00> : vector<32xf32>
    %335 = vector.multi_reduction <add>, %334, %cst_113 [1] : vector<32x8xf32> to vector<32xf32>
    %336 = vector.shape_cast %335 : vector<32xf32> to vector<32x1xf32>
    %337 = tpu.reciprocal %336 {approx = true} : vector<32x1xf32> -> vector<32x1xf32>
    %338 = vector.broadcast %337 : vector<32x1xf32> to vector<32x8xf32>
    %339 = arith.mulf %334, %338 : vector<32x8xf32>
    %cst_114 = arith.constant dense<0.000000e+00> : vector<8x128xf32>
    %340 = tpu.matmul %326, %282, %cst_114 {dimension_numbers = #tpu.dot_dimension_numbers<[1], [0], [0], [1], [0, 0, 1, 1], [], []>} : vector<8x32xbf16>, vector<32x128xbf16>, vector<8x128xf32> -> vector<8x128xf32>
    %cst_115 = arith.constant 0.000000e+00 : f32
    %341 = vector.broadcast %cst_115 : f32 to vector<8x32xf32>
    %342 = vector.extract_strided_slice %339 {offsets = [0, 0], sizes = [8, 8], strides = [1, 1]} : vector<32x8xf32> to vector<8x8xf32>
    %343 = arith.truncf %342 : vector<8x8xf32> to vector<8x8xbf16>
    %344 = vector.extract_strided_slice %340 {offsets = [0, 0], sizes = [8, 32], strides = [1, 1]} : vector<8x128xf32> to vector<8x32xf32>
    %345 = arith.truncf %344 : vector<8x32xf32> to vector<8x32xbf16>
    %cst_116 = arith.constant dense<0.000000e+00> : vector<8x32xf32>
    %346 = tpu.matmul %343, %345, %cst_116 {dimension_numbers = #tpu.dot_dimension_numbers<[1], [0], [0], [1], [0, 0, 1, 1], [], []>} : vector<8x8xbf16>, vector<8x32xbf16>, vector<8x32xf32> -> vector<8x32xf32>
    %347 = arith.addf %341, %346 : vector<8x32xf32>
    %348 = vector.extract_strided_slice %339 {offsets = [8, 0], sizes = [8, 8], strides = [1, 1]} : vector<32x8xf32> to vector<8x8xf32>
    %349 = arith.truncf %348 : vector<8x8xf32> to vector<8x8xbf16>
    %350 = vector.extract_strided_slice %340 {offsets = [0, 32], sizes = [8, 32], strides = [1, 1]} : vector<8x128xf32> to vector<8x32xf32>
    %351 = arith.truncf %350 : vector<8x32xf32> to vector<8x32xbf16>
    %cst_117 = arith.constant dense<0.000000e+00> : vector<8x32xf32>
    %352 = tpu.matmul %349, %351, %cst_117 {dimension_numbers = #tpu.dot_dimension_numbers<[1], [0], [0], [1], [0, 0, 1, 1], [], []>} : vector<8x8xbf16>, vector<8x32xbf16>, vector<8x32xf32> -> vector<8x32xf32>
    %353 = arith.addf %347, %352 : vector<8x32xf32>
    %354 = vector.extract_strided_slice %339 {offsets = [16, 0], sizes = [8, 8], strides = [1, 1]} : vector<32x8xf32> to vector<8x8xf32>
    %355 = arith.truncf %354 : vector<8x8xf32> to vector<8x8xbf16>
    %356 = vector.extract_strided_slice %340 {offsets = [0, 64], sizes = [8, 32], strides = [1, 1]} : vector<8x128xf32> to vector<8x32xf32>
    %357 = arith.truncf %356 : vector<8x32xf32> to vector<8x32xbf16>
    %cst_118 = arith.constant dense<0.000000e+00> : vector<8x32xf32>
    %358 = tpu.matmul %355, %357, %cst_118 {dimension_numbers = #tpu.dot_dimension_numbers<[1], [0], [0], [1], [0, 0, 1, 1], [], []>} : vector<8x8xbf16>, vector<8x32xbf16>, vector<8x32xf32> -> vector<8x32xf32>
    %359 = arith.addf %353, %358 : vector<8x32xf32>
    %360 = vector.extract_strided_slice %339 {offsets = [24, 0], sizes = [8, 8], strides = [1, 1]} : vector<32x8xf32> to vector<8x8xf32>
    %361 = arith.truncf %360 : vector<8x8xf32> to vector<8x8xbf16>
    %362 = vector.extract_strided_slice %340 {offsets = [0, 96], sizes = [8, 32], strides = [1, 1]} : vector<8x128xf32> to vector<8x32xf32>
    %363 = arith.truncf %362 : vector<8x32xf32> to vector<8x32xbf16>
    %cst_119 = arith.constant dense<0.000000e+00> : vector<8x32xf32>
    %364 = tpu.matmul %361, %363, %cst_119 {dimension_numbers = #tpu.dot_dimension_numbers<[1], [0], [0], [1], [0, 0, 1, 1], [], []>} : vector<8x8xbf16>, vector<8x32xbf16>, vector<8x32xf32> -> vector<8x32xf32>
    %365 = arith.addf %359, %364 : vector<8x32xf32>
    %c8_120 = arith.constant 8 : index
    %c96_121 = arith.constant 96 : index
    %366 = vector.load %arg12[%c8_120, %c96_121] : memref<16x128xf32, #tpu.memory_space<vmem>>, vector<8x32xf32>
    tpu.vector_store %arg12[%c8_120, %c96_121], %365 {strides = array<i32>} : memref<16x128xf32, #tpu.memory_space<vmem>>, vector<8x32xf32>,
    %c0_122 = arith.constant 0 : index
    %c0_123 = arith.constant 0 : index
    %367 = vector.load %arg12[%c0_122, %c0_123] : memref<16x128xf32, #tpu.memory_space<vmem>>, vector<16x128xf32>
    %368 = arith.truncf %367 : vector<16x128xf32> to vector<16x128xbf16>
    %c0_124 = arith.constant 0 : index
    %c0_125 = arith.constant 0 : index
    %369 = vector.load %arg7[%c0_124, %c0_125] : memref<128x512xbf16, #tpu.memory_space<vmem>>, vector<128x512xbf16>
    %cst_126 = arith.constant dense<0.000000e+00> : vector<16x512xf32>
    %370 = tpu.matmul %368, %369, %cst_126 {dimension_numbers = #tpu.dot_dimension_numbers<[1], [0], [0], [1], [0, 0, 1, 1], [], []>} : vector<16x128xbf16>, vector<128x512xbf16>, vector<16x512xf32> -> vector<16x512xf32>
    %c0_127 = arith.constant 0 : index
    %c0_128 = arith.constant 0 : index
    %371 = vector.load %arg8[%c0_127, %c0_128] : memref<1x512xf32, #tpu.memory_space<vmem>>, vector<1x512xf32>
    %372 = vector.broadcast %371 : vector<1x512xf32> to vector<16x512xf32>
    %373 = arith.addf %370, %372 : vector<16x512xf32>
    %374 = math.tanh %373 : vector<16x512xf32>
    %375 = arith.truncf %374 : vector<16x512xf32> to vector<16x512xbf16>
    %c0_129 = arith.constant 0 : index
    %c0_130 = arith.constant 0 : index
    %376 = vector.load %arg9[%c0_129, %c0_130] : memref<512x128xbf16, #tpu.memory_space<vmem>>, vector<512x128xbf16>
    %cst_131 = arith.constant dense<0.000000e+00> : vector<16x128xf32>
    %377 = tpu.matmul %375, %376, %cst_131 {dimension_numbers = #tpu.dot_dimension_numbers<[1], [0], [0], [1], [0, 0, 1, 1], [], []>} : vector<16x512xbf16>, vector<512x128xbf16>, vector<16x128xf32> -> vector<16x128xf32>
    %c0_132 = arith.constant 0 : index
    %c0_133 = arith.constant 0 : index
    %378 = vector.load %arg10[%c0_132, %c0_133] : memref<1x128xf32, #tpu.memory_space<vmem>>, vector<1x128xf32>
    %379 = vector.broadcast %378 : vector<1x128xf32> to vector<16x128xf32>
    %380 = arith.addf %377, %379 : vector<16x128xf32>
    %c0_134 = arith.constant 0 : index
    %c0_135 = arith.constant 0 : index
    %381 = vector.load %arg11[%c0_134, %c0_135] : memref<16x128xf32, #tpu.memory_space<vmem>>, vector<16x128xf32>
    tpu.vector_store %arg11[%c0_134, %c0_135], %380 {strides = array<i32>} : memref<16x128xf32, #tpu.memory_space<vmem>>, vector<16x128xf32>,
    return
  }
  func.func @transform_0(%arg0: i32) -> (i32, i32) {
    %c0_i32 = arith.constant 0 : i32
    %c0_i32_0 = arith.constant 0 : i32
    %c0_i32_1 = arith.constant 0 : i32
    return %c0_i32, %c0_i32_0 : i32, i32
  }
  func.func @transform_1(%arg0: i32) -> (i32, i32) {
    %c0_i32 = arith.constant 0 : i32
    %c0_i32_0 = arith.constant 0 : i32
    %c0_i32_1 = arith.constant 0 : i32
    return %c0_i32, %c0_i32_0 : i32, i32
  }
  func.func @transform_2(%arg0: i32) -> (i32, i32) {
    %c0_i32 = arith.constant 0 : i32
    %c0_i32_0 = arith.constant 0 : i32
    %c0_i32_1 = arith.constant 0 : i32
    return %c0_i32, %c0_i32_0 : i32, i32
  }
  func.func @transform_3(%arg0: i32) -> (i32, i32, i32) {
    %c0_i32 = arith.constant 0 : i32
    %c0_i32_0 = arith.constant 0 : i32
    %c0_i32_1 = arith.constant 0 : i32
    %c0_i32_2 = arith.constant 0 : i32
    return %c0_i32, %c0_i32_0, %c0_i32_1 : i32, i32, i32
  }
  func.func @transform_4(%arg0: i32) -> (i32, i32, i32) {
    %c0_i32 = arith.constant 0 : i32
    %c0_i32_0 = arith.constant 0 : i32
    %c0_i32_1 = arith.constant 0 : i32
    %c0_i32_2 = arith.constant 0 : i32
    return %c0_i32, %c0_i32_0, %c0_i32_1 : i32, i32, i32
  }
  func.func @transform_5(%arg0: i32) -> (i32, i32, i32) {
    %c0_i32 = arith.constant 0 : i32
    %c0_i32_0 = arith.constant 0 : i32
    %c0_i32_1 = arith.constant 0 : i32
    %c0_i32_2 = arith.constant 0 : i32
    return %c0_i32, %c0_i32_0, %c0_i32_1 : i32, i32, i32
  }
  func.func @transform_6(%arg0: i32) -> (i32, i32) {
    %c0_i32 = arith.constant 0 : i32
    %c0_i32_0 = arith.constant 0 : i32
    %c0_i32_1 = arith.constant 0 : i32
    return %c0_i32, %c0_i32_0 : i32, i32
  }
  func.func @transform_7(%arg0: i32) -> (i32, i32) {
    %c0_i32 = arith.constant 0 : i32
    %c0_i32_0 = arith.constant 0 : i32
    %c0_i32_1 = arith.constant 0 : i32
    return %c0_i32, %c0_i32_0 : i32, i32
  }
  func.func @transform_8(%arg0: i32) -> (i32, i32) {
    %c0_i32 = arith.constant 0 : i32
    %c0_i32_0 = arith.constant 0 : i32
    %c0_i32_1 = arith.constant 0 : i32
    return %c0_i32, %c0_i32_0 : i32, i32
  }
  func.func @transform_9(%arg0: i32) -> (i32, i32) {
    %c0_i32 = arith.constant 0 : i32
    %c0_i32_0 = arith.constant 0 : i32
    %c0_i32_1 = arith.constant 0 : i32
    return %c0_i32, %c0_i32_0 : i32, i32
  }
  func.func @transform_10(%arg0: i32) -> (i32, i32) {
    %c0_i32 = arith.constant 0 : i32
    %c0_i32_0 = arith.constant 0 : i32
    %c0_i32_1 = arith.constant 0 : i32
    return %c0_i32, %c0_i32_0 : i32, i32
  }
}

</mosaic_0001>

<llo_original>
// kernel: tpu_custom_call.1
$region0: #{tpu_custom_call.1}
  #allocation0 [shape = 'u32[]', space=smem, size = 0x4, offset = 0x4, fixed_abs, tag = 'smem constant byte address 0x4 - core index']
  #allocation1 [shape = 'u32[72,128]{1,0:T(1,128)}', space=vmem, size = 0x9000, scoped, tag = 'internal scratch']
  #allocation2 [shape = 'f32[16,128]{1,0:T(8,128)}', space=vmem, size = 0x2000, scoped, tag = 'scratch operand']
  %s0 = inlined_call_operand.hbm [shape: f32[16,16], index: 0, kind: input, shape index: {}]
  %s1 = inlined_call_operand.hbm [shape: bf16[16,128], index: 1, kind: input, shape index: {}]
  %s2 = inlined_call_operand.vmem [shape: f32[1,128], index: 2, kind: input, shape index: {}]
  %s3 = inlined_call_operand.vmem [shape: bf16[4,32,32], index: 3, kind: input, shape index: {}]
  %s4 = inlined_call_operand.vmem [shape: f32[4,32,1], index: 4, kind: input, shape index: {}]
  %s5 = inlined_call_operand.vmem [shape: bf16[4,32,128], index: 5, kind: input, shape index: {}]
  %s6 = inlined_call_operand.hbm [shape: bf16[128,512], index: 6, kind: input, shape index: {}]
  %s7 = inlined_call_operand.vmem [shape: f32[1,512], index: 7, kind: input, shape index: {}]
  %s8 = inlined_call_operand.hbm [shape: bf16[512,128], index: 8, kind: input, shape index: {}]
  %s9 = inlined_call_operand.vmem [shape: f32[1,128], index: 9, kind: input, shape index: {}]
  %s10 = inlined_call_operand.hbm [shape: f32[16,128], index: 10, kind: output, shape index: {}]
  %s11 = sld [smem:[#allocation0]]
  $region66: #{tpu_custom_call.1} parent=0
    _
  %s13 = ssub.s32 1, %s11
  %s14 = scalar_select 0, %s13, %s11
  $region1: #{tpu_custom_call.1} parent=0
    #allocation3 [shape = 'u8[8192]{0}', space=vmem, size = 0x2000, scoped, tag = 'input window, operand 0, single buffered']
    #allocation4 [shape = 's32[1]{0}', space=sflag, size = 0x4, scoped, tag = 'scoped memory for tpu_custom_call.1']
    #allocation5 [shape = 's32[1]{0}', space=sflag, size = 0x4, scoped, tag = 'scoped memory for tpu_custom_call.1']
    #allocation6 [shape = 'u8[4096]{0}', space=vmem, size = 0x1000, scoped, tag = 'input window, operand 1, single buffered']
    #allocation7 [shape = 's32[1]{0}', space=sflag, size = 0x4, scoped, tag = 'scoped memory for tpu_custom_call.1']
    #allocation8 [shape = 'u8[131072]{0}', space=vmem, size = 0x20000, scoped, tag = 'input window, operand 6, single buffered']
    #allocation9 [shape = 'u8[131072]{0}', space=vmem, size = 0x20000, scoped, tag = 'input window, operand 8, single buffered']
    #allocation10 [shape = 's32[1]{0}', space=sflag, size = 0x4, scoped, tag = 'scoped memory for tpu_custom_call.1']
    #allocation11 [shape = 'u8[8192]{0}', space=vmem, size = 0x2000, scoped, tag = 'output window, operand 0, single buffered']
    %15 = vsyncpa [#allocation4], 0
    %16 = vsyncpa [#allocation7], 0
    %17 = vsyncpa [#allocation10], 0
    %18 = vsyncpa [#allocation5], 0
    // Predicated region
    $region2: #{tpu_custom_call.1} parent=1 // pred_check
      _
    $region3: #{tpu_custom_call.1} parent=1 // pred_check_branch
      %20 = sbr.rel (0) target = $region5
    $region4: #{tpu_custom_call.1} parent=1 // pred_region
      %22 = vsyncadd [#allocation4], 0
      %s23 = sshll.u32 %s0, 4
      %s24 = int_to_ptr.hbm [resolvable:$true] %s23
      %s25 = sshll.u32 [#allocation3], 4
      %s26 = int_to_ptr.vmem [resolvable:$true] %s25
      %31 = dma.hbm_to_vmem [thread:$0]  %s24, 256, %s26, [#allocation4], 128, 128, 8
    $region5: #{tpu_custom_call.1} parent=1 // pred_fallthru
      _
    // Predicated region
    $region6: #{tpu_custom_call.1} parent=1 // pred_check
      _
    $region7: #{tpu_custom_call.1} parent=1 // pred_check_branch
      %33 = sbr.rel (0) target = $region9
    $region8: #{tpu_custom_call.1} parent=1 // pred_region
      %35 = vsyncadd [#allocation7], 0
      %s36 = sshll.u32 %s1, 4
      %s37 = int_to_ptr.hbm [resolvable:$true] %s36
      %s38 = sshll.u32 [#allocation6], 4
      %s39 = int_to_ptr.vmem [resolvable:$true] %s38
      %44 = dma.hbm_to_vmem [thread:$0]  %s37, 128, %s39, [#allocation7], 64, 64, 4
    $region9: #{tpu_custom_call.1} parent=1 // pred_fallthru
      _
    // Predicated region
    $region10: #{tpu_custom_call.1} parent=1 // pred_check
      _
    $region11: #{tpu_custom_call.1} parent=1 // pred_check_branch
      %46 = sbr.rel (0) target = $region13
    $region12: #{tpu_custom_call.1} parent=1 // pred_region
      _
    $region13: #{tpu_custom_call.1} parent=1 // pred_fallthru
      _
    // Predicated region
    $region14: #{tpu_custom_call.1} parent=1 // pred_check
      _
    $region15: #{tpu_custom_call.1} parent=1 // pred_check_branch
      %48 = sbr.rel (0) target = $region17
    $region16: #{tpu_custom_call.1} parent=1 // pred_region
      _
    $region17: #{tpu_custom_call.1} parent=1 // pred_fallthru
      _
    // Predicated region
    $region18: #{tpu_custom_call.1} parent=1 // pred_check
      _
    $region19: #{tpu_custom_call.1} parent=1 // pred_check_branch
      %50 = sbr.rel (0) target = $region21
    $region20: #{tpu_custom_call.1} parent=1 // pred_region
      _
    $region21: #{tpu_custom_call.1} parent=1 // pred_fallthru
      _
    // Predicated region
    $region22: #{tpu_custom_call.1} parent=1 // pred_check
      _
    $region23: #{tpu_custom_call.1} parent=1 // pred_check_branch
      %52 = sbr.rel (0) target = $region25
    $region24: #{tpu_custom_call.1} parent=1 // pred_region
      _
    $region25: #{tpu_custom_call.1} parent=1 // pred_fallthru
      _
    // Predicated region
    $region26: #{tpu_custom_call.1} parent=1 // pred_check
      _
    $region27: #{tpu_custom_call.1} parent=1 // pred_check_branch
      %54 = sbr.rel (0) target = $region29
    $region28: #{tpu_custom_call.1} parent=1 // pred_region
      %56 = vsyncadd [#allocation7], 0
      %s57 = sshll.u32 %s6, 4
      %s58 = int_to_ptr.hbm [resolvable:$true] %s57
      %s59 = sshll.u32 [#allocation8], 4
      %s60 = int_to_ptr.vmem [resolvable:$true] %s59
      %65 = dma.hbm_to_vmem [thread:$0]  %s58, 4096, %s60, [#allocation7], 256, 256, 16
    $region29: #{tpu_custom_call.1} parent=1 // pred_fallthru
      _
    // Predicated region
    $region30: #{tpu_custom_call.1} parent=1 // pred_check
      _
    $region31: #{tpu_custom_call.1} parent=1 // pred_check_branch
      %67 = sbr.rel (0) target = $region33
    $region32: #{tpu_custom_call.1} parent=1 // pred_region
      _
    $region33: #{tpu_custom_call.1} parent=1 // pred_fallthru
      _
    // Predicated region
    $region34: #{tpu_custom_call.1} parent=1 // pred_check
      _
    $region35: #{tpu_custom_call.1} parent=1 // pred_check_branch
      %69 = sbr.rel (0) target = $region37
    $region36: #{tpu_custom_call.1} parent=1 // pred_region
      %71 = vsyncadd [#allocation10], 0
      %s72 = sshll.u32 %s8, 4
      %s73 = int_to_ptr.hbm [resolvable:$true] %s72
      %s74 = sshll.u32 [#allocation9], 4
      %s75 = int_to_ptr.vmem [resolvable:$true] %s74
      %80 = dma.hbm_to_vmem [thread:$0]  %s73, 4096, %s75, [#allocation10], 64, 64, 4
    $region37: #{tpu_custom_call.1} parent=1 // pred_fallthru
      _
    // Predicated region
    $region38: #{tpu_custom_call.1} parent=1 // pred_check
      _
    $region39: #{tpu_custom_call.1} parent=1 // pred_check_branch
      %82 = sbr.rel (0) target = $region41
    $region40: #{tpu_custom_call.1} parent=1 // pred_region
      _
    $region41: #{tpu_custom_call.1} parent=1 // pred_fallthru
      _
    // Predicated region
    $region42: #{tpu_custom_call.1} parent=1 // pred_check
      _
    $region43: #{tpu_custom_call.1} parent=1 // pred_check_branch
      %84 = sbr.rel (0) target = $region45
    $region44: #{tpu_custom_call.1} parent=1 // pred_region
      %86 = dma.done [#allocation4], 256
    $region45: #{tpu_custom_call.1} parent=1 // pred_fallthru
      _
    // Predicated region
    $region46: #{tpu_custom_call.1} parent=1 // pred_check
      _
    $region47: #{tpu_custom_call.1} parent=1 // pred_check_branch
      %88 = sbr.rel (0) target = $region49
    $region48: #{tpu_custom_call.1} parent=1 // pred_region
      %90 = dma.done [#allocation7], 128
    $region49: #{tpu_custom_call.1} parent=1 // pred_fallthru
      _
    // Predicated region
    $region50: #{tpu_custom_call.1} parent=1 // pred_check
      _
    $region51: #{tpu_custom_call.1} parent=1 // pred_check_branch
      %92 = sbr.rel (0) target = $region53
    $region52: #{tpu_custom_call.1} parent=1 // pred_region
      %94 = dma.done [#allocation7], 4096
    $region53: #{tpu_custom_call.1} parent=1 // pred_fallthru
      _
    // Predicated region
    $region54: #{tpu_custom_call.1} parent=1 // pred_check
      _
    $region55: #{tpu_custom_call.1} parent=1 // pred_check_branch
      %96 = sbr.rel (0) target = $region57
    $region56: #{tpu_custom_call.1} parent=1 // pred_region
      %98 = dma.done [#allocation10], 4096
    $region57: #{tpu_custom_call.1} parent=1 // pred_fallthru
      _
    %v100 = vld [vmem:[#allocation3] sm:$0xff]
    %v101 = vld [vmem:[#allocation3 + $0x8] sm:$0xff]
    %v102 = vpack.c.bf16 %v101, %v100
    %v103 = vld [vmem:[#allocation6] sm:$0xf]
    %v104 = vld [vmem:[#allocation6 + $0x4] sm:$0xf]
    %v105 = vld [vmem:[%s2] sm:$0x1]
    %v107 = vperm.slane %v105, 0
    %v111 = vunpack.c.l.b16 %v103
    %v112 = vunpack.c.l.b16 %v104
    %v113 = vpack.c.b16 %v112, %v111
    %vm115 = vcmask 130048
    %v117 = vsel %vm115, %v102, 0
    %119 = vmatpush.bf16.msra.mxu0 0
    %120 = vmatpush.bf16.msra.mxu0 0
    %121 = vmatpush.bf16.msra.mxu0 0
    %122 = vmatpush.bf16.msra.mxu0 0
    %123 = vmatpush.bf16.msra.mxu0 0
    %124 = vmatpush.bf16.msra.mxu0 0
    %125 = vmatpush.bf16.msra.mxu0 0
    %126 = vmatpush.bf16.msra.mxu0 %v113
    %127 = vmatmul.bf16.gmra.mxu0 %v117
    %v128 = vpop.f32.mrf.mxu0
    %v129 = vadd.f32 %v107, %v128
    %v130 = vpop.f32.mrf.mxu0
    %v131 = vadd.f32 %v107, %v130
    %132 = vdwg.mxu0
    %v133 = vld [vmem:[%s3] sm:$0xf]
    %v134 = vld [vmem:[%s3 + $0x4] sm:$0xf]
    %v135 = vld [vmem:[%s3 + $0x8] sm:$0xf]
    %v136 = vld [vmem:[%s3 + $0xc] sm:$0xf]
    %v137 = vld [vmem:[%s4] sm:$0xff]
    %v138 = vld [vmem:[%s4 + $0x8] sm:$0xff]
    %v139 = vld [vmem:[%s4 + $0x10] sm:$0xff]
    %v140 = vld [vmem:[%s4 + $0x18] sm:$0xff]
    %v141 = vld [vmem:[%s5] sm:$0xf]
    %v142 = vld [vmem:[%s5 + $0x4] sm:$0xf]
    %v143 = vld [vmem:[%s5 + $0x8] sm:$0xf]
    %v144 = vld [vmem:[%s5 + $0xc] sm:$0xf]
    %v145 = vpack.c.bf16 %v129, %v129
    %147 = vset.pattern.permute.xlu0 0
    %148 = vperm.xlu0 %147, %v137
    %v149 = vpop.permute.xlu0 %148
    %152 = vset.pattern.permute.xlu0 0
    %153 = vperm.xlu0 %152, %v138
    %v154 = vpop.permute.xlu0 %153
    %157 = vset.pattern.permute.xlu0 0
    %158 = vperm.xlu0 %157, %v139
    %v159 = vpop.permute.xlu0 %158
    %162 = vset.pattern.permute.xlu0 0
    %163 = vperm.xlu0 %162, %v140
    %v164 = vpop.permute.xlu0 %163
    %v170 = vunpack.c.l.b16 %v133
    %v171 = vunpack.c.l.b16 %v134
    %v172 = vunpack.c.l.b16 %v135
    %v173 = vunpack.c.l.b16 %v136
    %v174 = vpack.c.b16 %v171, %v170
    %v175 = vpack.c.b16 %v173, %v172
    %vm176 = vcmask 261120
    %v178 = vsel %vm176, %v174, 0
    %v181 = vsel %vm176, %v175, 0
    %v184 = vsel %vm176, %v145, 0
    %186 = vmatpush.bf16.xpose.msra.mxu0 0
    %187 = vmatpush.bf16.xpose.msra.mxu0 0
    %188 = vmatpush.bf16.xpose.msra.mxu0 0
    %189 = vmatpush.bf16.xpose.msra.mxu0 0
    %190 = vmatpush.bf16.xpose.msra.mxu0 0
    %191 = vmatpush.bf16.xpose.msra.mxu0 0
    %192 = vmatpush.bf16.xpose.msra.mxu0 0
    %193 = vmatpush.bf16.xpose.msra.mxu0 %v184
    %194 = vmatmul.bf16.gmra.mxu0 %v178
    %v195 = vpop.f32.mrf.mxu0
    %v196 = vadd.f32 %v149, %v195
    %v197 = vpop.f32.mrf.mxu0
    %v198 = vadd.f32 %v154, %v197
    %199 = vmatmul.bf16.gmra.mxu0 %v181
    %v200 = vpop.f32.mrf.mxu0
    %v201 = vadd.f32 %v159, %v200
    %v202 = vpop.f32.mrf.mxu0
    %v203 = vadd.f32 %v164, %v202
    %204 = vdwg.mxu0
    %vm205 = vcmask 64512
    %v206 = vsel %vm205, %v196, -inf
    %207 = vmax.xlane.f32.xlu0 %v206
    %v208 = vpop.xlane.xlu0 %207
    %v209 = vsel %vm205, %v198, -inf
    %210 = vmax.xlane.f32.xlu0 %v209
    %v211 = vpop.xlane.xlu0 %210
    %v212 = vsel %vm205, %v201, -inf
    %213 = vmax.xlane.f32.xlu0 %v212
    %v214 = vpop.xlane.xlu0 %213
    %v215 = vsel %vm205, %v203, -inf
    %216 = vmax.xlane.f32.xlu0 %v215
    %v217 = vpop.xlane.xlu0 %216
    %v218 = vsub.f32 %v196, %v208
    %v219 = vsub.f32 %v198, %v211
    %v220 = vsub.f32 %v201, %v214
    %v221 = vsub.f32 %v203, %v217
    %v222 = vmul.f32 %v218, 1.442695
    %v223 = vpow.pop %v222
    %v224 = vmul.f32 %v219, 1.442695
    %v225 = vpow.pop %v224
    %v226 = vmul.f32 %v220, 1.442695
    %v227 = vpow.pop %v226
    %v228 = vmul.f32 %v221, 1.442695
    %v229 = vpow.pop %v228
    %v230 = vsel %vm205, %v223, 0.0
    %231 = vadd.xlane.f32.xlu0 %v230
    %v232 = vpop.xlane.xlu0 %231
    %v233 = vsel %vm205, %v225, 0.0
    %234 = vadd.xlane.f32.xlu0 %v233
    %v235 = vpop.xlane.xlu0 %234
    %v236 = vsel %vm205, %v227, 0.0
    %237 = vadd.xlane.f32.xlu0 %v236
    %v238 = vpop.xlane.xlu0 %237
    %v239 = vsel %vm205, %v229, 0.0
    %240 = vadd.xlane.f32.xlu0 %v239
    %v241 = vpop.xlane.xlu0 %240
    %v242 = vrcp.pop %v232
    %v243 = vrcp.pop %v235
    %v244 = vrcp.pop %v238
    %v245 = vrcp.pop %v241
    %v246 = vmul.f32 %v223, %v242
    %v247 = vmul.f32 %v225, %v243
    %v248 = vmul.f32 %v227, %v244
    %v249 = vmul.f32 %v229, %v245
    %v254 = vunpack.c.l.b16 %v141
    %v255 = vunpack.c.l.b16 %v142
    %v256 = vunpack.c.l.b16 %v143
    %v257 = vunpack.c.l.b16 %v144
    %v258 = vpack.c.b16 %v255, %v254
    %v259 = vpack.c.b16 %v257, %v256
    %262 = vmatpush.bf16.msra.mxu0 0
    %263 = vmatpush.bf16.msra.mxu0 0
    %264 = vmatpush.bf16.msra.mxu0 0
    %265 = vmatpush.bf16.msra.mxu0 0
    %266 = vmatpush.bf16.msra.mxu0 0
    %267 = vmatpush.bf16.msra.mxu0 0
    %268 = vmatpush.bf16.msra.mxu0 %v259
    %269 = vmatpush.bf16.msra.mxu0 %v258
    %270 = vmatmul.bf16.gmra.mxu0 %v184
    %v271 = vpop.f32.mrf.mxu0
    %v272 = vadd.f32 0.0, %v271
    %v273 = vpop.f32.mrf.mxu0
    %274 = vdwg.mxu0
    %v275 = vpack.c.bf16 %v246, %v246
    %v276 = vpack.c.bf16 %v272, %v272
    %v277 = vpack.c.bf16 %v247, %v247
    %279 = vrot.lane.b32.xlu0 %v276, 96
    %v280 = vpop.permute.xlu0 %279
    %v282 = vsel %vm205, %v277, 0
    %vm284 = vcmask 1043456
    %v286 = vsel %vm284, %v280, 0
    %288 = vmatpush.bf16.msra.mxu0 0
    %289 = vmatpush.bf16.msra.mxu0 0
    %290 = vmatpush.bf16.msra.mxu0 0
    %291 = vmatpush.bf16.msra.mxu0 0
    %292 = vmatpush.bf16.msra.mxu0 0
    %293 = vmatpush.bf16.msra.mxu0 0
    %294 = vmatpush.bf16.msra.mxu0 0
    %295 = vmatpush.bf16.msra.mxu0 %v286
    %296 = vmatmul.bf16.gmra.mxu0 %v282
    %v297 = vpop.f32.mrf.mxu0
    %v298 = vadd.f32 0.0, %v297
    %v299 = vpop.f32.mrf.mxu0
    %300 = vdwg.mxu0
    %v302 = vsel %vm205, %v275, 0
    %v305 = vsel %vm284, %v276, 0
    %307 = vmatpush.bf16.msra.mxu0 0
    %308 = vmatpush.bf16.msra.mxu0 0
    %309 = vmatpush.bf16.msra.mxu0 0
    %310 = vmatpush.bf16.msra.mxu0 0
    %311 = vmatpush.bf16.msra.mxu0 0
    %312 = vmatpush.bf16.msra.mxu0 0
    %313 = vmatpush.bf16.msra.mxu0 0
    %314 = vmatpush.bf16.msra.mxu0 %v305
    %315 = vmatmul.bf16.gmra.mxu0 %v302
    %v316 = vpop.f32.mrf.mxu0
    %v317 = vadd.f32 %v298, %v316
    %v318 = vpop.f32.mrf.mxu0
    %319 = vdwg.mxu0
    %v320 = vpack.c.bf16 %v248, %v248
    %321 = vrot.lane.b32.xlu0 %v276, 64
    %v322 = vpop.permute.xlu0 %321
    %v324 = vsel %vm205, %v320, 0
    %v327 = vsel %vm284, %v322, 0
    %329 = vmatpush.bf16.msra.mxu0 0
    %330 = vmatpush.bf16.msra.mxu0 0
    %331 = vmatpush.bf16.msra.mxu0 0
    %332 = vmatpush.bf16.msra.mxu0 0
    %333 = vmatpush.bf16.msra.mxu0 0
    %334 = vmatpush.bf16.msra.mxu0 0
    %335 = vmatpush.bf16.msra.mxu0 0
    %336 = vmatpush.bf16.msra.mxu0 %v327
    %337 = vmatmul.bf16.gmra.mxu0 %v324
    %v338 = vpop.f32.mrf.mxu0
    %v339 = vadd.f32 0.0, %v338
    %v340 = vpop.f32.mrf.mxu0
    %341 = vdwg.mxu0
    %v342 = vadd.f32 %v317, %v339
    %v343 = vpack.c.bf16 %v249, %v249
    %344 = vrot.lane.b32.xlu0 %v276, 32
    %v345 = vpop.permute.xlu0 %344
    %v347 = vsel %vm205, %v343, 0
    %v350 = vsel %vm284, %v345, 0
    %352 = vmatpush.bf16.msra.mxu0 0
    %353 = vmatpush.bf16.msra.mxu0 0
    %354 = vmatpush.bf16.msra.mxu0 0
    %355 = vmatpush.bf16.msra.mxu0 0
    %356 = vmatpush.bf16.msra.mxu0 0
    %357 = vmatpush.bf16.msra.mxu0 0
    %358 = vmatpush.bf16.msra.mxu0 0
    %359 = vmatpush.bf16.msra.mxu0 %v350
    %360 = vmatmul.bf16.gmra.mxu0 %v347
    %v361 = vpop.f32.mrf.mxu0
    %v362 = vadd.f32 0.0, %v361
    %v363 = vpop.f32.mrf.mxu0
    %364 = vdwg.mxu0
    %v365 = vadd.f32 %v342, %v362
    %366 = vst.msk [vmem:[#allocation2] sm:$0xff] %vm176, %v365
    %v367 = vpack.c.bf16 %v131, %v131
    %v369 = vsel %vm176, %v367, 0
    %371 = vmatpush.bf16.xpose.msra.mxu0 0
    %372 = vmatpush.bf16.xpose.msra.mxu0 0
    %373 = vmatpush.bf16.xpose.msra.mxu0 0
    %374 = vmatpush.bf16.xpose.msra.mxu0 0
    %375 = vmatpush.bf16.xpose.msra.mxu0 0
    %376 = vmatpush.bf16.xpose.msra.mxu0 0
    %377 = vmatpush.bf16.xpose.msra.mxu0 0
    %378 = vmatpush.bf16.xpose.msra.mxu0 %v369
    %379 = vmatmul.bf16.gmra.mxu0 %v178
    %v380 = vpop.f32.mrf.mxu0
    %v381 = vadd.f32 %v149, %v380
    %v382 = vpop.f32.mrf.mxu0
    %v383 = vadd.f32 %v154, %v382
    %384 = vmatmul.bf16.gmra.mxu0 %v181
    %v385 = vpop.f32.mrf.mxu0
    %v386 = vadd.f32 %v159, %v385
    %v387 = vpop.f32.mrf.mxu0
    %v388 = vadd.f32 %v164, %v387
    %389 = vdwg.mxu0
    %v390 = vsel %vm205, %v381, -inf
    %391 = vmax.xlane.f32.xlu0 %v390
    %v392 = vpop.xlane.xlu0 %391
    %v393 = vsel %vm205, %v383, -inf
    %394 = vmax.xlane.f32.xlu0 %v393
    %v395 = vpop.xlane.xlu0 %394
    %v396 = vsel %vm205, %v386, -inf
    %397 = vmax.xlane.f32.xlu0 %v396
    %v398 = vpop.xlane.xlu0 %397
    %v399 = vsel %vm205, %v388, -inf
    %400 = vmax.xlane.f32.xlu0 %v399
    %v401 = vpop.xlane.xlu0 %400
    %v402 = vsub.f32 %v381, %v392
    %v403 = vsub.f32 %v383, %v395
    %v404 = vsub.f32 %v386, %v398
    %v405 = vsub.f32 %v388, %v401
    %v406 = vmul.f32 %v402, 1.442695
    %v407 = vpow.pop %v406
    %v408 = vmul.f32 %v403, 1.442695
    %v409 = vpow.pop %v408
    %v410 = vmul.f32 %v404, 1.442695
    %v411 = vpow.pop %v410
    %v412 = vmul.f32 %v405, 1.442695
    %v413 = vpow.pop %v412
    %v414 = vsel %vm205, %v407, 0.0
    %415 = vadd.xlane.f32.xlu0 %v414
    %v416 = vpop.xlane.xlu0 %415
    %v417 = vsel %vm205, %v409, 0.0
    %418 = vadd.xlane.f32.xlu0 %v417
    %v419 = vpop.xlane.xlu0 %418
    %v420 = vsel %vm205, %v411, 0.0
    %421 = vadd.xlane.f32.xlu0 %v420
    %v422 = vpop.xlane.xlu0 %421
    %v423 = vsel %vm205, %v413, 0.0
    %424 = vadd.xlane.f32.xlu0 %v423
    %v425 = vpop.xlane.xlu0 %424
    %v426 = vrcp.pop %v416
    %v427 = vrcp.pop %v419
    %v428 = vrcp.pop %v422
    %v429 = vrcp.pop %v425
    %v430 = vmul.f32 %v407, %v426
    %v431 = vmul.f32 %v409, %v427
    %v432 = vmul.f32 %v411, %v428
    %v433 = vmul.f32 %v413, %v429
    %434 = vmatpush.bf16.msra.mxu0 0
    %435 = vmatpush.bf16.msra.mxu0 0
    %436 = vmatpush.bf16.msra.mxu0 0
    %437 = vmatpush.bf16.msra.mxu0 0
    %438 = vmatpush.bf16.msra.mxu0 0
    %439 = vmatpush.bf16.msra.mxu0 0
    %440 = vmatpush.bf16.msra.mxu0 %v259
    %441 = vmatpush.bf16.msra.mxu0 %v258
    %442 = vmatmul.bf16.gmra.mxu0 %v369
    %v443 = vpop.f32.mrf.mxu0
    %v444 = vadd.f32 0.0, %v443
    %v445 = vpop.f32.mrf.mxu0
    %446 = vdwg.mxu0
    %v447 = vpack.c.bf16 %v430, %v430
    %v448 = vpack.c.bf16 %v444, %v444
    %v449 = vpack.c.bf16 %v431, %v431
    %451 = vrot.lane.b32.xlu0 %v448, 96
    %v452 = vpop.permute.xlu0 %451
    %v454 = vsel %vm205, %v449, 0
    %v457 = vsel %vm284, %v452, 0
    %459 = vmatpush.bf16.msra.mxu0 0
    %460 = vmatpush.bf16.msra.mxu0 0
    %461 = vmatpush.bf16.msra.mxu0 0
    %462 = vmatpush.bf16.msra.mxu0 0
    %463 = vmatpush.bf16.msra.mxu0 0
    %464 = vmatpush.bf16.msra.mxu0 0
    %465 = vmatpush.bf16.msra.mxu0 0
    %466 = vmatpush.bf16.msra.mxu0 %v457
    %467 = vmatmul.bf16.gmra.mxu0 %v454
    %v468 = vpop.f32.mrf.mxu0
    %v469 = vadd.f32 0.0, %v468
    %v470 = vpop.f32.mrf.mxu0
    %471 = vdwg.mxu0
    %v473 = vsel %vm205, %v447, 0
    %v476 = vsel %vm284, %v448, 0
    %478 = vmatpush.bf16.msra.mxu0 0
    %479 = vmatpush.bf16.msra.mxu0 0
    %480 = vmatpush.bf16.msra.mxu0 0
    %481 = vmatpush.bf16.msra.mxu0 0
    %482 = vmatpush.bf16.msra.mxu0 0
    %483 = vmatpush.bf16.msra.mxu0 0
    %484 = vmatpush.bf16.msra.mxu0 0
    %485 = vmatpush.bf16.msra.mxu0 %v476
    %486 = vmatmul.bf16.gmra.mxu0 %v473
    %v487 = vpop.f32.mrf.mxu0
    %v488 = vadd.f32 %v469, %v487
    %v489 = vpop.f32.mrf.mxu0
    %490 = vdwg.mxu0
    %v491 = vpack.c.bf16 %v432, %v432
    %492 = vrot.lane.b32.xlu0 %v448, 64
    %v493 = vpop.permute.xlu0 %492
    %v495 = vsel %vm205, %v491, 0
    %v498 = vsel %vm284, %v493, 0
    %500 = vmatpush.bf16.msra.mxu0 0
    %501 = vmatpush.bf16.msra.mxu0 0
    %502 = vmatpush.bf16.msra.mxu0 0
    %503 = vmatpush.bf16.msra.mxu0 0
    %504 = vmatpush.bf16.msra.mxu0 0
    %505 = vmatpush.bf16.msra.mxu0 0
    %506 = vmatpush.bf16.msra.mxu0 0
    %507 = vmatpush.bf16.msra.mxu0 %v498
    %508 = vmatmul.bf16.gmra.mxu0 %v495
    %v509 = vpop.f32.mrf.mxu0
    %v510 = vadd.f32 0.0, %v509
    %v511 = vpop.f32.mrf.mxu0
    %512 = vdwg.mxu0
    %v513 = vadd.f32 %v488, %v510
    %v514 = vpack.c.bf16 %v433, %v433
    %515 = vrot.lane.b32.xlu0 %v448, 32
    %v516 = vpop.permute.xlu0 %515
    %v518 = vsel %vm205, %v514, 0
    %v521 = vsel %vm284, %v516, 0
    %523 = vmatpush.bf16.msra.mxu0 0
    %524 = vmatpush.bf16.msra.mxu0 0
    %525 = vmatpush.bf16.msra.mxu0 0
    %526 = vmatpush.bf16.msra.mxu0 0
    %527 = vmatpush.bf16.msra.mxu0 0
    %528 = vmatpush.bf16.msra.mxu0 0
    %529 = vmatpush.bf16.msra.mxu0 0
    %530 = vmatpush.bf16.msra.mxu0 %v521
    %531 = vmatmul.bf16.gmra.mxu0 %v518
    %v532 = vpop.f32.mrf.mxu0
    %v533 = vadd.f32 0.0, %v532
    %v534 = vpop.f32.mrf.mxu0
    %535 = vdwg.mxu0
    %v536 = vadd.f32 %v513, %v533
    %537 = vst.msk [vmem:[#allocation2 + $0x8] sm:$0xff] %vm176, %v536
    %s538 = scalar_lea.vmem %s3, 16
    %v539 = vld [vmem:[%s538] sm:$0xf]
    %v540 = vld [vmem:[%s538 + $0x4] sm:$0xf]
    %v541 = vld [vmem:[%s538 + $0x8] sm:$0xf]
    %v542 = vld [vmem:[%s538 + $0xc] sm:$0xf]
    %s543 = scalar_lea.vmem %s4, 32
    %v544 = vld [vmem:[%s543] sm:$0xff]
    %v545 = vld [vmem:[%s543 + $0x8] sm:$0xff]
    %v546 = vld [vmem:[%s543 + $0x10] sm:$0xff]
    %v547 = vld [vmem:[%s543 + $0x18] sm:$0xff]
    %s548 = scalar_lea.vmem %s5, 16
    %v549 = vld [vmem:[%s548] sm:$0xf]
    %v550 = vld [vmem:[%s548 + $0x4] sm:$0xf]
    %v551 = vld [vmem:[%s548 + $0x8] sm:$0xf]
    %v552 = vld [vmem:[%s548 + $0xc] sm:$0xf]
    %554 = vset.pattern.permute.xlu0 0
    %555 = vperm.xlu0 %554, %v544
    %v556 = vpop.permute.xlu0 %555
    %559 = vset.pattern.permute.xlu0 0
    %560 = vperm.xlu0 %559, %v545
    %v561 = vpop.permute.xlu0 %560
    %564 = vset.pattern.permute.xlu0 0
    %565 = vperm.xlu0 %564, %v546
    %v566 = vpop.permute.xlu0 %565
    %569 = vset.pattern.permute.xlu0 0
    %570 = vperm.xlu0 %569, %v547
    %v571 = vpop.permute.xlu0 %570
    %v577 = vunpack.c.l.b16 %v539
    %v578 = vunpack.c.l.b16 %v540
    %v579 = vunpack.c.l.b16 %v541
    %v580 = vunpack.c.l.b16 %v542
    %v581 = vpack.c.b16 %v578, %v577
    %v582 = vpack.c.b16 %v580, %v579
    %584 = vrot.lane.b32.xlu0 %v145, 96
    %v585 = vpop.permute.xlu0 %584
    %v587 = vsel %vm176, %v581, 0
    %v590 = vsel %vm176, %v582, 0
    %v593 = vsel %vm176, %v585, 0
    %595 = vmatpush.bf16.xpose.msra.mxu0 0
    %596 = vmatpush.bf16.xpose.msra.mxu0 0
    %597 = vmatpush.bf16.xpose.msra.mxu0 0
    %598 = vmatpush.bf16.xpose.msra.mxu0 0
    %599 = vmatpush.bf16.xpose.msra.mxu0 0
    %600 = vmatpush.bf16.xpose.msra.mxu0 0
    %601 = vmatpush.bf16.xpose.msra.mxu0 0
    %602 = vmatpush.bf16.xpose.msra.mxu0 %v593
    %603 = vmatmul.bf16.gmra.mxu0 %v587
    %v604 = vpop.f32.mrf.mxu0
    %v605 = vadd.f32 %v556, %v604
    %v606 = vpop.f32.mrf.mxu0
    %v607 = vadd.f32 %v561, %v606
    %608 = vmatmul.bf16.gmra.mxu0 %v590
    %v609 = vpop.f32.mrf.mxu0
    %v610 = vadd.f32 %v566, %v609
    %v611 = vpop.f32.mrf.mxu0
    %v612 = vadd.f32 %v571, %v611
    %613 = vdwg.mxu0
    %v614 = vsel %vm205, %v605, -inf
    %615 = vmax.xlane.f32.xlu0 %v614
    %v616 = vpop.xlane.xlu0 %615
    %v617 = vsel %vm205, %v607, -inf
    %618 = vmax.xlane.f32.xlu0 %v617
    %v619 = vpop.xlane.xlu0 %618
    %v620 = vsel %vm205, %v610, -inf
    %621 = vmax.xlane.f32.xlu0 %v620
    %v622 = vpop.xlane.xlu0 %621
    %v623 = vsel %vm205, %v612, -inf
    %624 = vmax.xlane.f32.xlu0 %v623
    %v625 = vpop.xlane.xlu0 %624
    %v626 = vsub.f32 %v605, %v616
    %v627 = vsub.f32 %v607, %v619
    %v628 = vsub.f32 %v610, %v622
    %v629 = vsub.f32 %v612, %v625
    %v630 = vmul.f32 %v626, 1.442695
    %v631 = vpow.pop %v630
    %v632 = vmul.f32 %v627, 1.442695
    %v633 = vpow.pop %v632
    %v634 = vmul.f32 %v628, 1.442695
    %v635 = vpow.pop %v634
    %v636 = vmul.f32 %v629, 1.442695
    %v637 = vpow.pop %v636
    %v638 = vsel %vm205, %v631, 0.0
    %639 = vadd.xlane.f32.xlu0 %v638
    %v640 = vpop.xlane.xlu0 %639
    %v641 = vsel %vm205, %v633, 0.0
    %642 = vadd.xlane.f32.xlu0 %v641
    %v643 = vpop.xlane.xlu0 %642
    %v644 = vsel %vm205, %v635, 0.0
    %645 = vadd.xlane.f32.xlu0 %v644
    %v646 = vpop.xlane.xlu0 %645
    %v647 = vsel %vm205, %v637, 0.0
    %648 = vadd.xlane.f32.xlu0 %v647
    %v649 = vpop.xlane.xlu0 %648
    %v650 = vrcp.pop %v640
    %v651 = vrcp.pop %v643
    %v652 = vrcp.pop %v646
    %v653 = vrcp.pop %v649
    %v654 = vmul.f32 %v631, %v650
    %v655 = vmul.f32 %v633, %v651
    %v656 = vmul.f32 %v635, %v652
    %v657 = vmul.f32 %v637, %v653
    %v662 = vunpack.c.l.b16 %v549
    %v663 = vunpack.c.l.b16 %v550
    %v664 = vunpack.c.l.b16 %v551
    %v665 = vunpack.c.l.b16 %v552
    %v666 = vpack.c.b16 %v663, %v662
    %v667 = vpack.c.b16 %v665, %v664
    %670 = vmatpush.bf16.msra.mxu0 0
    %671 = vmatpush.bf16.msra.mxu0 0
    %672 = vmatpush.bf16.msra.mxu0 0
    %673 = vmatpush.bf16.msra.mxu0 0
    %674 = vmatpush.bf16.msra.mxu0 0
    %675 = vmatpush.bf16.msra.mxu0 0
    %676 = vmatpush.bf16.msra.mxu0 %v667
    %677 = vmatpush.bf16.msra.mxu0 %v666
    %678 = vmatmul.bf16.gmra.mxu0 %v593
    %v679 = vpop.f32.mrf.mxu0
    %v680 = vadd.f32 0.0, %v679
    %v681 = vpop.f32.mrf.mxu0
    %682 = vdwg.mxu0
    %v683 = vpack.c.bf16 %v654, %v654
    %v684 = vpack.c.bf16 %v680, %v680
    %v685 = vpack.c.bf16 %v655, %v655
    %687 = vrot.lane.b32.xlu0 %v684, 96
    %v688 = vpop.permute.xlu0 %687
    %v690 = vsel %vm205, %v685, 0
    %v693 = vsel %vm284, %v688, 0
    %695 = vmatpush.bf16.msra.mxu0 0
    %696 = vmatpush.bf16.msra.mxu0 0
    %697 = vmatpush.bf16.msra.mxu0 0
    %698 = vmatpush.bf16.msra.mxu0 0
    %699 = vmatpush.bf16.msra.mxu0 0
    %700 = vmatpush.bf16.msra.mxu0 0
    %701 = vmatpush.bf16.msra.mxu0 0
    %702 = vmatpush.bf16.msra.mxu0 %v693
    %703 = vmatmul.bf16.gmra.mxu0 %v690
    %v704 = vpop.f32.mrf.mxu0
    %v705 = vadd.f32 0.0, %v704
    %v706 = vpop.f32.mrf.mxu0
    %707 = vdwg.mxu0
    %v709 = vsel %vm205, %v683, 0
    %v712 = vsel %vm284, %v684, 0
    %714 = vmatpush.bf16.msra.mxu0 0
    %715 = vmatpush.bf16.msra.mxu0 0
    %716 = vmatpush.bf16.msra.mxu0 0
    %717 = vmatpush.bf16.msra.mxu0 0
    %718 = vmatpush.bf16.msra.mxu0 0
    %719 = vmatpush.bf16.msra.mxu0 0
    %720 = vmatpush.bf16.msra.mxu0 0
    %721 = vmatpush.bf16.msra.mxu0 %v712
    %722 = vmatmul.bf16.gmra.mxu0 %v709
    %v723 = vpop.f32.mrf.mxu0
    %v724 = vadd.f32 %v705, %v723
    %v725 = vpop.f32.mrf.mxu0
    %726 = vdwg.mxu0
    %v727 = vpack.c.bf16 %v656, %v656
    %728 = vrot.lane.b32.xlu0 %v684, 64
    %v729 = vpop.permute.xlu0 %728
    %v731 = vsel %vm205, %v727, 0
    %v734 = vsel %vm284, %v729, 0
    %736 = vmatpush.bf16.msra.mxu0 0
    %737 = vmatpush.bf16.msra.mxu0 0
    %738 = vmatpush.bf16.msra.mxu0 0
    %739 = vmatpush.bf16.msra.mxu0 0
    %740 = vmatpush.bf16.msra.mxu0 0
    %741 = vmatpush.bf16.msra.mxu0 0
    %742 = vmatpush.bf16.msra.mxu0 0
    %743 = vmatpush.bf16.msra.mxu0 %v734
    %744 = vmatmul.bf16.gmra.mxu0 %v731
    %v745 = vpop.f32.mrf.mxu0
    %v746 = vadd.f32 0.0, %v745
    %v747 = vpop.f32.mrf.mxu0
    %748 = vdwg.mxu0
    %v749 = vadd.f32 %v724, %v746
    %v750 = vpack.c.bf16 %v657, %v657
    %751 = vrot.lane.b32.xlu0 %v684, 32
    %v752 = vpop.permute.xlu0 %751
    %v754 = vsel %vm205, %v750, 0
    %v757 = vsel %vm284, %v752, 0
    %759 = vmatpush.bf16.msra.mxu0 0
    %760 = vmatpush.bf16.msra.mxu0 0
    %761 = vmatpush.bf16.msra.mxu0 0
    %762 = vmatpush.bf16.msra.mxu0 0
    %763 = vmatpush.bf16.msra.mxu0 0
    %764 = vmatpush.bf16.msra.mxu0 0
    %765 = vmatpush.bf16.msra.mxu0 0
    %766 = vmatpush.bf16.msra.mxu0 %v757
    %767 = vmatmul.bf16.gmra.mxu0 %v754
    %v768 = vpop.f32.mrf.mxu0
    %v769 = vadd.f32 0.0, %v768
    %v770 = vpop.f32.mrf.mxu0
    %771 = vdwg.mxu0
    %v772 = vadd.f32 %v749, %v769
    %774 = vrot.lane.b32.xlu0 %v772, 32
    %v775 = vpop.permute.xlu0 %774
    %vm777 = vcmask 523520
    %778 = vst.msk [vmem:[#allocation2] sm:$0xff] %vm777, %v775
    %780 = vrot.lane.b32.xlu0 %v367, 96
    %v781 = vpop.permute.xlu0 %780
    %v783 = vsel %vm176, %v781, 0
    %785 = vmatpush.bf16.xpose.msra.mxu0 0
    %786 = vmatpush.bf16.xpose.msra.mxu0 0
    %787 = vmatpush.bf16.xpose.msra.mxu0 0
    %788 = vmatpush.bf16.xpose.msra.mxu0 0
    %789 = vmatpush.bf16.xpose.msra.mxu0 0
    %790 = vmatpush.bf16.xpose.msra.mxu0 0
    %791 = vmatpush.bf16.xpose.msra.mxu0 0
    %792 = vmatpush.bf16.xpose.msra.mxu0 %v783
    %793 = vmatmul.bf16.gmra.mxu0 %v587
    %v794 = vpop.f32.mrf.mxu0
    %v795 = vadd.f32 %v556, %v794
    %v796 = vpop.f32.mrf.mxu0
    %v797 = vadd.f32 %v561, %v796
    %798 = vmatmul.bf16.gmra.mxu0 %v590
    %v799 = vpop.f32.mrf.mxu0
    %v800 = vadd.f32 %v566, %v799
    %v801 = vpop.f32.mrf.mxu0
    %v802 = vadd.f32 %v571, %v801
    %803 = vdwg.mxu0
    %v804 = vsel %vm205, %v795, -inf
    %805 = vmax.xlane.f32.xlu0 %v804
    %v806 = vpop.xlane.xlu0 %805
    %v807 = vsel %vm205, %v797, -inf
    %808 = vmax.xlane.f32.xlu0 %v807
    %v809 = vpop.xlane.xlu0 %808
    %v810 = vsel %vm205, %v800, -inf
    %811 = vmax.xlane.f32.xlu0 %v810
    %v812 = vpop.xlane.xlu0 %811
    %v813 = vsel %vm205, %v802, -inf
    %814 = vmax.xlane.f32.xlu0 %v813
    %v815 = vpop.xlane.xlu0 %814
    %v816 = vsub.f32 %v795, %v806
    %v817 = vsub.f32 %v797, %v809
    %v818 = vsub.f32 %v800, %v812
    %v819 = vsub.f32 %v802, %v815
    %v820 = vmul.f32 %v816, 1.442695
    %v821 = vpow.pop %v820
    %v822 = vmul.f32 %v817, 1.442695
    %v823 = vpow.pop %v822
    %v824 = vmul.f32 %v818, 1.442695
    %v825 = vpow.pop %v824
    %v826 = vmul.f32 %v819, 1.442695
    %v827 = vpow.pop %v826
    %v828 = vsel %vm205, %v821, 0.0
    %829 = vadd.xlane.f32.xlu0 %v828
    %v830 = vpop.xlane.xlu0 %829
    %v831 = vsel %vm205, %v823, 0.0
    %832 = vadd.xlane.f32.xlu0 %v831
    %v833 = vpop.xlane.xlu0 %832
    %v834 = vsel %vm205, %v825, 0.0
    %835 = vadd.xlane.f32.xlu0 %v834
    %v836 = vpop.xlane.xlu0 %835
    %v837 = vsel %vm205, %v827, 0.0
    %838 = vadd.xlane.f32.xlu0 %v837
    %v839 = vpop.xlane.xlu0 %838
    %v840 = vrcp.pop %v830
    %v841 = vrcp.pop %v833
    %v842 = vrcp.pop %v836
    %v843 = vrcp.pop %v839
    %v844 = vmul.f32 %v821, %v840
    %v845 = vmul.f32 %v823, %v841
    %v846 = vmul.f32 %v825, %v842
    %v847 = vmul.f32 %v827, %v843
    %848 = vmatpush.bf16.msra.mxu0 0
    %849 = vmatpush.bf16.msra.mxu0 0
    %850 = vmatpush.bf16.msra.mxu0 0
    %851 = vmatpush.bf16.msra.mxu0 0
    %852 = vmatpush.bf16.msra.mxu0 0
    %853 = vmatpush.bf16.msra.mxu0 0
    %854 = vmatpush.bf16.msra.mxu0 %v667
    %855 = vmatpush.bf16.msra.mxu0 %v666
    %856 = vmatmul.bf16.gmra.mxu0 %v783
    %v857 = vpop.f32.mrf.mxu0
    %v858 = vadd.f32 0.0, %v857
    %v859 = vpop.f32.mrf.mxu0
    %860 = vdwg.mxu0
    %v861 = vpack.c.bf16 %v844, %v844
    %v862 = vpack.c.bf16 %v858, %v858
    %v863 = vpack.c.bf16 %v845, %v845
    %865 = vrot.lane.b32.xlu0 %v862, 96
    %v866 = vpop.permute.xlu0 %865
    %v868 = vsel %vm205, %v863, 0
    %v871 = vsel %vm284, %v866, 0
    %873 = vmatpush.bf16.msra.mxu0 0
    %874 = vmatpush.bf16.msra.mxu0 0
    %875 = vmatpush.bf16.msra.mxu0 0
    %876 = vmatpush.bf16.msra.mxu0 0
    %877 = vmatpush.bf16.msra.mxu0 0
    %878 = vmatpush.bf16.msra.mxu0 0
    %879 = vmatpush.bf16.msra.mxu0 0
    %880 = vmatpush.bf16.msra.mxu0 %v871
    %881 = vmatmul.bf16.gmra.mxu0 %v868
    %v882 = vpop.f32.mrf.mxu0
    %v883 = vadd.f32 0.0, %v882
    %v884 = vpop.f32.mrf.mxu0
    %885 = vdwg.mxu0
    %v887 = vsel %vm205, %v861, 0
    %v890 = vsel %vm284, %v862, 0
    %892 = vmatpush.bf16.msra.mxu0 0
    %893 = vmatpush.bf16.msra.mxu0 0
    %894 = vmatpush.bf16.msra.mxu0 0
    %895 = vmatpush.bf16.msra.mxu0 0
    %896 = vmatpush.bf16.msra.mxu0 0
    %897 = vmatpush.bf16.msra.mxu0 0
    %898 = vmatpush.bf16.msra.mxu0 0
    %899 = vmatpush.bf16.msra.mxu0 %v890
    %900 = vmatmul.bf16.gmra.mxu0 %v887
    %v901 = vpop.f32.mrf.mxu0
    %v902 = vadd.f32 %v883, %v901
    %v903 = vpop.f32.mrf.mxu0
    %904 = vdwg.mxu0
    %v905 = vpack.c.bf16 %v846, %v846
    %906 = vrot.lane.b32.xlu0 %v862, 64
    %v907 = vpop.permute.xlu0 %906
    %v909 = vsel %vm205, %v905, 0
    %v912 = vsel %vm284, %v907, 0
    %914 = vmatpush.bf16.msra.mxu0 0
    %915 = vmatpush.bf16.msra.mxu0 0
    %916 = vmatpush.bf16.msra.mxu0 0
    %917 = vmatpush.bf16.msra.mxu0 0
    %918 = vmatpush.bf16.msra.mxu0 0
    %919 = vmatpush.bf16.msra.mxu0 0
    %920 = vmatpush.bf16.msra.mxu0 0
    %921 = vmatpush.bf16.msra.mxu0 %v912
    %922 = vmatmul.bf16.gmra.mxu0 %v909
    %v923 = vpop.f32.mrf.mxu0
    %v924 = vadd.f32 0.0, %v923
    %v925 = vpop.f32.mrf.mxu0
    %926 = vdwg.mxu0
    %v927 = vadd.f32 %v902, %v924
    %v928 = vpack.c.bf16 %v847, %v847
    %929 = vrot.lane.b32.xlu0 %v862, 32
    %v930 = vpop.permute.xlu0 %929
    %v932 = vsel %vm205, %v928, 0
    %v935 = vsel %vm284, %v930, 0
    %937 = vmatpush.bf16.msra.mxu0 0
    %938 = vmatpush.bf16.msra.mxu0 0
    %939 = vmatpush.bf16.msra.mxu0 0
    %940 = vmatpush.bf16.msra.mxu0 0
    %941 = vmatpush.bf16.msra.mxu0 0
    %942 = vmatpush.bf16.msra.mxu0 0
    %943 = vmatpush.bf16.msra.mxu0 0
    %944 = vmatpush.bf16.msra.mxu0 %v935
    %945 = vmatmul.bf16.gmra.mxu0 %v932
    %v946 = vpop.f32.mrf.mxu0
    %v947 = vadd.f32 0.0, %v946
    %v948 = vpop.f32.mrf.mxu0
    %949 = vdwg.mxu0
    %v950 = vadd.f32 %v927, %v947
    %952 = vrot.lane.b32.xlu0 %v950, 32
    %v953 = vpop.permute.xlu0 %952
    %955 = vst.msk [vmem:[#allocation2 + $0x8] sm:$0xff] %vm777, %v953
    %s956 = scalar_lea.vmem %s3, 32
    %v957 = vld [vmem:[%s956] sm:$0xf]
    %v958 = vld [vmem:[%s956 + $0x4] sm:$0xf]
    %v959 = vld [vmem:[%s956 + $0x8] sm:$0xf]
    %v960 = vld [vmem:[%s956 + $0xc] sm:$0xf]
    %s961 = scalar_lea.vmem %s4, 64
    %v962 = vld [vmem:[%s961] sm:$0xff]
    %v963 = vld [vmem:[%s961 + $0x8] sm:$0xff]
    %v964 = vld [vmem:[%s961 + $0x10] sm:$0xff]
    %v965 = vld [vmem:[%s961 + $0x18] sm:$0xff]
    %s966 = scalar_lea.vmem %s5, 32
    %v967 = vld [vmem:[%s966] sm:$0xf]
    %v968 = vld [vmem:[%s966 + $0x4] sm:$0xf]
    %v969 = vld [vmem:[%s966 + $0x8] sm:$0xf]
    %v970 = vld [vmem:[%s966 + $0xc] sm:$0xf]
    %972 = vset.pattern.permute.xlu0 0
    %973 = vperm.xlu0 %972, %v962
    %v974 = vpop.permute.xlu0 %973
    %977 = vset.pattern.permute.xlu0 0
    %978 = vperm.xlu0 %977, %v963
    %v979 = vpop.permute.xlu0 %978
    %982 = vset.pattern.permute.xlu0 0
    %983 = vperm.xlu0 %982, %v964
    %v984 = vpop.permute.xlu0 %983
    %987 = vset.pattern.permute.xlu0 0
    %988 = vperm.xlu0 %987, %v965
    %v989 = vpop.permute.xlu0 %988
    %v995 = vunpack.c.l.b16 %v957
    %v996 = vunpack.c.l.b16 %v958
    %v997 = vunpack.c.l.b16 %v959
    %v998 = vunpack.c.l.b16 %v960
    %v999 = vpack.c.b16 %v996, %v995
    %v1000 = vpack.c.b16 %v998, %v997
    %1001 = vrot.lane.b32.xlu0 %v145, 64
    %v1002 = vpop.permute.xlu0 %1001
    %v1004 = vsel %vm176, %v999, 0
    %v1007 = vsel %vm176, %v1000, 0
    %v1010 = vsel %vm176, %v1002, 0
    %1012 = vmatpush.bf16.xpose.msra.mxu0 0
    %1013 = vmatpush.bf16.xpose.msra.mxu0 0
    %1014 = vmatpush.bf16.xpose.msra.mxu0 0
    %1015 = vmatpush.bf16.xpose.msra.mxu0 0
    %1016 = vmatpush.bf16.xpose.msra.mxu0 0
    %1017 = vmatpush.bf16.xpose.msra.mxu0 0
    %1018 = vmatpush.bf16.xpose.msra.mxu0 0
    %1019 = vmatpush.bf16.xpose.msra.mxu0 %v1010
    %1020 = vmatmul.bf16.gmra.mxu0 %v1004
    %v1021 = vpop.f32.mrf.mxu0
    %v1022 = vadd.f32 %v974, %v1021
    %v1023 = vpop.f32.mrf.mxu0
    %v1024 = vadd.f32 %v979, %v1023
    %1025 = vmatmul.bf16.gmra.mxu0 %v1007
    %v1026 = vpop.f32.mrf.mxu0
    %v1027 = vadd.f32 %v984, %v1026
    %v1028 = vpop.f32.mrf.mxu0
    %v1029 = vadd.f32 %v989, %v1028
    %1030 = vdwg.mxu0
    %v1031 = vsel %vm205, %v1022, -inf
    %1032 = vmax.xlane.f32.xlu0 %v1031
    %v1033 = vpop.xlane.xlu0 %1032
    %v1034 = vsel %vm205, %v1024, -inf
    %1035 = vmax.xlane.f32.xlu0 %v1034
    %v1036 = vpop.xlane.xlu0 %1035
    %v1037 = vsel %vm205, %v1027, -inf
    %1038 = vmax.xlane.f32.xlu0 %v1037
    %v1039 = vpop.xlane.xlu0 %1038
    %v1040 = vsel %vm205, %v1029, -inf
    %1041 = vmax.xlane.f32.xlu0 %v1040
    %v1042 = vpop.xlane.xlu0 %1041
    %v1043 = vsub.f32 %v1022, %v1033
    %v1044 = vsub.f32 %v1024, %v1036
    %v1045 = vsub.f32 %v1027, %v1039
    %v1046 = vsub.f32 %v1029, %v1042
    %v1047 = vmul.f32 %v1043, 1.442695
    %v1048 = vpow.pop %v1047
    %v1049 = vmul.f32 %v1044, 1.442695
    %v1050 = vpow.pop %v1049
    %v1051 = vmul.f32 %v1045, 1.442695
    %v1052 = vpow.pop %v1051
    %v1053 = vmul.f32 %v1046, 1.442695
    %v1054 = vpow.pop %v1053
    %v1055 = vsel %vm205, %v1048, 0.0
    %1056 = vadd.xlane.f32.xlu0 %v1055
    %v1057 = vpop.xlane.xlu0 %1056
    %v1058 = vsel %vm205, %v1050, 0.0
    %1059 = vadd.xlane.f32.xlu0 %v1058
    %v1060 = vpop.xlane.xlu0 %1059
    %v1061 = vsel %vm205, %v1052, 0.0
    %1062 = vadd.xlane.f32.xlu0 %v1061
    %v1063 = vpop.xlane.xlu0 %1062
    %v1064 = vsel %vm205, %v1054, 0.0
    %1065 = vadd.xlane.f32.xlu0 %v1064
    %v1066 = vpop.xlane.xlu0 %1065
    %v1067 = vrcp.pop %v1057
    %v1068 = vrcp.pop %v1060
    %v1069 = vrcp.pop %v1063
    %v1070 = vrcp.pop %v1066
    %v1071 = vmul.f32 %v1048, %v1067
    %v1072 = vmul.f32 %v1050, %v1068
    %v1073 = vmul.f32 %v1052, %v1069
    %v1074 = vmul.f32 %v1054, %v1070
    %v1079 = vunpack.c.l.b16 %v967
    %v1080 = vunpack.c.l.b16 %v968
    %v1081 = vunpack.c.l.b16 %v969
    %v1082 = vunpack.c.l.b16 %v970
    %v1083 = vpack.c.b16 %v1080, %v1079
    %v1084 = vpack.c.b16 %v1082, %v1081
    %1087 = vmatpush.bf16.msra.mxu0 0
    %1088 = vmatpush.bf16.msra.mxu0 0
    %1089 = vmatpush.bf16.msra.mxu0 0
    %1090 = vmatpush.bf16.msra.mxu0 0
    %1091 = vmatpush.bf16.msra.mxu0 0
    %1092 = vmatpush.bf16.msra.mxu0 0
    %1093 = vmatpush.bf16.msra.mxu0 %v1084
    %1094 = vmatpush.bf16.msra.mxu0 %v1083
    %1095 = vmatmul.bf16.gmra.mxu0 %v1010
    %v1096 = vpop.f32.mrf.mxu0
    %v1097 = vadd.f32 0.0, %v1096
    %v1098 = vpop.f32.mrf.mxu0
    %1099 = vdwg.mxu0
    %v1100 = vpack.c.bf16 %v1071, %v1071
    %v1101 = vpack.c.bf16 %v1097, %v1097
    %v1102 = vpack.c.bf16 %v1072, %v1072
    %1104 = vrot.lane.b32.xlu0 %v1101, 96
    %v1105 = vpop.permute.xlu0 %1104
    %v1107 = vsel %vm205, %v1102, 0
    %v1110 = vsel %vm284, %v1105, 0
    %1112 = vmatpush.bf16.msra.mxu0 0
    %1113 = vmatpush.bf16.msra.mxu0 0
    %1114 = vmatpush.bf16.msra.mxu0 0
    %1115 = vmatpush.bf16.msra.mxu0 0
    %1116 = vmatpush.bf16.msra.mxu0 0
    %1117 = vmatpush.bf16.msra.mxu0 0
    %1118 = vmatpush.bf16.msra.mxu0 0
    %1119 = vmatpush.bf16.msra.mxu0 %v1110
    %1120 = vmatmul.bf16.gmra.mxu0 %v1107
    %v1121 = vpop.f32.mrf.mxu0
    %v1122 = vadd.f32 0.0, %v1121
    %v1123 = vpop.f32.mrf.mxu0
    %1124 = vdwg.mxu0
    %v1126 = vsel %vm205, %v1100, 0
    %v1129 = vsel %vm284, %v1101, 0
    %1131 = vmatpush.bf16.msra.mxu0 0
    %1132 = vmatpush.bf16.msra.mxu0 0
    %1133 = vmatpush.bf16.msra.mxu0 0
    %1134 = vmatpush.bf16.msra.mxu0 0
    %1135 = vmatpush.bf16.msra.mxu0 0
    %1136 = vmatpush.bf16.msra.mxu0 0
    %1137 = vmatpush.bf16.msra.mxu0 0
    %1138 = vmatpush.bf16.msra.mxu0 %v1129
    %1139 = vmatmul.bf16.gmra.mxu0 %v1126
    %v1140 = vpop.f32.mrf.mxu0
    %v1141 = vadd.f32 %v1122, %v1140
    %v1142 = vpop.f32.mrf.mxu0
    %1143 = vdwg.mxu0
    %v1144 = vpack.c.bf16 %v1073, %v1073
    %1145 = vrot.lane.b32.xlu0 %v1101, 64
    %v1146 = vpop.permute.xlu0 %1145
    %v1148 = vsel %vm205, %v1144, 0
    %v1151 = vsel %vm284, %v1146, 0
    %1153 = vmatpush.bf16.msra.mxu0 0
    %1154 = vmatpush.bf16.msra.mxu0 0
    %1155 = vmatpush.bf16.msra.mxu0 0
    %1156 = vmatpush.bf16.msra.mxu0 0
    %1157 = vmatpush.bf16.msra.mxu0 0
    %1158 = vmatpush.bf16.msra.mxu0 0
    %1159 = vmatpush.bf16.msra.mxu0 0
    %1160 = vmatpush.bf16.msra.mxu0 %v1151
    %1161 = vmatmul.bf16.gmra.mxu0 %v1148
    %v1162 = vpop.f32.mrf.mxu0
    %v1163 = vadd.f32 0.0, %v1162
    %v1164 = vpop.f32.mrf.mxu0
    %1165 = vdwg.mxu0
    %v1166 = vadd.f32 %v1141, %v1163
    %v1167 = vpack.c.bf16 %v1074, %v1074
    %1168 = vrot.lane.b32.xlu0 %v1101, 32
    %v1169 = vpop.permute.xlu0 %1168
    %v1171 = vsel %vm205, %v1167, 0
    %v1174 = vsel %vm284, %v1169, 0
    %1176 = vmatpush.bf16.msra.mxu0 0
    %1177 = vmatpush.bf16.msra.mxu0 0
    %1178 = vmatpush.bf16.msra.mxu0 0
    %1179 = vmatpush.bf16.msra.mxu0 0
    %1180 = vmatpush.bf16.msra.mxu0 0
    %1181 = vmatpush.bf16.msra.mxu0 0
    %1182 = vmatpush.bf16.msra.mxu0 0
    %1183 = vmatpush.bf16.msra.mxu0 %v1174
    %1184 = vmatmul.bf16.gmra.mxu0 %v1171
    %v1185 = vpop.f32.mrf.mxu0
    %v1186 = vadd.f32 0.0, %v1185
    %v1187 = vpop.f32.mrf.mxu0
    %1188 = vdwg.mxu0
    %v1189 = vadd.f32 %v1166, %v1186
    %1191 = vrot.lane.b32.xlu0 %v1189, 64
    %v1192 = vpop.permute.xlu0 %1191
    %vm1194 = vcmask 785920
    %1195 = vst.msk [vmem:[#allocation2] sm:$0xff] %vm1194, %v1192
    %1196 = vrot.lane.b32.xlu0 %v367, 64
    %v1197 = vpop.permute.xlu0 %1196
    %v1199 = vsel %vm176, %v1197, 0
    %1201 = vmatpush.bf16.xpose.msra.mxu0 0
    %1202 = vmatpush.bf16.xpose.msra.mxu0 0
    %1203 = vmatpush.bf16.xpose.msra.mxu0 0
    %1204 = vmatpush.bf16.xpose.msra.mxu0 0
    %1205 = vmatpush.bf16.xpose.msra.mxu0 0
    %1206 = vmatpush.bf16.xpose.msra.mxu0 0
    %1207 = vmatpush.bf16.xpose.msra.mxu0 0
    %1208 = vmatpush.bf16.xpose.msra.mxu0 %v1199
    %1209 = vmatmul.bf16.gmra.mxu0 %v1004
    %v1210 = vpop.f32.mrf.mxu0
    %v1211 = vadd.f32 %v974, %v1210
    %v1212 = vpop.f32.mrf.mxu0
    %v1213 = vadd.f32 %v979, %v1212
    %1214 = vmatmul.bf16.gmra.mxu0 %v1007
    %v1215 = vpop.f32.mrf.mxu0
    %v1216 = vadd.f32 %v984, %v1215
    %v1217 = vpop.f32.mrf.mxu0
    %v1218 = vadd.f32 %v989, %v1217
    %1219 = vdwg.mxu0
    %v1220 = vsel %vm205, %v1211, -inf
    %1221 = vmax.xlane.f32.xlu0 %v1220
    %v1222 = vpop.xlane.xlu0 %1221
    %v1223 = vsel %vm205, %v1213, -inf
    %1224 = vmax.xlane.f32.xlu0 %v1223
    %v1225 = vpop.xlane.xlu0 %1224
    %v1226 = vsel %vm205, %v1216, -inf
    %1227 = vmax.xlane.f32.xlu0 %v1226
    %v1228 = vpop.xlane.xlu0 %1227
    %v1229 = vsel %vm205, %v1218, -inf
    %1230 = vmax.xlane.f32.xlu0 %v1229
    %v1231 = vpop.xlane.xlu0 %1230
    %v1232 = vsub.f32 %v1211, %v1222
    %v1233 = vsub.f32 %v1213, %v1225
    %v1234 = vsub.f32 %v1216, %v1228
    %v1235 = vsub.f32 %v1218, %v1231
    %v1236 = vmul.f32 %v1232, 1.442695
    %v1237 = vpow.pop %v1236
    %v1238 = vmul.f32 %v1233, 1.442695
    %v1239 = vpow.pop %v1238
    %v1240 = vmul.f32 %v1234, 1.442695
    %v1241 = vpow.pop %v1240
    %v1242 = vmul.f32 %v1235, 1.442695
    %v1243 = vpow.pop %v1242
    %v1244 = vsel %vm205, %v1237, 0.0
    %1245 = vadd.xlane.f32.xlu0 %v1244
    %v1246 = vpop.xlane.xlu0 %1245
    %v1247 = vsel %vm205, %v1239, 0.0
    %1248 = vadd.xlane.f32.xlu0 %v1247
    %v1249 = vpop.xlane.xlu0 %1248
    %v1250 = vsel %vm205, %v1241, 0.0
    %1251 = vadd.xlane.f32.xlu0 %v1250
    %v1252 = vpop.xlane.xlu0 %1251
    %v1253 = vsel %vm205, %v1243, 0.0
    %1254 = vadd.xlane.f32.xlu0 %v1253
    %v1255 = vpop.xlane.xlu0 %1254
    %v1256 = vrcp.pop %v1246
    %v1257 = vrcp.pop %v1249
    %v1258 = vrcp.pop %v1252
    %v1259 = vrcp.pop %v1255
    %v1260 = vmul.f32 %v1237, %v1256
    %v1261 = vmul.f32 %v1239, %v1257
    %v1262 = vmul.f32 %v1241, %v1258
    %v1263 = vmul.f32 %v1243, %v1259
    %1264 = vmatpush.bf16.msra.mxu0 0
    %1265 = vmatpush.bf16.msra.mxu0 0
    %1266 = vmatpush.bf16.msra.mxu0 0
    %1267 = vmatpush.bf16.msra.mxu0 0
    %1268 = vmatpush.bf16.msra.mxu0 0
    %1269 = vmatpush.bf16.msra.mxu0 0
    %1270 = vmatpush.bf16.msra.mxu0 %v1084
    %1271 = vmatpush.bf16.msra.mxu0 %v1083
    %1272 = vmatmul.bf16.gmra.mxu0 %v1199
    %v1273 = vpop.f32.mrf.mxu0
    %v1274 = vadd.f32 0.0, %v1273
    %v1275 = vpop.f32.mrf.mxu0
    %1276 = vdwg.mxu0
    %v1277 = vpack.c.bf16 %v1260, %v1260
    %v1278 = vpack.c.bf16 %v1274, %v1274
    %v1279 = vpack.c.bf16 %v1261, %v1261
    %1281 = vrot.lane.b32.xlu0 %v1278, 96
    %v1282 = vpop.permute.xlu0 %1281
    %v1284 = vsel %vm205, %v1279, 0
    %v1287 = vsel %vm284, %v1282, 0
    %1289 = vmatpush.bf16.msra.mxu0 0
    %1290 = vmatpush.bf16.msra.mxu0 0
    %1291 = vmatpush.bf16.msra.mxu0 0
    %1292 = vmatpush.bf16.msra.mxu0 0
    %1293 = vmatpush.bf16.msra.mxu0 0
    %1294 = vmatpush.bf16.msra.mxu0 0
    %1295 = vmatpush.bf16.msra.mxu0 0
    %1296 = vmatpush.bf16.msra.mxu0 %v1287
    %1297 = vmatmul.bf16.gmra.mxu0 %v1284
    %v1298 = vpop.f32.mrf.mxu0
    %v1299 = vadd.f32 0.0, %v1298
    %v1300 = vpop.f32.mrf.mxu0
    %1301 = vdwg.mxu0
    %v1303 = vsel %vm205, %v1277, 0
    %v1306 = vsel %vm284, %v1278, 0
    %1308 = vmatpush.bf16.msra.mxu0 0
    %1309 = vmatpush.bf16.msra.mxu0 0
    %1310 = vmatpush.bf16.msra.mxu0 0
    %1311 = vmatpush.bf16.msra.mxu0 0
    %1312 = vmatpush.bf16.msra.mxu0 0
    %1313 = vmatpush.bf16.msra.mxu0 0
    %1314 = vmatpush.bf16.msra.mxu0 0
    %1315 = vmatpush.bf16.msra.mxu0 %v1306
    %1316 = vmatmul.bf16.gmra.mxu0 %v1303
    %v1317 = vpop.f32.mrf.mxu0
    %v1318 = vadd.f32 %v1299, %v1317
    %v1319 = vpop.f32.mrf.mxu0
    %1320 = vdwg.mxu0
    %v1321 = vpack.c.bf16 %v1262, %v1262
    %1322 = vrot.lane.b32.xlu0 %v1278, 64
    %v1323 = vpop.permute.xlu0 %1322
    %v1325 = vsel %vm205, %v1321, 0
    %v1328 = vsel %vm284, %v1323, 0
    %1330 = vmatpush.bf16.msra.mxu0 0
    %1331 = vmatpush.bf16.msra.mxu0 0
    %1332 = vmatpush.bf16.msra.mxu0 0
    %1333 = vmatpush.bf16.msra.mxu0 0
    %1334 = vmatpush.bf16.msra.mxu0 0
    %1335 = vmatpush.bf16.msra.mxu0 0
    %1336 = vmatpush.bf16.msra.mxu0 0
    %1337 = vmatpush.bf16.msra.mxu0 %v1328
    %1338 = vmatmul.bf16.gmra.mxu0 %v1325
    %v1339 = vpop.f32.mrf.mxu0
    %v1340 = vadd.f32 0.0, %v1339
    %v1341 = vpop.f32.mrf.mxu0
    %1342 = vdwg.mxu0
    %v1343 = vadd.f32 %v1318, %v1340
    %v1344 = vpack.c.bf16 %v1263, %v1263
    %1345 = vrot.lane.b32.xlu0 %v1278, 32
    %v1346 = vpop.permute.xlu0 %1345
    %v1348 = vsel %vm205, %v1344, 0
    %v1351 = vsel %vm284, %v1346, 0
    %1353 = vmatpush.bf16.msra.mxu0 0
    %1354 = vmatpush.bf16.msra.mxu0 0
    %1355 = vmatpush.bf16.msra.mxu0 0
    %1356 = vmatpush.bf16.msra.mxu0 0
    %1357 = vmatpush.bf16.msra.mxu0 0
    %1358 = vmatpush.bf16.msra.mxu0 0
    %1359 = vmatpush.bf16.msra.mxu0 0
    %1360 = vmatpush.bf16.msra.mxu0 %v1351
    %1361 = vmatmul.bf16.gmra.mxu0 %v1348
    %v1362 = vpop.f32.mrf.mxu0
    %v1363 = vadd.f32 0.0, %v1362
    %v1364 = vpop.f32.mrf.mxu0
    %1365 = vdwg.mxu0
    %v1366 = vadd.f32 %v1343, %v1363
    %1368 = vrot.lane.b32.xlu0 %v1366, 64
    %v1369 = vpop.permute.xlu0 %1368
    %1371 = vst.msk [vmem:[#allocation2 + $0x8] sm:$0xff] %vm1194, %v1369
    %s1372 = scalar_lea.vmem %s3, 48
    %v1373 = vld [vmem:[%s1372] sm:$0xf]
    %v1374 = vld [vmem:[%s1372 + $0x4] sm:$0xf]
    %v1375 = vld [vmem:[%s1372 + $0x8] sm:$0xf]
    %v1376 = vld [vmem:[%s1372 + $0xc] sm:$0xf]
    %s1377 = scalar_lea.vmem %s4, 96
    %v1378 = vld [vmem:[%s1377] sm:$0xff]
    %v1379 = vld [vmem:[%s1377 + $0x8] sm:$0xff]
    %v1380 = vld [vmem:[%s1377 + $0x10] sm:$0xff]
    %v1381 = vld [vmem:[%s1377 + $0x18] sm:$0xff]
    %s1382 = scalar_lea.vmem %s5, 48
    %v1383 = vld [vmem:[%s1382] sm:$0xf]
    %v1384 = vld [vmem:[%s1382 + $0x4] sm:$0xf]
    %v1385 = vld [vmem:[%s1382 + $0x8] sm:$0xf]
    %v1386 = vld [vmem:[%s1382 + $0xc] sm:$0xf]
    %1388 = vset.pattern.permute.xlu0 0
    %1389 = vperm.xlu0 %1388, %v1378
    %v1390 = vpop.permute.xlu0 %1389
    %1393 = vset.pattern.permute.xlu0 0
    %1394 = vperm.xlu0 %1393, %v1379
    %v1395 = vpop.permute.xlu0 %1394
    %1398 = vset.pattern.permute.xlu0 0
    %1399 = vperm.xlu0 %1398, %v1380
    %v1400 = vpop.permute.xlu0 %1399
    %1403 = vset.pattern.permute.xlu0 0
    %1404 = vperm.xlu0 %1403, %v1381
    %v1405 = vpop.permute.xlu0 %1404
    %v1411 = vunpack.c.l.b16 %v1373
    %v1412 = vunpack.c.l.b16 %v1374
    %v1413 = vunpack.c.l.b16 %v1375
    %v1414 = vunpack.c.l.b16 %v1376
    %v1415 = vpack.c.b16 %v1412, %v1411
    %v1416 = vpack.c.b16 %v1414, %v1413
    %1417 = vrot.lane.b32.xlu0 %v145, 32
    %v1418 = vpop.permute.xlu0 %1417
    %v1420 = vsel %vm176, %v1415, 0
    %v1423 = vsel %vm176, %v1416, 0
    %v1426 = vsel %vm176, %v1418, 0
    %1428 = vmatpush.bf16.xpose.msra.mxu0 0
    %1429 = vmatpush.bf16.xpose.msra.mxu0 0
    %1430 = vmatpush.bf16.xpose.msra.mxu0 0
    %1431 = vmatpush.bf16.xpose.msra.mxu0 0
    %1432 = vmatpush.bf16.xpose.msra.mxu0 0
    %1433 = vmatpush.bf16.xpose.msra.mxu0 0
    %1434 = vmatpush.bf16.xpose.msra.mxu0 0
    %1435 = vmatpush.bf16.xpose.msra.mxu0 %v1426
    %1436 = vmatmul.bf16.gmra.mxu0 %v1420
    %v1437 = vpop.f32.mrf.mxu0
    %v1438 = vadd.f32 %v1390, %v1437
    %v1439 = vpop.f32.mrf.mxu0
    %v1440 = vadd.f32 %v1395, %v1439
    %1441 = vmatmul.bf16.gmra.mxu0 %v1423
    %v1442 = vpop.f32.mrf.mxu0
    %v1443 = vadd.f32 %v1400, %v1442
    %v1444 = vpop.f32.mrf.mxu0
    %v1445 = vadd.f32 %v1405, %v1444
    %1446 = vdwg.mxu0
    %v1447 = vsel %vm205, %v1438, -inf
    %1448 = vmax.xlane.f32.xlu0 %v1447
    %v1449 = vpop.xlane.xlu0 %1448
    %v1450 = vsel %vm205, %v1440, -inf
    %1451 = vmax.xlane.f32.xlu0 %v1450
    %v1452 = vpop.xlane.xlu0 %1451
    %v1453 = vsel %vm205, %v1443, -inf
    %1454 = vmax.xlane.f32.xlu0 %v1453
    %v1455 = vpop.xlane.xlu0 %1454
    %v1456 = vsel %vm205, %v1445, -inf
    %1457 = vmax.xlane.f32.xlu0 %v1456
    %v1458 = vpop.xlane.xlu0 %1457
    %v1459 = vsub.f32 %v1438, %v1449
    %v1460 = vsub.f32 %v1440, %v1452
    %v1461 = vsub.f32 %v1443, %v1455
    %v1462 = vsub.f32 %v1445, %v1458
    %v1463 = vmul.f32 %v1459, 1.442695
    %v1464 = vpow.pop %v1463
    %v1465 = vmul.f32 %v1460, 1.442695
    %v1466 = vpow.pop %v1465
    %v1467 = vmul.f32 %v1461, 1.442695
    %v1468 = vpow.pop %v1467
    %v1469 = vmul.f32 %v1462, 1.442695
    %v1470 = vpow.pop %v1469
    %v1471 = vsel %vm205, %v1464, 0.0
    %1472 = vadd.xlane.f32.xlu0 %v1471
    %v1473 = vpop.xlane.xlu0 %1472
    %v1474 = vsel %vm205, %v1466, 0.0
    %1475 = vadd.xlane.f32.xlu0 %v1474
    %v1476 = vpop.xlane.xlu0 %1475
    %v1477 = vsel %vm205, %v1468, 0.0
    %1478 = vadd.xlane.f32.xlu0 %v1477
    %v1479 = vpop.xlane.xlu0 %1478
    %v1480 = vsel %vm205, %v1470, 0.0
    %1481 = vadd.xlane.f32.xlu0 %v1480
    %v1482 = vpop.xlane.xlu0 %1481
    %v1483 = vrcp.pop %v1473
    %v1484 = vrcp.pop %v1476
    %v1485 = vrcp.pop %v1479
    %v1486 = vrcp.pop %v1482
    %v1487 = vmul.f32 %v1464, %v1483
    %v1488 = vmul.f32 %v1466, %v1484
    %v1489 = vmul.f32 %v1468, %v1485
    %v1490 = vmul.f32 %v1470, %v1486
    %v1495 = vunpack.c.l.b16 %v1383
    %v1496 = vunpack.c.l.b16 %v1384
    %v1497 = vunpack.c.l.b16 %v1385
    %v1498 = vunpack.c.l.b16 %v1386
    %v1499 = vpack.c.b16 %v1496, %v1495
    %v1500 = vpack.c.b16 %v1498, %v1497
    %1503 = vmatpush.bf16.msra.mxu0 0
    %1504 = vmatpush.bf16.msra.mxu0 0
    %1505 = vmatpush.bf16.msra.mxu0 0
    %1506 = vmatpush.bf16.msra.mxu0 0
    %1507 = vmatpush.bf16.msra.mxu0 0
    %1508 = vmatpush.bf16.msra.mxu0 0
    %1509 = vmatpush.bf16.msra.mxu0 %v1500
    %1510 = vmatpush.bf16.msra.mxu0 %v1499
    %1511 = vmatmul.bf16.gmra.mxu0 %v1426
    %v1512 = vpop.f32.mrf.mxu0
    %v1513 = vadd.f32 0.0, %v1512
    %v1514 = vpop.f32.mrf.mxu0
    %1515 = vdwg.mxu0
    %v1516 = vpack.c.bf16 %v1487, %v1487
    %v1517 = vpack.c.bf16 %v1513, %v1513
    %v1518 = vpack.c.bf16 %v1488, %v1488
    %1520 = vrot.lane.b32.xlu0 %v1517, 96
    %v1521 = vpop.permute.xlu0 %1520
    %v1523 = vsel %vm205, %v1518, 0
    %v1526 = vsel %vm284, %v1521, 0
    %1528 = vmatpush.bf16.msra.mxu0 0
    %1529 = vmatpush.bf16.msra.mxu0 0
    %1530 = vmatpush.bf16.msra.mxu0 0
    %1531 = vmatpush.bf16.msra.mxu0 0
    %1532 = vmatpush.bf16.msra.mxu0 0
    %1533 = vmatpush.bf16.msra.mxu0 0
    %1534 = vmatpush.bf16.msra.mxu0 0
    %1535 = vmatpush.bf16.msra.mxu0 %v1526
    %1536 = vmatmul.bf16.gmra.mxu0 %v1523
    %v1537 = vpop.f32.mrf.mxu0
    %v1538 = vadd.f32 0.0, %v1537
    %v1539 = vpop.f32.mrf.mxu0
    %1540 = vdwg.mxu0
    %v1542 = vsel %vm205, %v1516, 0
    %v1545 = vsel %vm284, %v1517, 0
    %1547 = vmatpush.bf16.msra.mxu0 0
    %1548 = vmatpush.bf16.msra.mxu0 0
    %1549 = vmatpush.bf16.msra.mxu0 0
    %1550 = vmatpush.bf16.msra.mxu0 0
    %1551 = vmatpush.bf16.msra.mxu0 0
    %1552 = vmatpush.bf16.msra.mxu0 0
    %1553 = vmatpush.bf16.msra.mxu0 0
    %1554 = vmatpush.bf16.msra.mxu0 %v1545
    %1555 = vmatmul.bf16.gmra.mxu0 %v1542
    %v1556 = vpop.f32.mrf.mxu0
    %v1557 = vadd.f32 %v1538, %v1556
    %v1558 = vpop.f32.mrf.mxu0
    %1559 = vdwg.mxu0
    %v1560 = vpack.c.bf16 %v1489, %v1489
    %1561 = vrot.lane.b32.xlu0 %v1517, 64
    %v1562 = vpop.permute.xlu0 %1561
    %v1564 = vsel %vm205, %v1560, 0
    %v1567 = vsel %vm284, %v1562, 0
    %1569 = vmatpush.bf16.msra.mxu0 0
    %1570 = vmatpush.bf16.msra.mxu0 0
    %1571 = vmatpush.bf16.msra.mxu0 0
    %1572 = vmatpush.bf16.msra.mxu0 0
    %1573 = vmatpush.bf16.msra.mxu0 0
    %1574 = vmatpush.bf16.msra.mxu0 0
    %1575 = vmatpush.bf16.msra.mxu0 0
    %1576 = vmatpush.bf16.msra.mxu0 %v1567
    %1577 = vmatmul.bf16.gmra.mxu0 %v1564
    %v1578 = vpop.f32.mrf.mxu0
    %v1579 = vadd.f32 0.0, %v1578
    %v1580 = vpop.f32.mrf.mxu0
    %1581 = vdwg.mxu0
    %v1582 = vadd.f32 %v1557, %v1579
    %v1583 = vpack.c.bf16 %v1490, %v1490
    %1584 = vrot.lane.b32.xlu0 %v1517, 32
    %v1585 = vpop.permute.xlu0 %1584
    %v1587 = vsel %vm205, %v1583, 0
    %v1590 = vsel %vm284, %v1585, 0
    %1592 = vmatpush.bf16.msra.mxu0 0
    %1593 = vmatpush.bf16.msra.mxu0 0
    %1594 = vmatpush.bf16.msra.mxu0 0
    %1595 = vmatpush.bf16.msra.mxu0 0
    %1596 = vmatpush.bf16.msra.mxu0 0
    %1597 = vmatpush.bf16.msra.mxu0 0
    %1598 = vmatpush.bf16.msra.mxu0 0
    %1599 = vmatpush.bf16.msra.mxu0 %v1590
    %1600 = vmatmul.bf16.gmra.mxu0 %v1587
    %v1601 = vpop.f32.mrf.mxu0
    %v1602 = vadd.f32 0.0, %v1601
    %v1603 = vpop.f32.mrf.mxu0
    %1604 = vdwg.mxu0
    %v1605 = vadd.f32 %v1582, %v1602
    %1607 = vrot.lane.b32.xlu0 %v1605, 96
    %v1608 = vpop.permute.xlu0 %1607
    %vm1610 = vcmask 1048320
    %1611 = vst.msk [vmem:[#allocation2] sm:$0xff] %vm1610, %v1608
    %1612 = vrot.lane.b32.xlu0 %v367, 32
    %v1613 = vpop.permute.xlu0 %1612
    %v1615 = vsel %vm176, %v1613, 0
    %1617 = vmatpush.bf16.xpose.msra.mxu0 0
    %1618 = vmatpush.bf16.xpose.msra.mxu0 0
    %1619 = vmatpush.bf16.xpose.msra.mxu0 0
    %1620 = vmatpush.bf16.xpose.msra.mxu0 0
    %1621 = vmatpush.bf16.xpose.msra.mxu0 0
    %1622 = vmatpush.bf16.xpose.msra.mxu0 0
    %1623 = vmatpush.bf16.xpose.msra.mxu0 0
    %1624 = vmatpush.bf16.xpose.msra.mxu0 %v1615
    %1625 = vmatmul.bf16.gmra.mxu0 %v1420
    %v1626 = vpop.f32.mrf.mxu0
    %v1627 = vadd.f32 %v1390, %v1626
    %v1628 = vpop.f32.mrf.mxu0
    %v1629 = vadd.f32 %v1395, %v1628
    %1630 = vmatmul.bf16.gmra.mxu0 %v1423
    %v1631 = vpop.f32.mrf.mxu0
    %v1632 = vadd.f32 %v1400, %v1631
    %v1633 = vpop.f32.mrf.mxu0
    %v1634 = vadd.f32 %v1405, %v1633
    %1635 = vdwg.mxu0
    %v1636 = vsel %vm205, %v1627, -inf
    %1637 = vmax.xlane.f32.xlu0 %v1636
    %v1638 = vpop.xlane.xlu0 %1637
    %v1639 = vsel %vm205, %v1629, -inf
    %1640 = vmax.xlane.f32.xlu0 %v1639
    %v1641 = vpop.xlane.xlu0 %1640
    %v1642 = vsel %vm205, %v1632, -inf
    %1643 = vmax.xlane.f32.xlu0 %v1642
    %v1644 = vpop.xlane.xlu0 %1643
    %v1645 = vsel %vm205, %v1634, -inf
    %1646 = vmax.xlane.f32.xlu0 %v1645
    %v1647 = vpop.xlane.xlu0 %1646
    %v1648 = vsub.f32 %v1627, %v1638
    %v1649 = vsub.f32 %v1629, %v1641
    %v1650 = vsub.f32 %v1632, %v1644
    %v1651 = vsub.f32 %v1634, %v1647
    %v1652 = vmul.f32 %v1648, 1.442695
    %v1653 = vpow.pop %v1652
    %v1654 = vmul.f32 %v1649, 1.442695
    %v1655 = vpow.pop %v1654
    %v1656 = vmul.f32 %v1650, 1.442695
    %v1657 = vpow.pop %v1656
    %v1658 = vmul.f32 %v1651, 1.442695
    %v1659 = vpow.pop %v1658
    %v1660 = vsel %vm205, %v1653, 0.0
    %1661 = vadd.xlane.f32.xlu0 %v1660
    %v1662 = vpop.xlane.xlu0 %1661
    %v1663 = vsel %vm205, %v1655, 0.0
    %1664 = vadd.xlane.f32.xlu0 %v1663
    %v1665 = vpop.xlane.xlu0 %1664
    %v1666 = vsel %vm205, %v1657, 0.0
    %1667 = vadd.xlane.f32.xlu0 %v1666
    %v1668 = vpop.xlane.xlu0 %1667
    %v1669 = vsel %vm205, %v1659, 0.0
    %1670 = vadd.xlane.f32.xlu0 %v1669
    %v1671 = vpop.xlane.xlu0 %1670
    %v1672 = vrcp.pop %v1662
    %v1673 = vrcp.pop %v1665
    %v1674 = vrcp.pop %v1668
    %v1675 = vrcp.pop %v1671
    %v1676 = vmul.f32 %v1653, %v1672
    %v1677 = vmul.f32 %v1655, %v1673
    %v1678 = vmul.f32 %v1657, %v1674
    %v1679 = vmul.f32 %v1659, %v1675
    %1680 = vmatpush.bf16.msra.mxu0 0
    %1681 = vmatpush.bf16.msra.mxu0 0
    %1682 = vmatpush.bf16.msra.mxu0 0
    %1683 = vmatpush.bf16.msra.mxu0 0
    %1684 = vmatpush.bf16.msra.mxu0 0
    %1685 = vmatpush.bf16.msra.mxu0 0
    %1686 = vmatpush.bf16.msra.mxu0 %v1500
    %1687 = vmatpush.bf16.msra.mxu0 %v1499
    %1688 = vmatmul.bf16.gmra.mxu0 %v1615
    %v1689 = vpop.f32.mrf.mxu0
    %v1690 = vadd.f32 0.0, %v1689
    %v1691 = vpop.f32.mrf.mxu0
    %1692 = vdwg.mxu0
    %v1693 = vpack.c.bf16 %v1676, %v1676
    %v1694 = vpack.c.bf16 %v1690, %v1690
    %v1695 = vpack.c.bf16 %v1677, %v1677
    %1697 = vrot.lane.b32.xlu0 %v1694, 96
    %v1698 = vpop.permute.xlu0 %1697
    %v1700 = vsel %vm205, %v1695, 0
    %v1703 = vsel %vm284, %v1698, 0
    %1705 = vmatpush.bf16.msra.mxu0 0
    %1706 = vmatpush.bf16.msra.mxu0 0
    %1707 = vmatpush.bf16.msra.mxu0 0
    %1708 = vmatpush.bf16.msra.mxu0 0
    %1709 = vmatpush.bf16.msra.mxu0 0
    %1710 = vmatpush.bf16.msra.mxu0 0
    %1711 = vmatpush.bf16.msra.mxu0 0
    %1712 = vmatpush.bf16.msra.mxu0 %v1703
    %1713 = vmatmul.bf16.gmra.mxu0 %v1700
    %v1714 = vpop.f32.mrf.mxu0
    %v1715 = vadd.f32 0.0, %v1714
    %v1716 = vpop.f32.mrf.mxu0
    %1717 = vdwg.mxu0
    %v1719 = vsel %vm205, %v1693, 0
    %v1722 = vsel %vm284, %v1694, 0
    %1724 = vmatpush.bf16.msra.mxu0 0
    %1725 = vmatpush.bf16.msra.mxu0 0
    %1726 = vmatpush.bf16.msra.mxu0 0
    %1727 = vmatpush.bf16.msra.mxu0 0
    %1728 = vmatpush.bf16.msra.mxu0 0
    %1729 = vmatpush.bf16.msra.mxu0 0
    %1730 = vmatpush.bf16.msra.mxu0 0
    %1731 = vmatpush.bf16.msra.mxu0 %v1722
    %1732 = vmatmul.bf16.gmra.mxu0 %v1719
    %v1733 = vpop.f32.mrf.mxu0
    %v1734 = vadd.f32 %v1715, %v1733
    %v1735 = vpop.f32.mrf.mxu0
    %1736 = vdwg.mxu0
    %v1737 = vpack.c.bf16 %v1678, %v1678
    %1738 = vrot.lane.b32.xlu0 %v1694, 64
    %v1739 = vpop.permute.xlu0 %1738
    %v1741 = vsel %vm205, %v1737, 0
    %v1744 = vsel %vm284, %v1739, 0
    %1746 = vmatpush.bf16.msra.mxu0 0
    %1747 = vmatpush.bf16.msra.mxu0 0
    %1748 = vmatpush.bf16.msra.mxu0 0
    %1749 = vmatpush.bf16.msra.mxu0 0
    %1750 = vmatpush.bf16.msra.mxu0 0
    %1751 = vmatpush.bf16.msra.mxu0 0
    %1752 = vmatpush.bf16.msra.mxu0 0
    %1753 = vmatpush.bf16.msra.mxu0 %v1744
    %1754 = vmatmul.bf16.gmra.mxu0 %v1741
    %v1755 = vpop.f32.mrf.mxu0
    %v1756 = vadd.f32 0.0, %v1755
    %v1757 = vpop.f32.mrf.mxu0
    %1758 = vdwg.mxu0
    %v1759 = vadd.f32 %v1734, %v1756
    %v1760 = vpack.c.bf16 %v1679, %v1679
    %1761 = vrot.lane.b32.xlu0 %v1694, 32
    %v1762 = vpop.permute.xlu0 %1761
    %v1764 = vsel %vm205, %v1760, 0
    %v1767 = vsel %vm284, %v1762, 0
    %1769 = vmatpush.bf16.msra.mxu0 0
    %1770 = vmatpush.bf16.msra.mxu0 0
    %1771 = vmatpush.bf16.msra.mxu0 0
    %1772 = vmatpush.bf16.msra.mxu0 0
    %1773 = vmatpush.bf16.msra.mxu0 0
    %1774 = vmatpush.bf16.msra.mxu0 0
    %1775 = vmatpush.bf16.msra.mxu0 0
    %1776 = vmatpush.bf16.msra.mxu0 %v1767
    %1777 = vmatmul.bf16.gmra.mxu0 %v1764
    %v1778 = vpop.f32.mrf.mxu0
    %v1779 = vadd.f32 0.0, %v1778
    %v1780 = vpop.f32.mrf.mxu0
    %1781 = vdwg.mxu0
    %v1782 = vadd.f32 %v1759, %v1779
    %1784 = vrot.lane.b32.xlu0 %v1782, 96
    %v1785 = vpop.permute.xlu0 %1784
    %1787 = vst.msk [vmem:[#allocation2 + $0x8] sm:$0xff] %vm1610, %v1785
    %v1788 = vld [vmem:[#allocation2] sm:$0xff]
    %v1789 = vld [vmem:[#allocation2 + $0x8] sm:$0xff]
    %v1790 = vpack.c.bf16 %v1789, %v1788
    %v1791 = vld [vmem:[#allocation8] sm:$0xff]
    %v1792 = vld [vmem:[#allocation8 + $0x8] sm:$0xff]
    %v1793 = vld [vmem:[#allocation8 + $0x10] sm:$0xff]
    %v1794 = vld [vmem:[#allocation8 + $0x18] sm:$0xff]
    %v1795 = vld [vmem:[#allocation8 + $0x20] sm:$0xff]
    %v1796 = vld [vmem:[#allocation8 + $0x28] sm:$0xff]
    %v1797 = vld [vmem:[#allocation8 + $0x30] sm:$0xff]
    %v1798 = vld [vmem:[#allocation8 + $0x38] sm:$0xff]
    %v1799 = vld [vmem:[#allocation8 + $0x40] sm:$0xff]
    %v1800 = vld [vmem:[#allocation8 + $0x48] sm:$0xff]
    %v1801 = vld [vmem:[#allocation8 + $0x50] sm:$0xff]
    %v1802 = vld [vmem:[#allocation8 + $0x58] sm:$0xff]
    %v1803 = vld [vmem:[#allocation8 + $0x60] sm:$0xff]
    %v1804 = vld [vmem:[#allocation8 + $0x68] sm:$0xff]
    %v1805 = vld [vmem:[#allocation8 + $0x70] sm:$0xff]
    %v1806 = vld [vmem:[#allocation8 + $0x78] sm:$0xff]
    %v1807 = vld [vmem:[#allocation8 + $0x80] sm:$0xff]
    %v1808 = vld [vmem:[#allocation8 + $0x88] sm:$0xff]
    %v1809 = vld [vmem:[#allocation8 + $0x90] sm:$0xff]
    %v1810 = vld [vmem:[#allocation8 + $0x98] sm:$0xff]
    %v1811 = vld [vmem:[#allocation8 + $0xa0] sm:$0xff]
    %v1812 = vld [vmem:[#allocation8 + $0xa8] sm:$0xff]
    %v1813 = vld [vmem:[#allocation8 + $0xb0] sm:$0xff]
    %v1814 = vld [vmem:[#allocation8 + $0xb8] sm:$0xff]
    %v1815 = vld [vmem:[#allocation8 + $0xc0] sm:$0xff]
    %v1816 = vld [vmem:[#allocation8 + $0xc8] sm:$0xff]
    %v1817 = vld [vmem:[#allocation8 + $0xd0] sm:$0xff]
    %v1818 = vld [vmem:[#allocation8 + $0xd8] sm:$0xff]
    %v1819 = vld [vmem:[#allocation8 + $0xe0] sm:$0xff]
    %v1820 = vld [vmem:[#allocation8 + $0xe8] sm:$0xff]
    %v1821 = vld [vmem:[#allocation8 + $0xf0] sm:$0xff]
    %v1822 = vld [vmem:[#allocation8 + $0xf8] sm:$0xff]
    %v1823 = vld [vmem:[%s7] sm:$0xf]
    %v1825 = vperm.slane %v1823, 0
    %v1826 = vperm.slane %v1823, 1
    %v1827 = vperm.slane %v1823, 2
    %v1828 = vperm.slane %v1823, 3
    %v1865 = vunpack.c.l.b16 %v1791
    %v1866 = vunpack.c.h.b16 %v1791
    %v1867 = vunpack.c.l.b16 %v1792
    %v1868 = vunpack.c.h.b16 %v1792
    %v1869 = vunpack.c.l.b16 %v1793
    %v1870 = vunpack.c.h.b16 %v1793
    %v1871 = vunpack.c.l.b16 %v1794
    %v1872 = vunpack.c.h.b16 %v1794
    %v1873 = vunpack.c.l.b16 %v1795
    %v1874 = vunpack.c.h.b16 %v1795
    %v1875 = vunpack.c.l.b16 %v1796
    %v1876 = vunpack.c.h.b16 %v1796
    %v1877 = vunpack.c.l.b16 %v1797
    %v1878 = vunpack.c.h.b16 %v1797
    %v1879 = vunpack.c.l.b16 %v1798
    %v1880 = vunpack.c.h.b16 %v1798
    %v1881 = vunpack.c.l.b16 %v1799
    %v1882 = vunpack.c.h.b16 %v1799
    %v1883 = vunpack.c.l.b16 %v1800
    %v1884 = vunpack.c.h.b16 %v1800
    %v1885 = vunpack.c.l.b16 %v1801
    %v1886 = vunpack.c.h.b16 %v1801
    %v1887 = vunpack.c.l.b16 %v1802
    %v1888 = vunpack.c.h.b16 %v1802
    %v1889 = vunpack.c.l.b16 %v1803
    %v1890 = vunpack.c.h.b16 %v1803
    %v1891 = vunpack.c.l.b16 %v1804
    %v1892 = vunpack.c.h.b16 %v1804
    %v1893 = vunpack.c.l.b16 %v1805
    %v1894 = vunpack.c.h.b16 %v1805
    %v1895 = vunpack.c.l.b16 %v1806
    %v1896 = vunpack.c.h.b16 %v1806
    %v1897 = vunpack.c.l.b16 %v1807
    %v1898 = vunpack.c.h.b16 %v1807
    %v1899 = vunpack.c.l.b16 %v1808
    %v1900 = vunpack.c.h.b16 %v1808
    %v1901 = vunpack.c.l.b16 %v1809
    %v1902 = vunpack.c.h.b16 %v1809
    %v1903 = vunpack.c.l.b16 %v1810
    %v1904 = vunpack.c.h.b16 %v1810
    %v1905 = vunpack.c.l.b16 %v1811
    %v1906 = vunpack.c.h.b16 %v1811
    %v1907 = vunpack.c.l.b16 %v1812
    %v1908 = vunpack.c.h.b16 %v1812
    %v1909 = vunpack.c.l.b16 %v1813
    %v1910 = vunpack.c.h.b16 %v1813
    %v1911 = vunpack.c.l.b16 %v1814
    %v1912 = vunpack.c.h.b16 %v1814
    %v1913 = vunpack.c.l.b16 %v1815
    %v1914 = vunpack.c.h.b16 %v1815
    %v1915 = vunpack.c.l.b16 %v1816
    %v1916 = vunpack.c.h.b16 %v1816
    %v1917 = vunpack.c.l.b16 %v1817
    %v1918 = vunpack.c.h.b16 %v1817
    %v1919 = vunpack.c.l.b16 %v1818
    %v1920 = vunpack.c.h.b16 %v1818
    %v1921 = vunpack.c.l.b16 %v1819
    %v1922 = vunpack.c.h.b16 %v1819
    %v1923 = vunpack.c.l.b16 %v1820
    %v1924 = vunpack.c.h.b16 %v1820
    %v1925 = vunpack.c.l.b16 %v1821
    %v1926 = vunpack.c.h.b16 %v1821
    %v1927 = vunpack.c.l.b16 %v1822
    %v1928 = vunpack.c.h.b16 %v1822
    %v1929 = vpack.c.b16 %v1869, %v1865
    %v1930 = vpack.c.b16 %v1870, %v1866
    %v1931 = vpack.c.b16 %v1871, %v1867
    %v1932 = vpack.c.b16 %v1872, %v1868
    %v1933 = vpack.c.b16 %v1877, %v1873
    %v1934 = vpack.c.b16 %v1878, %v1874
    %v1935 = vpack.c.b16 %v1879, %v1875
    %v1936 = vpack.c.b16 %v1880, %v1876
    %v1937 = vpack.c.b16 %v1885, %v1881
    %v1938 = vpack.c.b16 %v1886, %v1882
    %v1939 = vpack.c.b16 %v1887, %v1883
    %v1940 = vpack.c.b16 %v1888, %v1884
    %v1941 = vpack.c.b16 %v1893, %v1889
    %v1942 = vpack.c.b16 %v1894, %v1890
    %v1943 = vpack.c.b16 %v1895, %v1891
    %v1944 = vpack.c.b16 %v1896, %v1892
    %v1945 = vpack.c.b16 %v1901, %v1897
    %v1946 = vpack.c.b16 %v1902, %v1898
    %v1947 = vpack.c.b16 %v1903, %v1899
    %v1948 = vpack.c.b16 %v1904, %v1900
    %v1949 = vpack.c.b16 %v1909, %v1905
    %v1950 = vpack.c.b16 %v1910, %v1906
    %v1951 = vpack.c.b16 %v1911, %v1907
    %v1952 = vpack.c.b16 %v1912, %v1908
    %v1953 = vpack.c.b16 %v1917, %v1913
    %v1954 = vpack.c.b16 %v1918, %v1914
    %v1955 = vpack.c.b16 %v1919, %v1915
    %v1956 = vpack.c.b16 %v1920, %v1916
    %v1957 = vpack.c.b16 %v1925, %v1921
    %v1958 = vpack.c.b16 %v1926, %v1922
    %v1959 = vpack.c.b16 %v1927, %v1923
    %v1960 = vpack.c.b16 %v1928, %v1924
    %1993 = vmatpush.bf16.msra.mxu0 %v1957
    %1994 = vmatpush.bf16.msra.mxu0 %v1953
    %1995 = vmatpush.bf16.msra.mxu0 %v1949
    %1996 = vmatpush.bf16.msra.mxu0 %v1945
    %1997 = vmatpush.bf16.msra.mxu0 %v1941
    %1998 = vmatpush.bf16.msra.mxu0 %v1937
    %1999 = vmatpush.bf16.msra.mxu0 %v1933
    %2000 = vmatpush.bf16.msra.mxu0 %v1929
    %2001 = vmatmul.bf16.gmra.mxu0 %v1790
    %v2002 = vpop.f32.mrf.mxu0
    %v2003 = vadd.f32 %v1825, %v2002
    %v2004 = vpop.f32.mrf.mxu0
    %v2005 = vadd.f32 %v1825, %v2004
    %2006 = vdwg.mxu0
    %2007 = vmatpush.bf16.msra.mxu0 %v1958
    %2008 = vmatpush.bf16.msra.mxu0 %v1954
    %2009 = vmatpush.bf16.msra.mxu0 %v1950
    %2010 = vmatpush.bf16.msra.mxu0 %v1946
    %2011 = vmatpush.bf16.msra.mxu0 %v1942
    %2012 = vmatpush.bf16.msra.mxu0 %v1938
    %2013 = vmatpush.bf16.msra.mxu0 %v1934
    %2014 = vmatpush.bf16.msra.mxu0 %v1930
    %2015 = vmatmul.bf16.gmra.mxu0 %v1790
    %v2016 = vpop.f32.mrf.mxu0
    %v2017 = vadd.f32 %v1826, %v2016
    %v2018 = vpop.f32.mrf.mxu0
    %v2019 = vadd.f32 %v1826, %v2018
    %2020 = vdwg.mxu0
    %2021 = vmatpush.bf16.msra.mxu0 %v1959
    %2022 = vmatpush.bf16.msra.mxu0 %v1955
    %2023 = vmatpush.bf16.msra.mxu0 %v1951
    %2024 = vmatpush.bf16.msra.mxu0 %v1947
    %2025 = vmatpush.bf16.msra.mxu0 %v1943
    %2026 = vmatpush.bf16.msra.mxu0 %v1939
    %2027 = vmatpush.bf16.msra.mxu0 %v1935
    %2028 = vmatpush.bf16.msra.mxu0 %v1931
    %2029 = vmatmul.bf16.gmra.mxu0 %v1790
    %v2030 = vpop.f32.mrf.mxu0
    %v2031 = vadd.f32 %v1827, %v2030
    %v2032 = vpop.f32.mrf.mxu0
    %v2033 = vadd.f32 %v1827, %v2032
    %2034 = vdwg.mxu0
    %2035 = vmatpush.bf16.msra.mxu0 %v1960
    %2036 = vmatpush.bf16.msra.mxu0 %v1956
    %2037 = vmatpush.bf16.msra.mxu0 %v1952
    %2038 = vmatpush.bf16.msra.mxu0 %v1948
    %2039 = vmatpush.bf16.msra.mxu0 %v1944
    %2040 = vmatpush.bf16.msra.mxu0 %v1940
    %2041 = vmatpush.bf16.msra.mxu0 %v1936
    %2042 = vmatpush.bf16.msra.mxu0 %v1932
    %2043 = vmatmul.bf16.gmra.mxu0 %v1790
    %v2044 = vpop.f32.mrf.mxu0
    %v2045 = vadd.f32 %v1828, %v2044
    %v2046 = vpop.f32.mrf.mxu0
    %v2047 = vadd.f32 %v1828, %v2046
    %2048 = vdwg.mxu0
    %v2049 = vtanh.pop %v2003
    %v2050 = vtanh.pop %v2017
    %v2051 = vtanh.pop %v2031
    %v2052 = vtanh.pop %v2045
    %v2053 = vtanh.pop %v2005
    %v2054 = vtanh.pop %v2019
    %v2055 = vtanh.pop %v2033
    %v2056 = vtanh.pop %v2047
    %v2057 = vpack.c.bf16 %v2053, %v2049
    %v2058 = vpack.c.bf16 %v2054, %v2050
    %v2059 = vpack.c.bf16 %v2055, %v2051
    %v2060 = vpack.c.bf16 %v2056, %v2052
    %v2061 = vld [vmem:[#allocation9] sm:$0xf]
    %v2062 = vld [vmem:[#allocation9 + $0x4] sm:$0xf]
    %v2063 = vld [vmem:[#allocation9 + $0x8] sm:$0xf]
    %v2064 = vld [vmem:[#allocation9 + $0xc] sm:$0xf]
    %v2065 = vld [vmem:[#allocation9 + $0x10] sm:$0xf]
    %v2066 = vld [vmem:[#allocation9 + $0x14] sm:$0xf]
    %v2067 = vld [vmem:[#allocation9 + $0x18] sm:$0xf]
    %v2068 = vld [vmem:[#allocation9 + $0x1c] sm:$0xf]
    %v2069 = vld [vmem:[#allocation9 + $0x20] sm:$0xf]
    %v2070 = vld [vmem:[#allocation9 + $0x24] sm:$0xf]
    %v2071 = vld [vmem:[#allocation9 + $0x28] sm:$0xf]
    %v2072 = vld [vmem:[#allocation9 + $0x2c] sm:$0xf]
    %v2073 = vld [vmem:[#allocation9 + $0x30] sm:$0xf]
    %v2074 = vld [vmem:[#allocation9 + $0x34] sm:$0xf]
    %v2075 = vld [vmem:[#allocation9 + $0x38] sm:$0xf]
    %v2076 = vld [vmem:[#allocation9 + $0x3c] sm:$0xf]
    %v2077 = vld [vmem:[#allocation9 + $0x40] sm:$0xf]
    %v2078 = vld [vmem:[#allocation9 + $0x44] sm:$0xf]
    %v2079 = vld [vmem:[#allocation9 + $0x48] sm:$0xf]
    %v2080 = vld [vmem:[#allocation9 + $0x4c] sm:$0xf]
    %v2081 = vld [vmem:[#allocation9 + $0x50] sm:$0xf]
    %v2082 = vld [vmem:[#allocation9 + $0x54] sm:$0xf]
    %v2083 = vld [vmem:[#allocation9 + $0x58] sm:$0xf]
    %v2084 = vld [vmem:[#allocation9 + $0x5c] sm:$0xf]
    %v2085 = vld [vmem:[#allocation9 + $0x60] sm:$0xf]
    %v2086 = vld [vmem:[#allocation9 + $0x64] sm:$0xf]
    %v2087 = vld [vmem:[#allocation9 + $0x68] sm:$0xf]
    %v2088 = vld [vmem:[#allocation9 + $0x6c] sm:$0xf]
    %v2089 = vld [vmem:[#allocation9 + $0x70] sm:$0xf]
    %v2090 = vld [vmem:[#allocation9 + $0x74] sm:$0xf]
    %v2091 = vld [vmem:[#allocation9 + $0x78] sm:$0xf]
    %v2092 = vld [vmem:[#allocation9 + $0x7c] sm:$0xf]
    %v2093 = vld [vmem:[#allocation9 + $0x80] sm:$0xf]
    %v2094 = vld [vmem:[#allocation9 + $0x84] sm:$0xf]
    %v2095 = vld [vmem:[#allocation9 + $0x88] sm:$0xf]
    %v2096 = vld [vmem:[#allocation9 + $0x8c] sm:$0xf]
    %v2097 = vld [vmem:[#allocation9 + $0x90] sm:$0xf]
    %v2098 = vld [vmem:[#allocation9 + $0x94] sm:$0xf]
    %v2099 = vld [vmem:[#allocation9 + $0x98] sm:$0xf]
    %v2100 = vld [vmem:[#allocation9 + $0x9c] sm:$0xf]
    %v2101 = vld [vmem:[#allocation9 + $0xa0] sm:$0xf]
    %v2102 = vld [vmem:[#allocation9 + $0xa4] sm:$0xf]
    %v2103 = vld [vmem:[#allocation9 + $0xa8] sm:$0xf]
    %v2104 = vld [vmem:[#allocation9 + $0xac] sm:$0xf]
    %v2105 = vld [vmem:[#allocation9 + $0xb0] sm:$0xf]
    %v2106 = vld [vmem:[#allocation9 + $0xb4] sm:$0xf]
    %v2107 = vld [vmem:[#allocation9 + $0xb8] sm:$0xf]
    %v2108 = vld [vmem:[#allocation9 + $0xbc] sm:$0xf]
    %v2109 = vld [vmem:[#allocation9 + $0xc0] sm:$0xf]
    %v2110 = vld [vmem:[#allocation9 + $0xc4] sm:$0xf]
    %v2111 = vld [vmem:[#allocation9 + $0xc8] sm:$0xf]
    %v2112 = vld [vmem:[#allocation9 + $0xcc] sm:$0xf]
    %v2113 = vld [vmem:[#allocation9 + $0xd0] sm:$0xf]
    %v2114 = vld [vmem:[#allocation9 + $0xd4] sm:$0xf]
    %v2115 = vld [vmem:[#allocation9 + $0xd8] sm:$0xf]
    %v2116 = vld [vmem:[#allocation9 + $0xdc] sm:$0xf]
    %v2117 = vld [vmem:[#allocation9 + $0xe0] sm:$0xf]
    %v2118 = vld [vmem:[#allocation9 + $0xe4] sm:$0xf]
    %v2119 = vld [vmem:[#allocation9 + $0xe8] sm:$0xf]
    %v2120 = vld [vmem:[#allocation9 + $0xec] sm:$0xf]
    %v2121 = vld [vmem:[#allocation9 + $0xf0] sm:$0xf]
    %v2122 = vld [vmem:[#allocation9 + $0xf4] sm:$0xf]
    %v2123 = vld [vmem:[#allocation9 + $0xf8] sm:$0xf]
    %v2124 = vld [vmem:[#allocation9 + $0xfc] sm:$0xf]
    %v2125 = vld [vmem:[%s9] sm:$0x1]
    %v2127 = vperm.slane %v2125, 0
    %v2193 = vunpack.c.l.b16 %v2061
    %v2194 = vunpack.c.l.b16 %v2062
    %v2195 = vunpack.c.l.b16 %v2063
    %v2196 = vunpack.c.l.b16 %v2064
    %v2197 = vunpack.c.l.b16 %v2065
    %v2198 = vunpack.c.l.b16 %v2066
    %v2199 = vunpack.c.l.b16 %v2067
    %v2200 = vunpack.c.l.b16 %v2068
    %v2201 = vunpack.c.l.b16 %v2069
    %v2202 = vunpack.c.l.b16 %v2070
    %v2203 = vunpack.c.l.b16 %v2071
    %v2204 = vunpack.c.l.b16 %v2072
    %v2205 = vunpack.c.l.b16 %v2073
    %v2206 = vunpack.c.l.b16 %v2074
    %v2207 = vunpack.c.l.b16 %v2075
    %v2208 = vunpack.c.l.b16 %v2076
    %v2209 = vunpack.c.l.b16 %v2077
    %v2210 = vunpack.c.l.b16 %v2078
    %v2211 = vunpack.c.l.b16 %v2079
    %v2212 = vunpack.c.l.b16 %v2080
    %v2213 = vunpack.c.l.b16 %v2081
    %v2214 = vunpack.c.l.b16 %v2082
    %v2215 = vunpack.c.l.b16 %v2083
    %v2216 = vunpack.c.l.b16 %v2084
    %v2217 = vunpack.c.l.b16 %v2085
    %v2218 = vunpack.c.l.b16 %v2086
    %v2219 = vunpack.c.l.b16 %v2087
    %v2220 = vunpack.c.l.b16 %v2088
    %v2221 = vunpack.c.l.b16 %v2089
    %v2222 = vunpack.c.l.b16 %v2090
    %v2223 = vunpack.c.l.b16 %v2091
    %v2224 = vunpack.c.l.b16 %v2092
    %v2225 = vunpack.c.l.b16 %v2093
    %v2226 = vunpack.c.l.b16 %v2094
    %v2227 = vunpack.c.l.b16 %v2095
    %v2228 = vunpack.c.l.b16 %v2096
    %v2229 = vunpack.c.l.b16 %v2097
    %v2230 = vunpack.c.l.b16 %v2098
    %v2231 = vunpack.c.l.b16 %v2099
    %v2232 = vunpack.c.l.b16 %v2100
    %v2233 = vunpack.c.l.b16 %v2101
    %v2234 = vunpack.c.l.b16 %v2102
    %v2235 = vunpack.c.l.b16 %v2103
    %v2236 = vunpack.c.l.b16 %v2104
    %v2237 = vunpack.c.l.b16 %v2105
    %v2238 = vunpack.c.l.b16 %v2106
    %v2239 = vunpack.c.l.b16 %v2107
    %v2240 = vunpack.c.l.b16 %v2108
    %v2241 = vunpack.c.l.b16 %v2109
    %v2242 = vunpack.c.l.b16 %v2110
    %v2243 = vunpack.c.l.b16 %v2111
    %v2244 = vunpack.c.l.b16 %v2112
    %v2245 = vunpack.c.l.b16 %v2113
    %v2246 = vunpack.c.l.b16 %v2114
    %v2247 = vunpack.c.l.b16 %v2115
    %v2248 = vunpack.c.l.b16 %v2116
    %v2249 = vunpack.c.l.b16 %v2117
    %v2250 = vunpack.c.l.b16 %v2118
    %v2251 = vunpack.c.l.b16 %v2119
    %v2252 = vunpack.c.l.b16 %v2120
    %v2253 = vunpack.c.l.b16 %v2121
    %v2254 = vunpack.c.l.b16 %v2122
    %v2255 = vunpack.c.l.b16 %v2123
    %v2256 = vunpack.c.l.b16 %v2124
    %v2257 = vpack.c.b16 %v2194, %v2193
    %v2258 = vpack.c.b16 %v2196, %v2195
    %v2259 = vpack.c.b16 %v2198, %v2197
    %v2260 = vpack.c.b16 %v2200, %v2199
    %v2261 = vpack.c.b16 %v2202, %v2201
    %v2262 = vpack.c.b16 %v2204, %v2203
    %v2263 = vpack.c.b16 %v2206, %v2205
    %v2264 = vpack.c.b16 %v2208, %v2207
    %v2265 = vpack.c.b16 %v2210, %v2209
    %v2266 = vpack.c.b16 %v2212, %v2211
    %v2267 = vpack.c.b16 %v2214, %v2213
    %v2268 = vpack.c.b16 %v2216, %v2215
    %v2269 = vpack.c.b16 %v2218, %v2217
    %v2270 = vpack.c.b16 %v2220, %v2219
    %v2271 = vpack.c.b16 %v2222, %v2221
    %v2272 = vpack.c.b16 %v2224, %v2223
    %v2273 = vpack.c.b16 %v2226, %v2225
    %v2274 = vpack.c.b16 %v2228, %v2227
    %v2275 = vpack.c.b16 %v2230, %v2229
    %v2276 = vpack.c.b16 %v2232, %v2231
    %v2277 = vpack.c.b16 %v2234, %v2233
    %v2278 = vpack.c.b16 %v2236, %v2235
    %v2279 = vpack.c.b16 %v2238, %v2237
    %v2280 = vpack.c.b16 %v2240, %v2239
    %v2281 = vpack.c.b16 %v2242, %v2241
    %v2282 = vpack.c.b16 %v2244, %v2243
    %v2283 = vpack.c.b16 %v2246, %v2245
    %v2284 = vpack.c.b16 %v2248, %v2247
    %v2285 = vpack.c.b16 %v2250, %v2249
    %v2286 = vpack.c.b16 %v2252, %v2251
    %v2287 = vpack.c.b16 %v2254, %v2253
    %v2288 = vpack.c.b16 %v2256, %v2255
    %2321 = vmatpush.bf16.msra.mxu0 %v2264
    %2322 = vmatpush.bf16.msra.mxu0 %v2263
    %2323 = vmatpush.bf16.msra.mxu0 %v2262
    %2324 = vmatpush.bf16.msra.mxu0 %v2261
    %2325 = vmatpush.bf16.msra.mxu0 %v2260
    %2326 = vmatpush.bf16.msra.mxu0 %v2259
    %2327 = vmatpush.bf16.msra.mxu0 %v2258
    %2328 = vmatpush.bf16.msra.mxu0 %v2257
    %2329 = vmatmul.bf16.gmra.mxu0 %v2057
    %v2330 = vpop.f32.mrf.mxu0
    %v2331 = vadd.f32 %v2127, %v2330
    %v2332 = vpop.f32.mrf.mxu0
    %v2333 = vadd.f32 %v2127, %v2332
    %2334 = vdwg.mxu0
    %2335 = vmatpush.bf16.msra.mxu0 %v2272
    %2336 = vmatpush.bf16.msra.mxu0 %v2271
    %2337 = vmatpush.bf16.msra.mxu0 %v2270
    %2338 = vmatpush.bf16.msra.mxu0 %v2269
    %2339 = vmatpush.bf16.msra.mxu0 %v2268
    %2340 = vmatpush.bf16.msra.mxu0 %v2267
    %2341 = vmatpush.bf16.msra.mxu0 %v2266
    %2342 = vmatpush.bf16.msra.mxu0 %v2265
    %2343 = vmatmul.bf16.gmra.mxu0 %v2058
    %v2344 = vpop.f32.mrf.mxu0
    %v2345 = vadd.f32 %v2331, %v2344
    %v2346 = vpop.f32.mrf.mxu0
    %v2347 = vadd.f32 %v2333, %v2346
    %2348 = vdwg.mxu0
    %2349 = vmatpush.bf16.msra.mxu0 %v2280
    %2350 = vmatpush.bf16.msra.mxu0 %v2279
    %2351 = vmatpush.bf16.msra.mxu0 %v2278
    %2352 = vmatpush.bf16.msra.mxu0 %v2277
    %2353 = vmatpush.bf16.msra.mxu0 %v2276
    %2354 = vmatpush.bf16.msra.mxu0 %v2275
    %2355 = vmatpush.bf16.msra.mxu0 %v2274
    %2356 = vmatpush.bf16.msra.mxu0 %v2273
    %2357 = vmatmul.bf16.gmra.mxu0 %v2059
    %v2358 = vpop.f32.mrf.mxu0
    %v2359 = vadd.f32 %v2345, %v2358
    %v2360 = vpop.f32.mrf.mxu0
    %v2361 = vadd.f32 %v2347, %v2360
    %2362 = vdwg.mxu0
    %2363 = vmatpush.bf16.msra.mxu0 %v2288
    %2364 = vmatpush.bf16.msra.mxu0 %v2287
    %2365 = vmatpush.bf16.msra.mxu0 %v2286
    %2366 = vmatpush.bf16.msra.mxu0 %v2285
    %2367 = vmatpush.bf16.msra.mxu0 %v2284
    %2368 = vmatpush.bf16.msra.mxu0 %v2283
    %2369 = vmatpush.bf16.msra.mxu0 %v2282
    %2370 = vmatpush.bf16.msra.mxu0 %v2281
    %2371 = vmatmul.bf16.gmra.mxu0 %v2060
    %v2372 = vpop.f32.mrf.mxu0
    %v2373 = vadd.f32 %v2359, %v2372
    %v2374 = vpop.f32.mrf.mxu0
    %v2375 = vadd.f32 %v2361, %v2374
    %2376 = vdwg.mxu0
    %2377 = vst [vmem:[#allocation11] sm:$0xff] %v2373
    %2378 = vst [vmem:[#allocation11 + $0x8] sm:$0xff] %v2375
    // Predicated region
    $region58: #{tpu_custom_call.1} parent=1 // pred_check
      _
    $region59: #{tpu_custom_call.1} parent=1 // pred_check_branch
      %2380 = sbr.rel (0) target = $region61
    $region60: #{tpu_custom_call.1} parent=1 // pred_region
      %2382 = vsyncadd [#allocation5], 0
      %s2383 = sshll.u32 [#allocation11], 4
      %s2384 = int_to_ptr.vmem [resolvable:$true] %s2383
      %s2385 = sshll.u32 %s10, 4
      %s2386 = int_to_ptr.hbm [resolvable:$true] %s2385
      %2391 = dma.vmem_to_hbm [thread:$0]  %s2384, 256, %s2386, [#allocation5], 128, 128, 8
    $region61: #{tpu_custom_call.1} parent=1 // pred_fallthru
      _
    // Predicated region
    $region62: #{tpu_custom_call.1} parent=1 // pred_check
      _
    $region63: #{tpu_custom_call.1} parent=1 // pred_check_branch
      %2393 = sbr.rel (0) target = $region65
    $region64: #{tpu_custom_call.1} parent=1 // pred_region
      %2395 = dma.done [#allocation5], 256
    $region65: #{tpu_custom_call.1} parent=1 // pred_fallthru
      _
    %2396 = vsyncpa [#allocation4], 1
    %2397 = vsyncpa [#allocation7], 1
    %2398 = vsyncpa [#allocation10], 1
    %2399 = vsyncpa [#allocation5], 1

</llo_original>
